<compile_context>
chip_gen: v5e
topology: v5e:2x2
jax: 0.10.0
libtpu: 0.0.40
codegen_flags: <defaults>
</compile_context>

<pallas_src>
import numpy as np
import jax
import jax.numpy as jnp
from jax.experimental import pallas as pl
from jax.experimental.pallas import tpu as pltpu


def _round_up(a, m):
    return (a + m - 1) // m * m


def _nbytes(shape, dtype):
    return int(np.prod(shape)) * jnp.dtype(dtype).itemsize


# ----------------------------------------------------------------------------
# Pallas kernel: whole VAE forward for one batch tile
# ----------------------------------------------------------------------------
def vae_kernel(x_ref, eps_ref,
               w1e_ref, b1e_ref, wh_ref, bh_ref,
               w1d_ref, b1d_ref, w2d_ref, b2d_ref,
               xs_ref, mulv_ref):
    f32 = jnp.float32
    bf16 = jnp.bfloat16

    # --- encoder: Linear(d_in, hidden) + ReLU (bf16 MXU inputs, f32 accum) ----
    x = x_ref[...]                                          # (TB, d_in)
    if x.dtype != bf16:                                     # no-op if producer feeds bf16
        x = x.astype(bf16)
    h = jnp.dot(x, w1e_ref[...], preferred_element_type=f32)
    h = jnp.maximum(h + b1e_ref[...], 0.0)

    # --- fused mu / logvar heads: one matmul, lane-dense (TB, 2*ZPAD) slab ----
    head = jnp.dot(h.astype(bf16), wh_ref[...], preferred_element_type=f32)
    head = head + bh_ref[...]
    mulv_ref[...] = head.astype(mulv_ref.dtype)             # unmasked bf16 store

    zpad = eps_ref.shape[-1]                                 # static (=128)
    mu = head[:, :zpad]                                      # lane-aligned slice
    lv = head[:, zpad:]                                      # lane-aligned slice

    # --- reparametrize: z = eps * exp(logvar) + mu (matches torch reference) --
    # Padded lanes: eps = 0, mu = 0, logvar = 0 -> z = 0 there.
    z = eps_ref[...] * jnp.exp(lv) + mu                      # (TB, ZPAD) f32

    # --- decoder: Linear(z, hidden) + ReLU -> Linear(hidden, d_in) + sigmoid --
    hd = jnp.dot(z.astype(bf16), w1d_ref[...], preferred_element_type=f32)
    hd = jnp.maximum(hd + b1d_ref[...], 0.0)
    logits = jnp.dot(hd.astype(bf16), w2d_ref[...], preferred_element_type=f32)
    logits = logits + b2d_ref[...]
    # sigmoid(x) = 0.5 * tanh(0.5 * x) + 0.5  -> single EUP transcendental
    xs_ref[...] = (0.5 * jnp.tanh(0.5 * logits) + 0.5).astype(xs_ref.dtype)


# ----------------------------------------------------------------------------
# Wrapper: batch tiling, weight residency, lane padding, VMEM budgeting
# ----------------------------------------------------------------------------
def _choose_tile(batch, tile_b):
    """Pick a batch tile: big for bandwidth, but keep >= 2 grid steps (megacore)."""
    bp8 = _round_up(batch, 8)
    if bp8 <= 16:
        return bp8                                    # single tiny tile (block == array)
    if bp8 >= 2 * tile_b:
        return tile_b                                 # >= 2 full-size steps
    # shrink so the grid still has >= 2 steps; 16-row aligned for bf16 packing
    return max(16, _round_up((bp8 + 1) // 2, 16))


def vae_forward(x, eps, params, *, tile_b=512, out_dtype=jnp.bfloat16):
    """VAE forward pass in one batch-tiled Pallas call.

    x      : (B, C, H, W) or already-flattened (B, d_in); fed at its incoming
             dtype (pass bf16 from the producer to halve the largest HBM read).
    eps    : (B, Z) standard-normal noise (explicit input for determinism).
    params : dict from init_params.
    Returns (x_sample (B, d_in), z_mu (B, Z), z_logvar (B, Z)) in `out_dtype`.
    """
    if x.ndim > 2:
        x = x.reshape(x.shape[0], -1)                 # NCHW -> (B, d_in), row-major
    B, d_in = x.shape
    z_dim = eps.shape[-1]
    two_zpad = params["wh"].shape[-1]
    zpad = two_zpad // 2
    hidden = params["w1e"].shape[-1]                  # already 128-padded by init_params
    assert z_dim <= zpad and tile_b % 16 == 0

    tb = _choose_tile(B, tile_b)
    bp = _round_up(B, tb)

    # TODO(synk): eps is lane-padded z_dim -> zpad for MXU alignment (~5% extra read);
    # in-kernel pltpu.prng_seed/prng_random_bits + Box-Muller would remove the input
    # entirely but changes determinism semantics, so it is kept explicit here.
    eps_p = jnp.pad(eps.astype(jnp.float32), ((0, bp - B), (0, zpad - z_dim)))
    if bp != B:
        x = jnp.pad(x, ((0, bp - B), (0, 0)))

    weights = (params["w1e"], params["b1e"], params["wh"], params["bh"],
               params["w1d"], params["b1d"], params["w2d"], params["b2d"])
    w_bytes = sum(_nbytes(w.shape, w.dtype) for w in weights)

    flops = 2 * bp * (d_in * hidden + hidden * two_zpad + zpad * hidden + hidden * d_in)
    transcendentals = bp * (zpad + d_in)              # exp (reparam) + tanh (sigmoid)
    row_bytes = (_nbytes((1, d_in), x.dtype) + _nbytes((1, zpad), jnp.float32)
                 + _nbytes((1, d_in), out_dtype) + _nbytes((1, two_zpad), out_dtype))
    bytes_accessed = w_bytes + bp * row_bytes

    def run(single_buffer_weights):
        wspec_kw = {"pipeline_mode": pl.Buffered(1)} if single_buffer_weights else {}

        def row_spec(cols):                           # batch-tiled activations / outputs
            return pl.BlockSpec((tb, cols), lambda i: (i, 0))

        def full_spec(arr):                           # weights resident across grid steps
            return pl.BlockSpec(arr.shape, lambda i: (0, 0), **wspec_kw)

        # VMEM budget: double-buffered I/O tiles + resident weights + f32
        # intermediates + headroom, capped at v7x's 64 MiB per TensorCore.
        io_tiles = tb * row_bytes
        interm = (_nbytes((tb, d_in), jnp.float32) + _nbytes((tb, two_zpad), jnp.float32)
                  + 2 * _nbytes((tb, hidden), jnp.float32) + _nbytes((tb, zpad), jnp.float32))
        est = 2 * io_tiles + (1 if single_buffer_weights else 2) * w_bytes + interm
        vmem_limit = int(min(max(est + (16 << 20), 32 << 20), 64 << 20))

        out = pl.pallas_call(
            vae_kernel,
            grid=(bp // tb,),
            in_specs=[row_spec(d_in), row_spec(zpad)] + [full_spec(w) for w in weights],
            out_specs=(row_spec(d_in), row_spec(two_zpad)),
            out_shape=(jax.ShapeDtypeStruct((bp, d_in), out_dtype),       # x_sample
                       jax.ShapeDtypeStruct((bp, two_zpad), out_dtype)),  # [mu | logvar]
            compiler_params=pltpu.CompilerParams(
                dimension_semantics=("parallel",),    # megacore-shardable batch loop
                vmem_limit_bytes=vmem_limit),
            cost_estimate=pl.CostEstimate(
                flops=flops,
                transcendentals=transcendentals,
                bytes_accessed=bytes_accessed),
        )(x, eps_p, *weights)
        jax.block_until_ready(out)                    # surface failures inside the try
        return out

    try:
        xs, mulv = run(single_buffer_weights=True)
    except Exception:
        # TODO(synk): drop this fallback once pl.Buffered(1) single-buffering of
        # constant-index_map weight specs is confirmed on the target jax/Mosaic.
        xs, mulv = run(single_buffer_weights=False)

    x_sample = xs[:B]
    z_mu = mulv[:B, :z_dim]
    z_logvar = mulv[:B, zpad:zpad + z_dim]
    return x_sample, z_mu, z_logvar


# ----------------------------------------------------------------------------
# Deterministic parameter initialization (synthetic weights)
# ----------------------------------------------------------------------------
def init_params(key, d_in, hidden, z_dim, zpad=128):
    """MLP-VAE weights, zero-padded to MXU/lane-friendly shapes:
    hidden -> round_up(hidden, 128), z -> zpad lanes, mu/logvar heads fused."""
    ks = jax.random.split(key, 5)
    scale = 0.05
    bf16 = jnp.bfloat16
    hp = _round_up(hidden, 128)

    def w(k, shape):
        return scale * jax.random.normal(k, shape, dtype=jnp.float32)

    w1e = jnp.zeros((d_in, hp), jnp.float32).at[:, :hidden].set(w(ks[0], (d_in, hidden)))

    # fused + lane-padded mu/logvar heads: mu -> cols [0, Z), logvar -> [zpad, zpad+Z)
    wh = jnp.zeros((hp, 2 * zpad), jnp.float32)
    wh = wh.at[:hidden, :z_dim].set(w(ks[1], (hidden, z_dim)))
    wh = wh.at[:hidden, zpad:zpad + z_dim].set(w(ks[2], (hidden, z_dim)))

    # decoder first layer, lane-padded on the contraction dim (rows >= Z are zero)
    w1d = jnp.zeros((zpad, hp), jnp.float32).at[:z_dim, :hidden].set(w(ks[3], (z_dim, hidden)))

    w2d = jnp.zeros((hp, d_in), jnp.float32).at[:hidden, :].set(w(ks[4], (hidden, d_in)))

    return {
        "w1e": w1e.astype(bf16),
        "b1e": jnp.zeros((1, hp), jnp.float32),
        "wh":  wh.astype(bf16),
        "bh":  jnp.zeros((1, 2 * zpad), jnp.float32),
        "w1d": w1d.astype(bf16),
        "b1d": jnp.zeros((1, hp), jnp.float32),
        "w2d": w2d.astype(bf16),
        "b2d": jnp.zeros((1, d_in), jnp.float32),
    }


# ----------------------------------------------------------------------------
# Pure-JAX reference (same bf16-at-MXU / f32-elementwise math as the kernel)
# ----------------------------------------------------------------------------
def vae_ref(x_nchw, eps, p, z_dim, zpad=128):
    f32, bf16 = jnp.float32, jnp.bfloat16
    x = x_nchw.reshape(x_nchw.shape[0], -1)
    if x.dtype != bf16:
        x = x.astype(bf16)
    eps_p = jnp.pad(eps.astype(f32), ((0, 0), (0, zpad - z_dim)))

    h = jnp.maximum(jnp.dot(x, p["w1e"], preferred_element_type=f32) + p["b1e"], 0.0)
    head = jnp.dot(h.astype(bf16), p["wh"], preferred_element_type=f32) + p["bh"]
    mu_p, lv_p = head[:, :zpad], head[:, zpad:]
    z = eps_p * jnp.exp(lv_p) + mu_p
    hd = jnp.maximum(
        jnp.dot(z.astype(bf16), p["w1d"], preferred_element_type=f32) + p["b1d"], 0.0)
    xs = jax.nn.sigmoid(
        jnp.dot(hd.astype(bf16), p["w2d"], preferred_element_type=f32) + p["b2d"])
    return xs, mu_p[:, :z_dim], lv_p[:, :z_dim]


if __name__ == "__main__":
    key = jax.random.PRNGKey(0)
    k_x, k_eps, k_p = jax.random.split(key, 3)

    # Small shapes consistent with the forward pass (NCHW image input).
    B, C, H, W = 2, 4, 16, 16
    d_in = C * H * W        # 1024
    hidden = 32             # logical hidden width (zero-padded to 128 internally)
    z_dim = 8

    x = jax.random.normal(k_x, (B, C, H, W), dtype=jnp.float32)
    eps = jax.random.normal(k_eps, (B, z_dim), dtype=jnp.float32)
    params = init_params(k_p, d_in, hidden, z_dim)

    x_sample, z_mu, z_logvar = vae_forward(x, eps, params)
    jax.block_until_ready((x_sample, z_mu, z_logvar))

    # Verify against the pure-JAX reference (bf16 output stores -> ~1 bf16 ulp tol).
    xs_r, mu_r, lv_r = vae_ref(x, eps, params, z_dim)
    assert x_sample.shape == (B, d_in) and z_mu.shape == (B, z_dim) and z_logvar.shape == (B, z_dim)
    xs_k = np.asarray(x_sample.astype(jnp.float32))
    mu_k = np.asarray(z_mu.astype(jnp.float32))
    lv_k = np.asarray(z_logvar.astype(jnp.float32))
    assert np.allclose(xs_k, np.asarray(xs_r), atol=1e-2, rtol=1e-2)
    assert np.allclose(mu_k, np.asarray(mu_r), atol=1e-2, rtol=1e-2)
    assert np.allclose(lv_k, np.asarray(lv_r), atol=1e-2, rtol=1e-2)

    print("KERNEL_OK")
</pallas_src>

<mosaic_0001>
module attributes {stable_mosaic.version = 11 : i64} {
  func.func @vae_kernel(%arg0: i32, %arg1: memref<8x1024xf32, #tpu.memory_space<vmem>>, %arg2: memref<8x128xf32, #tpu.memory_space<vmem>>, %arg3: memref<1024x128xbf16, #tpu.memory_space<vmem>>, %arg4: memref<1x128xf32, #tpu.memory_space<vmem>>, %arg5: memref<128x256xbf16, #tpu.memory_space<vmem>>, %arg6: memref<1x256xf32, #tpu.memory_space<vmem>>, %arg7: memref<128x128xbf16, #tpu.memory_space<vmem>>, %arg8: memref<1x128xf32, #tpu.memory_space<vmem>>, %arg9: memref<128x1024xbf16, #tpu.memory_space<vmem>>, %arg10: memref<1x1024xf32, #tpu.memory_space<vmem>>, %arg11: memref<8x1024xbf16, #tpu.memory_space<vmem>>, %arg12: memref<8x256xbf16, #tpu.memory_space<vmem>>) attributes {dimension_semantics = [#tpu.dimension_semantics<parallel>], iteration_bounds = array<i64: 1>, scalar_prefetch = 0 : i64, scratch_operands = 0 : i64, tpu.core_type = #tpu.core_type<tc>, window_params = [{transform_indices = @transform_0, window_bounds = array<i64: 8, 1024>}, {transform_indices = @transform_1, window_bounds = array<i64: 8, 128>}, {pipeline_mode = #tpu.pipeline_mode<synchronous>, transform_indices = @transform_2, window_bounds = array<i64: 1024, 128>}, {pipeline_mode = #tpu.pipeline_mode<synchronous>, transform_indices = @transform_3, window_bounds = array<i64: 1, 128>}, {pipeline_mode = #tpu.pipeline_mode<synchronous>, transform_indices = @transform_4, window_bounds = array<i64: 128, 256>}, {pipeline_mode = #tpu.pipeline_mode<synchronous>, transform_indices = @transform_5, window_bounds = array<i64: 1, 256>}, {pipeline_mode = #tpu.pipeline_mode<synchronous>, transform_indices = @transform_6, window_bounds = array<i64: 128, 128>}, {pipeline_mode = #tpu.pipeline_mode<synchronous>, transform_indices = @transform_7, window_bounds = array<i64: 1, 128>}, {pipeline_mode = #tpu.pipeline_mode<synchronous>, transform_indices = @transform_8, window_bounds = array<i64: 128, 1024>}, {pipeline_mode = #tpu.pipeline_mode<synchronous>, transform_indices = @transform_9, window_bounds = array<i64: 1, 1024>}, {transform_indices = @transform_10, window_bounds = array<i64: 8, 1024>}, {transform_indices = @transform_11, window_bounds = array<i64: 8, 256>}]} {
    %c0 = arith.constant 0 : index
    %c0_0 = arith.constant 0 : index
    %0 = vector.load %arg1[%c0, %c0_0] : memref<8x1024xf32, #tpu.memory_space<vmem>>, vector<8x1024xf32>
    %1 = arith.truncf %0 : vector<8x1024xf32> to vector<8x1024xbf16>
    %c0_1 = arith.constant 0 : index
    %c0_2 = arith.constant 0 : index
    %2 = vector.load %arg3[%c0_1, %c0_2] : memref<1024x128xbf16, #tpu.memory_space<vmem>>, vector<1024x128xbf16>
    %cst = arith.constant dense<0.000000e+00> : vector<8x128xf32>
    %3 = tpu.matmul %1, %2, %cst {dimension_numbers = #tpu.dot_dimension_numbers<[1], [0], [0], [1], [0, 0, 1, 1], [], []>} : vector<8x1024xbf16>, vector<1024x128xbf16>, vector<8x128xf32> -> vector<8x128xf32>
    %c0_3 = arith.constant 0 : index
    %c0_4 = arith.constant 0 : index
    %4 = vector.load %arg4[%c0_3, %c0_4] : memref<1x128xf32, #tpu.memory_space<vmem>>, vector<1x128xf32>
    %5 = vector.broadcast %4 : vector<1x128xf32> to vector<8x128xf32>
    %6 = arith.addf %3, %5 : vector<8x128xf32>
    %cst_5 = arith.constant 0.000000e+00 : f32
    %7 = vector.broadcast %cst_5 : f32 to vector<8x128xf32>
    %8 = arith.maximumf %6, %7 : vector<8x128xf32>
    %9 = arith.truncf %8 : vector<8x128xf32> to vector<8x128xbf16>
    %c0_6 = arith.constant 0 : index
    %c0_7 = arith.constant 0 : index
    %10 = vector.load %arg5[%c0_6, %c0_7] : memref<128x256xbf16, #tpu.memory_space<vmem>>, vector<128x256xbf16>
    %cst_8 = arith.constant dense<0.000000e+00> : vector<8x256xf32>
    %11 = tpu.matmul %9, %10, %cst_8 {dimension_numbers = #tpu.dot_dimension_numbers<[1], [0], [0], [1], [0, 0, 1, 1], [], []>} : vector<8x128xbf16>, vector<128x256xbf16>, vector<8x256xf32> -> vector<8x256xf32>
    %c0_9 = arith.constant 0 : index
    %c0_10 = arith.constant 0 : index
    %12 = vector.load %arg6[%c0_9, %c0_10] : memref<1x256xf32, #tpu.memory_space<vmem>>, vector<1x256xf32>
    %13 = vector.broadcast %12 : vector<1x256xf32> to vector<8x256xf32>
    %14 = arith.addf %11, %13 : vector<8x256xf32>
    %15 = arith.truncf %14 : vector<8x256xf32> to vector<8x256xbf16>
    %c0_11 = arith.constant 0 : index
    %c0_12 = arith.constant 0 : index
    %16 = vector.load %arg12[%c0_11, %c0_12] : memref<8x256xbf16, #tpu.memory_space<vmem>>, vector<8x256xbf16>
    tpu.vector_store %arg12[%c0_11, %c0_12], %15 {strides = array<i32>} : memref<8x256xbf16, #tpu.memory_space<vmem>>, vector<8x256xbf16>,
    %17 = vector.extract_strided_slice %14 {offsets = [0, 0], sizes = [8, 128], strides = [1, 1]} : vector<8x256xf32> to vector<8x128xf32>
    %18 = vector.extract_strided_slice %14 {offsets = [0, 128], sizes = [8, 128], strides = [1, 1]} : vector<8x256xf32> to vector<8x128xf32>
    %c0_13 = arith.constant 0 : index
    %c0_14 = arith.constant 0 : index
    %19 = vector.load %arg2[%c0_13, %c0_14] : memref<8x128xf32, #tpu.memory_space<vmem>>, vector<8x128xf32>
    %20 = math.exp %18 : vector<8x128xf32>
    %21 = arith.mulf %19, %20 : vector<8x128xf32>
    %22 = arith.addf %21, %17 : vector<8x128xf32>
    %23 = arith.truncf %22 : vector<8x128xf32> to vector<8x128xbf16>
    %c0_15 = arith.constant 0 : index
    %c0_16 = arith.constant 0 : index
    %24 = vector.load %arg7[%c0_15, %c0_16] : memref<128x128xbf16, #tpu.memory_space<vmem>>, vector<128x128xbf16>
    %cst_17 = arith.constant dense<0.000000e+00> : vector<8x128xf32>
    %25 = tpu.matmul %23, %24, %cst_17 {dimension_numbers = #tpu.dot_dimension_numbers<[1], [0], [0], [1], [0, 0, 1, 1], [], []>} : vector<8x128xbf16>, vector<128x128xbf16>, vector<8x128xf32> -> vector<8x128xf32>
    %c0_18 = arith.constant 0 : index
    %c0_19 = arith.constant 0 : index
    %26 = vector.load %arg8[%c0_18, %c0_19] : memref<1x128xf32, #tpu.memory_space<vmem>>, vector<1x128xf32>
    %27 = vector.broadcast %26 : vector<1x128xf32> to vector<8x128xf32>
    %28 = arith.addf %25, %27 : vector<8x128xf32>
    %cst_20 = arith.constant 0.000000e+00 : f32
    %29 = vector.broadcast %cst_20 : f32 to vector<8x128xf32>
    %30 = arith.maximumf %28, %29 : vector<8x128xf32>
    %31 = arith.truncf %30 : vector<8x128xf32> to vector<8x128xbf16>
    %c0_21 = arith.constant 0 : index
    %c0_22 = arith.constant 0 : index
    %32 = vector.load %arg9[%c0_21, %c0_22] : memref<128x1024xbf16, #tpu.memory_space<vmem>>, vector<128x1024xbf16>
    %cst_23 = arith.constant dense<0.000000e+00> : vector<8x1024xf32>
    %33 = tpu.matmul %31, %32, %cst_23 {dimension_numbers = #tpu.dot_dimension_numbers<[1], [0], [0], [1], [0, 0, 1, 1], [], []>} : vector<8x128xbf16>, vector<128x1024xbf16>, vector<8x1024xf32> -> vector<8x1024xf32>
    %c0_24 = arith.constant 0 : index
    %c0_25 = arith.constant 0 : index
    %34 = vector.load %arg10[%c0_24, %c0_25] : memref<1x1024xf32, #tpu.memory_space<vmem>>, vector<1x1024xf32>
    %35 = vector.broadcast %34 : vector<1x1024xf32> to vector<8x1024xf32>
    %36 = arith.addf %33, %35 : vector<8x1024xf32>
    %cst_26 = arith.constant 5.000000e-01 : f32
    %37 = vector.broadcast %cst_26 : f32 to vector<8x1024xf32>
    %38 = arith.mulf %37, %36 : vector<8x1024xf32>
    %39 = math.tanh %38 : vector<8x1024xf32>
    %cst_27 = arith.constant 5.000000e-01 : f32
    %40 = vector.broadcast %cst_27 : f32 to vector<8x1024xf32>
    %41 = arith.mulf %40, %39 : vector<8x1024xf32>
    %cst_28 = arith.constant 5.000000e-01 : f32
    %42 = vector.broadcast %cst_28 : f32 to vector<8x1024xf32>
    %43 = arith.addf %41, %42 : vector<8x1024xf32>
    %44 = arith.truncf %43 : vector<8x1024xf32> to vector<8x1024xbf16>
    %c0_29 = arith.constant 0 : index
    %c0_30 = arith.constant 0 : index
    %45 = vector.load %arg11[%c0_29, %c0_30] : memref<8x1024xbf16, #tpu.memory_space<vmem>>, vector<8x1024xbf16>
    tpu.vector_store %arg11[%c0_29, %c0_30], %44 {strides = array<i32>} : memref<8x1024xbf16, #tpu.memory_space<vmem>>, vector<8x1024xbf16>,
    return
  }
  func.func @transform_0(%arg0: i32) -> (i32, i32) {
    %c0_i32 = arith.constant 0 : i32
    %c0_i32_0 = arith.constant 0 : i32
    return %arg0, %c0_i32 : i32, i32
  }
  func.func @transform_1(%arg0: i32) -> (i32, i32) {
    %c0_i32 = arith.constant 0 : i32
    %c0_i32_0 = arith.constant 0 : i32
    return %arg0, %c0_i32 : i32, i32
  }
  func.func @transform_2(%arg0: i32) -> (i32, i32) {
    %c0_i32 = arith.constant 0 : i32
    %c0_i32_0 = arith.constant 0 : i32
    %c0_i32_1 = arith.constant 0 : i32
    return %c0_i32, %c0_i32_0 : i32, i32
  }
  func.func @transform_3(%arg0: i32) -> (i32, i32) {
    %c0_i32 = arith.constant 0 : i32
    %c0_i32_0 = arith.constant 0 : i32
    %c0_i32_1 = arith.constant 0 : i32
    return %c0_i32, %c0_i32_0 : i32, i32
  }
  func.func @transform_4(%arg0: i32) -> (i32, i32) {
    %c0_i32 = arith.constant 0 : i32
    %c0_i32_0 = arith.constant 0 : i32
    %c0_i32_1 = arith.constant 0 : i32
    return %c0_i32, %c0_i32_0 : i32, i32
  }
  func.func @transform_5(%arg0: i32) -> (i32, i32) {
    %c0_i32 = arith.constant 0 : i32
    %c0_i32_0 = arith.constant 0 : i32
    %c0_i32_1 = arith.constant 0 : i32
    return %c0_i32, %c0_i32_0 : i32, i32
  }
  func.func @transform_6(%arg0: i32) -> (i32, i32) {
    %c0_i32 = arith.constant 0 : i32
    %c0_i32_0 = arith.constant 0 : i32
    %c0_i32_1 = arith.constant 0 : i32
    return %c0_i32, %c0_i32_0 : i32, i32
  }
  func.func @transform_7(%arg0: i32) -> (i32, i32) {
    %c0_i32 = arith.constant 0 : i32
    %c0_i32_0 = arith.constant 0 : i32
    %c0_i32_1 = arith.constant 0 : i32
    return %c0_i32, %c0_i32_0 : i32, i32
  }
  func.func @transform_8(%arg0: i32) -> (i32, i32) {
    %c0_i32 = arith.constant 0 : i32
    %c0_i32_0 = arith.constant 0 : i32
    %c0_i32_1 = arith.constant 0 : i32
    return %c0_i32, %c0_i32_0 : i32, i32
  }
  func.func @transform_9(%arg0: i32) -> (i32, i32) {
    %c0_i32 = arith.constant 0 : i32
    %c0_i32_0 = arith.constant 0 : i32
    %c0_i32_1 = arith.constant 0 : i32
    return %c0_i32, %c0_i32_0 : i32, i32
  }
  func.func @transform_10(%arg0: i32) -> (i32, i32) {
    %c0_i32 = arith.constant 0 : i32
    %c0_i32_0 = arith.constant 0 : i32
    return %arg0, %c0_i32 : i32, i32
  }
  func.func @transform_11(%arg0: i32) -> (i32, i32) {
    %c0_i32 = arith.constant 0 : i32
    %c0_i32_0 = arith.constant 0 : i32
    return %arg0, %c0_i32 : i32, i32
  }
}

module attributes {stable_mosaic.version = 11 : i64} {
  func.func @vae_kernel(%arg0: i32, %arg1: memref<8x1024xf32, #tpu.memory_space<vmem>>, %arg2: memref<8x128xf32, #tpu.memory_space<vmem>>, %arg3: memref<1024x128xbf16, #tpu.memory_space<vmem>>, %arg4: memref<1x128xf32, #tpu.memory_space<vmem>>, %arg5: memref<128x256xbf16, #tpu.memory_space<vmem>>, %arg6: memref<1x256xf32, #tpu.memory_space<vmem>>, %arg7: memref<128x128xbf16, #tpu.memory_space<vmem>>, %arg8: memref<1x128xf32, #tpu.memory_space<vmem>>, %arg9: memref<128x1024xbf16, #tpu.memory_space<vmem>>, %arg10: memref<1x1024xf32, #tpu.memory_space<vmem>>, %arg11: memref<8x1024xbf16, #tpu.memory_space<vmem>>, %arg12: memref<8x256xbf16, #tpu.memory_space<vmem>>) attributes {dimension_semantics = [#tpu.dimension_semantics<parallel>], iteration_bounds = array<i64: 1>, scalar_prefetch = 0 : i64, scratch_operands = 0 : i64, tpu.core_type = #tpu.core_type<tc>, window_params = [{transform_indices = @transform_0, window_bounds = array<i64: 8, 1024>}, {transform_indices = @transform_1, window_bounds = array<i64: 8, 128>}, {pipeline_mode = #tpu.pipeline_mode<synchronous>, transform_indices = @transform_2, window_bounds = array<i64: 1024, 128>}, {pipeline_mode = #tpu.pipeline_mode<synchronous>, transform_indices = @transform_3, window_bounds = array<i64: 1, 128>}, {pipeline_mode = #tpu.pipeline_mode<synchronous>, transform_indices = @transform_4, window_bounds = array<i64: 128, 256>}, {pipeline_mode = #tpu.pipeline_mode<synchronous>, transform_indices = @transform_5, window_bounds = array<i64: 1, 256>}, {pipeline_mode = #tpu.pipeline_mode<synchronous>, transform_indices = @transform_6, window_bounds = array<i64: 128, 128>}, {pipeline_mode = #tpu.pipeline_mode<synchronous>, transform_indices = @transform_7, window_bounds = array<i64: 1, 128>}, {pipeline_mode = #tpu.pipeline_mode<synchronous>, transform_indices = @transform_8, window_bounds = array<i64: 128, 1024>}, {pipeline_mode = #tpu.pipeline_mode<synchronous>, transform_indices = @transform_9, window_bounds = array<i64: 1, 1024>}, {transform_indices = @transform_10, window_bounds = array<i64: 8, 1024>}, {transform_indices = @transform_11, window_bounds = array<i64: 8, 256>}]} {
    %c0 = arith.constant 0 : index
    %c0_0 = arith.constant 0 : index
    %0 = vector.load %arg1[%c0, %c0_0] : memref<8x1024xf32, #tpu.memory_space<vmem>>, vector<8x1024xf32>
    %1 = arith.truncf %0 : vector<8x1024xf32> to vector<8x1024xbf16>
    %c0_1 = arith.constant 0 : index
    %c0_2 = arith.constant 0 : index
    %2 = vector.load %arg3[%c0_1, %c0_2] : memref<1024x128xbf16, #tpu.memory_space<vmem>>, vector<1024x128xbf16>
    %cst = arith.constant dense<0.000000e+00> : vector<8x128xf32>
    %3 = tpu.matmul %1, %2, %cst {dimension_numbers = #tpu.dot_dimension_numbers<[1], [0], [0], [1], [0, 0, 1, 1], [], []>} : vector<8x1024xbf16>, vector<1024x128xbf16>, vector<8x128xf32> -> vector<8x128xf32>
    %c0_3 = arith.constant 0 : index
    %c0_4 = arith.constant 0 : index
    %4 = vector.load %arg4[%c0_3, %c0_4] : memref<1x128xf32, #tpu.memory_space<vmem>>, vector<1x128xf32>
    %5 = vector.broadcast %4 : vector<1x128xf32> to vector<8x128xf32>
    %6 = arith.addf %3, %5 : vector<8x128xf32>
    %cst_5 = arith.constant 0.000000e+00 : f32
    %7 = vector.broadcast %cst_5 : f32 to vector<8x128xf32>
    %8 = arith.maximumf %6, %7 : vector<8x128xf32>
    %9 = arith.truncf %8 : vector<8x128xf32> to vector<8x128xbf16>
    %c0_6 = arith.constant 0 : index
    %c0_7 = arith.constant 0 : index
    %10 = vector.load %arg5[%c0_6, %c0_7] : memref<128x256xbf16, #tpu.memory_space<vmem>>, vector<128x256xbf16>
    %cst_8 = arith.constant dense<0.000000e+00> : vector<8x256xf32>
    %11 = tpu.matmul %9, %10, %cst_8 {dimension_numbers = #tpu.dot_dimension_numbers<[1], [0], [0], [1], [0, 0, 1, 1], [], []>} : vector<8x128xbf16>, vector<128x256xbf16>, vector<8x256xf32> -> vector<8x256xf32>
    %c0_9 = arith.constant 0 : index
    %c0_10 = arith.constant 0 : index
    %12 = vector.load %arg6[%c0_9, %c0_10] : memref<1x256xf32, #tpu.memory_space<vmem>>, vector<1x256xf32>
    %13 = vector.broadcast %12 : vector<1x256xf32> to vector<8x256xf32>
    %14 = arith.addf %11, %13 : vector<8x256xf32>
    %15 = arith.truncf %14 : vector<8x256xf32> to vector<8x256xbf16>
    %c0_11 = arith.constant 0 : index
    %c0_12 = arith.constant 0 : index
    %16 = vector.load %arg12[%c0_11, %c0_12] : memref<8x256xbf16, #tpu.memory_space<vmem>>, vector<8x256xbf16>
    tpu.vector_store %arg12[%c0_11, %c0_12], %15 {strides = array<i32>} : memref<8x256xbf16, #tpu.memory_space<vmem>>, vector<8x256xbf16>,
    %17 = vector.extract_strided_slice %14 {offsets = [0, 0], sizes = [8, 128], strides = [1, 1]} : vector<8x256xf32> to vector<8x128xf32>
    %18 = vector.extract_strided_slice %14 {offsets = [0, 128], sizes = [8, 128], strides = [1, 1]} : vector<8x256xf32> to vector<8x128xf32>
    %c0_13 = arith.constant 0 : index
    %c0_14 = arith.constant 0 : index
    %19 = vector.load %arg2[%c0_13, %c0_14] : memref<8x128xf32, #tpu.memory_space<vmem>>, vector<8x128xf32>
    %20 = math.exp %18 : vector<8x128xf32>
    %21 = arith.mulf %19, %20 : vector<8x128xf32>
    %22 = arith.addf %21, %17 : vector<8x128xf32>
    %23 = arith.truncf %22 : vector<8x128xf32> to vector<8x128xbf16>
    %c0_15 = arith.constant 0 : index
    %c0_16 = arith.constant 0 : index
    %24 = vector.load %arg7[%c0_15, %c0_16] : memref<128x128xbf16, #tpu.memory_space<vmem>>, vector<128x128xbf16>
    %cst_17 = arith.constant dense<0.000000e+00> : vector<8x128xf32>
    %25 = tpu.matmul %23, %24, %cst_17 {dimension_numbers = #tpu.dot_dimension_numbers<[1], [0], [0], [1], [0, 0, 1, 1], [], []>} : vector<8x128xbf16>, vector<128x128xbf16>, vector<8x128xf32> -> vector<8x128xf32>
    %c0_18 = arith.constant 0 : index
    %c0_19 = arith.constant 0 : index
    %26 = vector.load %arg8[%c0_18, %c0_19] : memref<1x128xf32, #tpu.memory_space<vmem>>, vector<1x128xf32>
    %27 = vector.broadcast %26 : vector<1x128xf32> to vector<8x128xf32>
    %28 = arith.addf %25, %27 : vector<8x128xf32>
    %cst_20 = arith.constant 0.000000e+00 : f32
    %29 = vector.broadcast %cst_20 : f32 to vector<8x128xf32>
    %30 = arith.maximumf %28, %29 : vector<8x128xf32>
    %31 = arith.truncf %30 : vector<8x128xf32> to vector<8x128xbf16>
    %c0_21 = arith.constant 0 : index
    %c0_22 = arith.constant 0 : index
    %32 = vector.load %arg9[%c0_21, %c0_22] : memref<128x1024xbf16, #tpu.memory_space<vmem>>, vector<128x1024xbf16>
    %cst_23 = arith.constant dense<0.000000e+00> : vector<8x1024xf32>
    %33 = tpu.matmul %31, %32, %cst_23 {dimension_numbers = #tpu.dot_dimension_numbers<[1], [0], [0], [1], [0, 0, 1, 1], [], []>} : vector<8x128xbf16>, vector<128x1024xbf16>, vector<8x1024xf32> -> vector<8x1024xf32>
    %c0_24 = arith.constant 0 : index
    %c0_25 = arith.constant 0 : index
    %34 = vector.load %arg10[%c0_24, %c0_25] : memref<1x1024xf32, #tpu.memory_space<vmem>>, vector<1x1024xf32>
    %35 = vector.broadcast %34 : vector<1x1024xf32> to vector<8x1024xf32>
    %36 = arith.addf %33, %35 : vector<8x1024xf32>
    %cst_26 = arith.constant 5.000000e-01 : f32
    %37 = vector.broadcast %cst_26 : f32 to vector<8x1024xf32>
    %38 = arith.mulf %37, %36 : vector<8x1024xf32>
    %39 = math.tanh %38 : vector<8x1024xf32>
    %cst_27 = arith.constant 5.000000e-01 : f32
    %40 = vector.broadcast %cst_27 : f32 to vector<8x1024xf32>
    %41 = arith.mulf %40, %39 : vector<8x1024xf32>
    %cst_28 = arith.constant 5.000000e-01 : f32
    %42 = vector.broadcast %cst_28 : f32 to vector<8x1024xf32>
    %43 = arith.addf %41, %42 : vector<8x1024xf32>
    %44 = arith.truncf %43 : vector<8x1024xf32> to vector<8x1024xbf16>
    %c0_29 = arith.constant 0 : index
    %c0_30 = arith.constant 0 : index
    %45 = vector.load %arg11[%c0_29, %c0_30] : memref<8x1024xbf16, #tpu.memory_space<vmem>>, vector<8x1024xbf16>
    tpu.vector_store %arg11[%c0_29, %c0_30], %44 {strides = array<i32>} : memref<8x1024xbf16, #tpu.memory_space<vmem>>, vector<8x1024xbf16>,
    return
  }
  func.func @transform_0(%arg0: i32) -> (i32, i32) {
    %c0_i32 = arith.constant 0 : i32
    %c0_i32_0 = arith.constant 0 : i32
    return %arg0, %c0_i32 : i32, i32
  }
  func.func @transform_1(%arg0: i32) -> (i32, i32) {
    %c0_i32 = arith.constant 0 : i32
    %c0_i32_0 = arith.constant 0 : i32
    return %arg0, %c0_i32 : i32, i32
  }
  func.func @transform_2(%arg0: i32) -> (i32, i32) {
    %c0_i32 = arith.constant 0 : i32
    %c0_i32_0 = arith.constant 0 : i32
    %c0_i32_1 = arith.constant 0 : i32
    return %c0_i32, %c0_i32_0 : i32, i32
  }
  func.func @transform_3(%arg0: i32) -> (i32, i32) {
    %c0_i32 = arith.constant 0 : i32
    %c0_i32_0 = arith.constant 0 : i32
    %c0_i32_1 = arith.constant 0 : i32
    return %c0_i32, %c0_i32_0 : i32, i32
  }
  func.func @transform_4(%arg0: i32) -> (i32, i32) {
    %c0_i32 = arith.constant 0 : i32
    %c0_i32_0 = arith.constant 0 : i32
    %c0_i32_1 = arith.constant 0 : i32
    return %c0_i32, %c0_i32_0 : i32, i32
  }
  func.func @transform_5(%arg0: i32) -> (i32, i32) {
    %c0_i32 = arith.constant 0 : i32
    %c0_i32_0 = arith.constant 0 : i32
    %c0_i32_1 = arith.constant 0 : i32
    return %c0_i32, %c0_i32_0 : i32, i32
  }
  func.func @transform_6(%arg0: i32) -> (i32, i32) {
    %c0_i32 = arith.constant 0 : i32
    %c0_i32_0 = arith.constant 0 : i32
    %c0_i32_1 = arith.constant 0 : i32
    return %c0_i32, %c0_i32_0 : i32, i32
  }
  func.func @transform_7(%arg0: i32) -> (i32, i32) {
    %c0_i32 = arith.constant 0 : i32
    %c0_i32_0 = arith.constant 0 : i32
    %c0_i32_1 = arith.constant 0 : i32
    return %c0_i32, %c0_i32_0 : i32, i32
  }
  func.func @transform_8(%arg0: i32) -> (i32, i32) {
    %c0_i32 = arith.constant 0 : i32
    %c0_i32_0 = arith.constant 0 : i32
    %c0_i32_1 = arith.constant 0 : i32
    return %c0_i32, %c0_i32_0 : i32, i32
  }
  func.func @transform_9(%arg0: i32) -> (i32, i32) {
    %c0_i32 = arith.constant 0 : i32
    %c0_i32_0 = arith.constant 0 : i32
    %c0_i32_1 = arith.constant 0 : i32
    return %c0_i32, %c0_i32_0 : i32, i32
  }
  func.func @transform_10(%arg0: i32) -> (i32, i32) {
    %c0_i32 = arith.constant 0 : i32
    %c0_i32_0 = arith.constant 0 : i32
    return %arg0, %c0_i32 : i32, i32
  }
  func.func @transform_11(%arg0: i32) -> (i32, i32) {
    %c0_i32 = arith.constant 0 : i32
    %c0_i32_0 = arith.constant 0 : i32
    return %arg0, %c0_i32 : i32, i32
  }
}

</mosaic_0001>

<llo_original>
// kernel: tpu_custom_call.1
$region0: #{tpu_custom_call.1}
  #allocation0 [shape = 'u32[]', space=smem, size = 0x4, offset = 0x4, fixed_abs, tag = 'smem constant byte address 0x4 - core index']
  #allocation1 [shape = 'u32[72,128]{1,0:T(1,128)}', space=vmem, size = 0x9000, scoped, tag = 'internal scratch']
  %s0 = inlined_call_operand.hbm [shape: f32[8,1024], index: 0, kind: input, shape index: {}]
  %s1 = inlined_call_operand.hbm [shape: f32[8,128], index: 1, kind: input, shape index: {}]
  %s2 = inlined_call_operand.hbm [shape: bf16[1024,128], index: 2, kind: input, shape index: {}]
  %s3 = inlined_call_operand.hbm [shape: f32[1,128], index: 3, kind: input, shape index: {}]
  %s4 = inlined_call_operand.hbm [shape: bf16[128,256], index: 4, kind: input, shape index: {}]
  %s5 = inlined_call_operand.hbm [shape: f32[1,256], index: 5, kind: input, shape index: {}]
  %s6 = inlined_call_operand.hbm [shape: bf16[128,128], index: 6, kind: input, shape index: {}]
  %s7 = inlined_call_operand.hbm [shape: f32[1,128], index: 7, kind: input, shape index: {}]
  %s8 = inlined_call_operand.hbm [shape: bf16[128,1024], index: 8, kind: input, shape index: {}]
  %s9 = inlined_call_operand.vmem [shape: f32[1,1024], index: 9, kind: input, shape index: {}]
  %s10 = inlined_call_operand.hbm [shape: bf16[8,1024], index: 10, kind: output, shape index: {0}]
  %s11 = inlined_call_operand.hbm [shape: bf16[8,256], index: 11, kind: output, shape index: {1}]
  %12 = xla_tuple %s10, %s11
  %s13 = sld [smem:[#allocation0]]
  $region94: #{tpu_custom_call.1} parent=0
    _
  %s15 = ssub.s32 1, %s13
  %s16 = scalar_select 0, %s15, %s13
  $region1: #{tpu_custom_call.1} parent=0
    #allocation2 [shape = 'u8[32768]{0}', space=vmem, size = 0x8000, scoped, tag = 'input window, operand 0, single buffered']
    #allocation3 [shape = 's32[1]{0}', space=sflag, size = 0x4, scoped, tag = 'scoped memory for tpu_custom_call.1']
    #allocation4 [shape = 's32[1]{0}', space=sflag, size = 0x4, scoped, tag = 'scoped memory for tpu_custom_call.1']
    #allocation5 [shape = 'u8[4096]{0}', space=vmem, size = 0x1000, scoped, tag = 'input window, operand 1, single buffered']
    #allocation6 [shape = 's32[1]{0}', space=sflag, size = 0x4, scoped, tag = 'scoped memory for tpu_custom_call.1']
    #allocation7 [shape = 'u8[262144]{0}', space=vmem, size = 0x40000, scoped, tag = 'input window, operand 2, single buffered']
    #allocation8 [shape = 'u8[512]{0}', space=vmem, size = 0x400, scoped, tag = 'input window, operand 3, single buffered']
    #allocation9 [shape = 's32[1]{0}', space=sflag, size = 0x4, scoped, tag = 'scoped memory for tpu_custom_call.1']
    #allocation10 [shape = 'u8[65536]{0}', space=vmem, size = 0x10000, scoped, tag = 'input window, operand 4, single buffered']
    #allocation11 [shape = 'u8[1024]{0}', space=vmem, size = 0x400, scoped, tag = 'input window, operand 5, single buffered']
    #allocation12 [shape = 's32[1]{0}', space=sflag, size = 0x4, scoped, tag = 'scoped memory for tpu_custom_call.1']
    #allocation13 [shape = 'u8[32768]{0}', space=vmem, size = 0x8000, scoped, tag = 'input window, operand 6, single buffered']
    #allocation14 [shape = 'u8[512]{0}', space=vmem, size = 0x400, scoped, tag = 'input window, operand 7, single buffered']
    #allocation15 [shape = 's32[1]{0}', space=sflag, size = 0x4, scoped, tag = 'scoped memory for tpu_custom_call.1']
    #allocation16 [shape = 'u8[262144]{0}', space=vmem, size = 0x40000, scoped, tag = 'input window, operand 8, single buffered']
    #allocation17 [shape = 'u8[16384]{0}', space=vmem, size = 0x4000, scoped, tag = 'output window, operand 0, single buffered']
    #allocation18 [shape = 'u8[4096]{0}', space=vmem, size = 0x1000, scoped, tag = 'output window, operand 1, single buffered']
    #allocation19 [shape = 's32[1]{0}', space=sflag, size = 0x4, scoped, tag = 'scoped memory for tpu_custom_call.1']
    %17 = vsyncpa [#allocation3], 0
    %18 = vsyncpa [#allocation6], 0
    %19 = vsyncpa [#allocation9], 0
    %20 = vsyncpa [#allocation12], 0
    %21 = vsyncpa [#allocation15], 0
    %22 = vsyncpa [#allocation4], 0
    %23 = vsyncpa [#allocation19], 0
    // Predicated region
    $region2: #{tpu_custom_call.1} parent=1 // pred_check
      _
    $region3: #{tpu_custom_call.1} parent=1 // pred_check_branch
      %25 = sbr.rel (0) target = $region5
    $region4: #{tpu_custom_call.1} parent=1 // pred_region
      %27 = vsyncadd [#allocation3], 0
      %s29 = sshll.u32 %s0, 4
      %s30 = int_to_ptr.hbm [resolvable:$true] %s29
      %s31 = sshll.u32 [#allocation2], 4
      %s32 = int_to_ptr.vmem [resolvable:$true] %s31
      %34 = dma.hbm_to_vmem [thread:$0]  %s30, 1024, %s32, [#allocation3]
    $region5: #{tpu_custom_call.1} parent=1 // pred_fallthru
      _
    // Predicated region
    $region6: #{tpu_custom_call.1} parent=1 // pred_check
      _
    $region7: #{tpu_custom_call.1} parent=1 // pred_check_branch
      %36 = sbr.rel (0) target = $region9
    $region8: #{tpu_custom_call.1} parent=1 // pred_region
      %38 = vsyncadd [#allocation6], 0
      %s40 = sshll.u32 %s1, 4
      %s41 = int_to_ptr.hbm [resolvable:$true] %s40
      %s42 = sshll.u32 [#allocation5], 4
      %s43 = int_to_ptr.vmem [resolvable:$true] %s42
      %45 = dma.hbm_to_vmem [thread:$0]  %s41, 128, %s43, [#allocation6]
    $region9: #{tpu_custom_call.1} parent=1 // pred_fallthru
      _
    // Predicated region
    $region10: #{tpu_custom_call.1} parent=1 // pred_check
      _
    $region11: #{tpu_custom_call.1} parent=1 // pred_check_branch
      %47 = sbr.rel (0) target = $region13
    $region12: #{tpu_custom_call.1} parent=1 // pred_region
      %49 = vsyncadd [#allocation6], 0
      %s50 = sshll.u32 %s2, 4
      %s51 = int_to_ptr.hbm [resolvable:$true] %s50
      %s52 = sshll.u32 [#allocation7], 4
      %s53 = int_to_ptr.vmem [resolvable:$true] %s52
      %58 = dma.hbm_to_vmem [thread:$0]  %s51, 8192, %s53, [#allocation6], 64, 64, 4
    $region13: #{tpu_custom_call.1} parent=1 // pred_fallthru
      _
    // Predicated region
    $region14: #{tpu_custom_call.1} parent=1 // pred_check
      _
    $region15: #{tpu_custom_call.1} parent=1 // pred_check_branch
      %60 = sbr.rel (0) target = $region17
    $region16: #{tpu_custom_call.1} parent=1 // pred_region
      %62 = vsyncadd [#allocation9], 0
      %s64 = sshll.u32 %s3, 4
      %s65 = int_to_ptr.hbm [resolvable:$true] %s64
      %s66 = sshll.u32 [#allocation8], 4
      %s67 = int_to_ptr.vmem [resolvable:$true] %s66
      %69 = dma.hbm_to_vmem [thread:$0]  %s65, 16, %s67, [#allocation9]
    $region17: #{tpu_custom_call.1} parent=1 // pred_fallthru
      _
    // Predicated region
    $region18: #{tpu_custom_call.1} parent=1 // pred_check
      _
    $region19: #{tpu_custom_call.1} parent=1 // pred_check_branch
      %71 = sbr.rel (0) target = $region21
    $region20: #{tpu_custom_call.1} parent=1 // pred_region
      %73 = vsyncadd [#allocation9], 0
      %s74 = sshll.u32 %s4, 4
      %s75 = int_to_ptr.hbm [resolvable:$true] %s74
      %s76 = sshll.u32 [#allocation10], 4
      %s77 = int_to_ptr.vmem [resolvable:$true] %s76
      %82 = dma.hbm_to_vmem [thread:$0]  %s75, 2048, %s77, [#allocation9], 128, 128, 8
    $region21: #{tpu_custom_call.1} parent=1 // pred_fallthru
      _
    // Predicated region
    $region22: #{tpu_custom_call.1} parent=1 // pred_check
      _
    $region23: #{tpu_custom_call.1} parent=1 // pred_check_branch
      %84 = sbr.rel (0) target = $region25
    $region24: #{tpu_custom_call.1} parent=1 // pred_region
      %86 = vsyncadd [#allocation12], 0
      %s88 = sshll.u32 %s5, 4
      %s89 = int_to_ptr.hbm [resolvable:$true] %s88
      %s90 = sshll.u32 [#allocation11], 4
      %s91 = int_to_ptr.vmem [resolvable:$true] %s90
      %93 = dma.hbm_to_vmem [thread:$0]  %s89, 32, %s91, [#allocation12]
    $region25: #{tpu_custom_call.1} parent=1 // pred_fallthru
      _
    // Predicated region
    $region26: #{tpu_custom_call.1} parent=1 // pred_check
      _
    $region27: #{tpu_custom_call.1} parent=1 // pred_check_branch
      %95 = sbr.rel (0) target = $region29
    $region28: #{tpu_custom_call.1} parent=1 // pred_region
      %97 = vsyncadd [#allocation12], 0
      %s98 = sshll.u32 %s6, 4
      %s99 = int_to_ptr.hbm [resolvable:$true] %s98
      %s100 = sshll.u32 [#allocation13], 4
      %s101 = int_to_ptr.vmem [resolvable:$true] %s100
      %106 = dma.hbm_to_vmem [thread:$0]  %s99, 1024, %s101, [#allocation12], 64, 64, 4
    $region29: #{tpu_custom_call.1} parent=1 // pred_fallthru
      _
    // Predicated region
    $region30: #{tpu_custom_call.1} parent=1 // pred_check
      _
    $region31: #{tpu_custom_call.1} parent=1 // pred_check_branch
      %108 = sbr.rel (0) target = $region33
    $region32: #{tpu_custom_call.1} parent=1 // pred_region
      %110 = vsyncadd [#allocation15], 0
      %s112 = sshll.u32 %s7, 4
      %s113 = int_to_ptr.hbm [resolvable:$true] %s112
      %s114 = sshll.u32 [#allocation14], 4
      %s115 = int_to_ptr.vmem [resolvable:$true] %s114
      %117 = dma.hbm_to_vmem [thread:$0]  %s113, 16, %s115, [#allocation15]
    $region33: #{tpu_custom_call.1} parent=1 // pred_fallthru
      _
    // Predicated region
    $region34: #{tpu_custom_call.1} parent=1 // pred_check
      _
    $region35: #{tpu_custom_call.1} parent=1 // pred_check_branch
      %119 = sbr.rel (0) target = $region37
    $region36: #{tpu_custom_call.1} parent=1 // pred_region
      %121 = vsyncadd [#allocation15], 0
      %s122 = sshll.u32 %s8, 4
      %s123 = int_to_ptr.hbm [resolvable:$true] %s122
      %s124 = sshll.u32 [#allocation16], 4
      %s125 = int_to_ptr.vmem [resolvable:$true] %s124
      %130 = dma.hbm_to_vmem [thread:$0]  %s123, 8192, %s125, [#allocation15], 512, 512, 32
    $region37: #{tpu_custom_call.1} parent=1 // pred_fallthru
      _
    // Predicated region
    $region38: #{tpu_custom_call.1} parent=1 // pred_check
      _
    $region39: #{tpu_custom_call.1} parent=1 // pred_check_branch
      %132 = sbr.rel (0) target = $region41
    $region40: #{tpu_custom_call.1} parent=1 // pred_region
      _
    $region41: #{tpu_custom_call.1} parent=1 // pred_fallthru
      _
    // Predicated region
    $region42: #{tpu_custom_call.1} parent=1 // pred_check
      _
    $region43: #{tpu_custom_call.1} parent=1 // pred_check_branch
      %134 = sbr.rel (0) target = $region45
    $region44: #{tpu_custom_call.1} parent=1 // pred_region
      %136 = dma.done [#allocation3], 1024
    $region45: #{tpu_custom_call.1} parent=1 // pred_fallthru
      _
    // Predicated region
    $region46: #{tpu_custom_call.1} parent=1 // pred_check
      _
    $region47: #{tpu_custom_call.1} parent=1 // pred_check_branch
      %138 = sbr.rel (0) target = $region49
    $region48: #{tpu_custom_call.1} parent=1 // pred_region
      %140 = dma.done [#allocation6], 128
    $region49: #{tpu_custom_call.1} parent=1 // pred_fallthru
      _
    // Predicated region
    $region50: #{tpu_custom_call.1} parent=1 // pred_check
      _
    $region51: #{tpu_custom_call.1} parent=1 // pred_check_branch
      %142 = sbr.rel (0) target = $region53
    $region52: #{tpu_custom_call.1} parent=1 // pred_region
      %144 = dma.done [#allocation6], 8192
    $region53: #{tpu_custom_call.1} parent=1 // pred_fallthru
      _
    // Predicated region
    $region54: #{tpu_custom_call.1} parent=1 // pred_check
      _
    $region55: #{tpu_custom_call.1} parent=1 // pred_check_branch
      %146 = sbr.rel (0) target = $region57
    $region56: #{tpu_custom_call.1} parent=1 // pred_region
      %148 = dma.done [#allocation9], 16
    $region57: #{tpu_custom_call.1} parent=1 // pred_fallthru
      _
    // Predicated region
    $region58: #{tpu_custom_call.1} parent=1 // pred_check
      _
    $region59: #{tpu_custom_call.1} parent=1 // pred_check_branch
      %150 = sbr.rel (0) target = $region61
    $region60: #{tpu_custom_call.1} parent=1 // pred_region
      %152 = dma.done [#allocation9], 2048
    $region61: #{tpu_custom_call.1} parent=1 // pred_fallthru
      _
    // Predicated region
    $region62: #{tpu_custom_call.1} parent=1 // pred_check
      _
    $region63: #{tpu_custom_call.1} parent=1 // pred_check_branch
      %154 = sbr.rel (0) target = $region65
    $region64: #{tpu_custom_call.1} parent=1 // pred_region
      %156 = dma.done [#allocation12], 32
    $region65: #{tpu_custom_call.1} parent=1 // pred_fallthru
      _
    // Predicated region
    $region66: #{tpu_custom_call.1} parent=1 // pred_check
      _
    $region67: #{tpu_custom_call.1} parent=1 // pred_check_branch
      %158 = sbr.rel (0) target = $region69
    $region68: #{tpu_custom_call.1} parent=1 // pred_region
      %160 = dma.done [#allocation12], 1024
    $region69: #{tpu_custom_call.1} parent=1 // pred_fallthru
      _
    // Predicated region
    $region70: #{tpu_custom_call.1} parent=1 // pred_check
      _
    $region71: #{tpu_custom_call.1} parent=1 // pred_check_branch
      %162 = sbr.rel (0) target = $region73
    $region72: #{tpu_custom_call.1} parent=1 // pred_region
      %164 = dma.done [#allocation15], 16
    $region73: #{tpu_custom_call.1} parent=1 // pred_fallthru
      _
    // Predicated region
    $region74: #{tpu_custom_call.1} parent=1 // pred_check
      _
    $region75: #{tpu_custom_call.1} parent=1 // pred_check_branch
      %166 = sbr.rel (0) target = $region77
    $region76: #{tpu_custom_call.1} parent=1 // pred_region
      %168 = dma.done [#allocation15], 8192
    $region77: #{tpu_custom_call.1} parent=1 // pred_fallthru
      _
    %v169 = vld [vmem:[#allocation2] sm:$0xff]
    %v170 = vld [vmem:[#allocation2 + $0x8] sm:$0xff]
    %v171 = vld [vmem:[#allocation2 + $0x10] sm:$0xff]
    %v172 = vld [vmem:[#allocation2 + $0x18] sm:$0xff]
    %v173 = vld [vmem:[#allocation2 + $0x20] sm:$0xff]
    %v174 = vld [vmem:[#allocation2 + $0x28] sm:$0xff]
    %v175 = vld [vmem:[#allocation2 + $0x30] sm:$0xff]
    %v176 = vld [vmem:[#allocation2 + $0x38] sm:$0xff]
    %v177 = vpack.c.bf16 %v169, %v169
    %v178 = vpack.c.bf16 %v170, %v170
    %v179 = vpack.c.bf16 %v171, %v171
    %v180 = vpack.c.bf16 %v172, %v172
    %v181 = vpack.c.bf16 %v173, %v173
    %v182 = vpack.c.bf16 %v174, %v174
    %v183 = vpack.c.bf16 %v175, %v175
    %v184 = vpack.c.bf16 %v176, %v176
    %v185 = vld [vmem:[#allocation7] sm:$0xf]
    %v186 = vld [vmem:[#allocation7 + $0x4] sm:$0xf]
    %v187 = vld [vmem:[#allocation7 + $0x8] sm:$0xf]
    %v188 = vld [vmem:[#allocation7 + $0xc] sm:$0xf]
    %v189 = vld [vmem:[#allocation7 + $0x10] sm:$0xf]
    %v190 = vld [vmem:[#allocation7 + $0x14] sm:$0xf]
    %v191 = vld [vmem:[#allocation7 + $0x18] sm:$0xf]
    %v192 = vld [vmem:[#allocation7 + $0x1c] sm:$0xf]
    %v193 = vld [vmem:[#allocation7 + $0x20] sm:$0xf]
    %v194 = vld [vmem:[#allocation7 + $0x24] sm:$0xf]
    %v195 = vld [vmem:[#allocation7 + $0x28] sm:$0xf]
    %v196 = vld [vmem:[#allocation7 + $0x2c] sm:$0xf]
    %v197 = vld [vmem:[#allocation7 + $0x30] sm:$0xf]
    %v198 = vld [vmem:[#allocation7 + $0x34] sm:$0xf]
    %v199 = vld [vmem:[#allocation7 + $0x38] sm:$0xf]
    %v200 = vld [vmem:[#allocation7 + $0x3c] sm:$0xf]
    %v201 = vld [vmem:[#allocation7 + $0x40] sm:$0xf]
    %v202 = vld [vmem:[#allocation7 + $0x44] sm:$0xf]
    %v203 = vld [vmem:[#allocation7 + $0x48] sm:$0xf]
    %v204 = vld [vmem:[#allocation7 + $0x4c] sm:$0xf]
    %v205 = vld [vmem:[#allocation7 + $0x50] sm:$0xf]
    %v206 = vld [vmem:[#allocation7 + $0x54] sm:$0xf]
    %v207 = vld [vmem:[#allocation7 + $0x58] sm:$0xf]
    %v208 = vld [vmem:[#allocation7 + $0x5c] sm:$0xf]
    %v209 = vld [vmem:[#allocation7 + $0x60] sm:$0xf]
    %v210 = vld [vmem:[#allocation7 + $0x64] sm:$0xf]
    %v211 = vld [vmem:[#allocation7 + $0x68] sm:$0xf]
    %v212 = vld [vmem:[#allocation7 + $0x6c] sm:$0xf]
    %v213 = vld [vmem:[#allocation7 + $0x70] sm:$0xf]
    %v214 = vld [vmem:[#allocation7 + $0x74] sm:$0xf]
    %v215 = vld [vmem:[#allocation7 + $0x78] sm:$0xf]
    %v216 = vld [vmem:[#allocation7 + $0x7c] sm:$0xf]
    %v217 = vld [vmem:[#allocation7 + $0x80] sm:$0xf]
    %v218 = vld [vmem:[#allocation7 + $0x84] sm:$0xf]
    %v219 = vld [vmem:[#allocation7 + $0x88] sm:$0xf]
    %v220 = vld [vmem:[#allocation7 + $0x8c] sm:$0xf]
    %v221 = vld [vmem:[#allocation7 + $0x90] sm:$0xf]
    %v222 = vld [vmem:[#allocation7 + $0x94] sm:$0xf]
    %v223 = vld [vmem:[#allocation7 + $0x98] sm:$0xf]
    %v224 = vld [vmem:[#allocation7 + $0x9c] sm:$0xf]
    %v225 = vld [vmem:[#allocation7 + $0xa0] sm:$0xf]
    %v226 = vld [vmem:[#allocation7 + $0xa4] sm:$0xf]
    %v227 = vld [vmem:[#allocation7 + $0xa8] sm:$0xf]
    %v228 = vld [vmem:[#allocation7 + $0xac] sm:$0xf]
    %v229 = vld [vmem:[#allocation7 + $0xb0] sm:$0xf]
    %v230 = vld [vmem:[#allocation7 + $0xb4] sm:$0xf]
    %v231 = vld [vmem:[#allocation7 + $0xb8] sm:$0xf]
    %v232 = vld [vmem:[#allocation7 + $0xbc] sm:$0xf]
    %v233 = vld [vmem:[#allocation7 + $0xc0] sm:$0xf]
    %v234 = vld [vmem:[#allocation7 + $0xc4] sm:$0xf]
    %v235 = vld [vmem:[#allocation7 + $0xc8] sm:$0xf]
    %v236 = vld [vmem:[#allocation7 + $0xcc] sm:$0xf]
    %v237 = vld [vmem:[#allocation7 + $0xd0] sm:$0xf]
    %v238 = vld [vmem:[#allocation7 + $0xd4] sm:$0xf]
    %v239 = vld [vmem:[#allocation7 + $0xd8] sm:$0xf]
    %v240 = vld [vmem:[#allocation7 + $0xdc] sm:$0xf]
    %v241 = vld [vmem:[#allocation7 + $0xe0] sm:$0xf]
    %v242 = vld [vmem:[#allocation7 + $0xe4] sm:$0xf]
    %v243 = vld [vmem:[#allocation7 + $0xe8] sm:$0xf]
    %v244 = vld [vmem:[#allocation7 + $0xec] sm:$0xf]
    %v245 = vld [vmem:[#allocation7 + $0xf0] sm:$0xf]
    %v246 = vld [vmem:[#allocation7 + $0xf4] sm:$0xf]
    %v247 = vld [vmem:[#allocation7 + $0xf8] sm:$0xf]
    %v248 = vld [vmem:[#allocation7 + $0xfc] sm:$0xf]
    %v249 = vld [vmem:[#allocation7 + $0x100] sm:$0xf]
    %v250 = vld [vmem:[#allocation7 + $0x104] sm:$0xf]
    %v251 = vld [vmem:[#allocation7 + $0x108] sm:$0xf]
    %v252 = vld [vmem:[#allocation7 + $0x10c] sm:$0xf]
    %v253 = vld [vmem:[#allocation7 + $0x110] sm:$0xf]
    %v254 = vld [vmem:[#allocation7 + $0x114] sm:$0xf]
    %v255 = vld [vmem:[#allocation7 + $0x118] sm:$0xf]
    %v256 = vld [vmem:[#allocation7 + $0x11c] sm:$0xf]
    %v257 = vld [vmem:[#allocation7 + $0x120] sm:$0xf]
    %v258 = vld [vmem:[#allocation7 + $0x124] sm:$0xf]
    %v259 = vld [vmem:[#allocation7 + $0x128] sm:$0xf]
    %v260 = vld [vmem:[#allocation7 + $0x12c] sm:$0xf]
    %v261 = vld [vmem:[#allocation7 + $0x130] sm:$0xf]
    %v262 = vld [vmem:[#allocation7 + $0x134] sm:$0xf]
    %v263 = vld [vmem:[#allocation7 + $0x138] sm:$0xf]
    %v264 = vld [vmem:[#allocation7 + $0x13c] sm:$0xf]
    %v265 = vld [vmem:[#allocation7 + $0x140] sm:$0xf]
    %v266 = vld [vmem:[#allocation7 + $0x144] sm:$0xf]
    %v267 = vld [vmem:[#allocation7 + $0x148] sm:$0xf]
    %v268 = vld [vmem:[#allocation7 + $0x14c] sm:$0xf]
    %v269 = vld [vmem:[#allocation7 + $0x150] sm:$0xf]
    %v270 = vld [vmem:[#allocation7 + $0x154] sm:$0xf]
    %v271 = vld [vmem:[#allocation7 + $0x158] sm:$0xf]
    %v272 = vld [vmem:[#allocation7 + $0x15c] sm:$0xf]
    %v273 = vld [vmem:[#allocation7 + $0x160] sm:$0xf]
    %v274 = vld [vmem:[#allocation7 + $0x164] sm:$0xf]
    %v275 = vld [vmem:[#allocation7 + $0x168] sm:$0xf]
    %v276 = vld [vmem:[#allocation7 + $0x16c] sm:$0xf]
    %v277 = vld [vmem:[#allocation7 + $0x170] sm:$0xf]
    %v278 = vld [vmem:[#allocation7 + $0x174] sm:$0xf]
    %v279 = vld [vmem:[#allocation7 + $0x178] sm:$0xf]
    %v280 = vld [vmem:[#allocation7 + $0x17c] sm:$0xf]
    %v281 = vld [vmem:[#allocation7 + $0x180] sm:$0xf]
    %v282 = vld [vmem:[#allocation7 + $0x184] sm:$0xf]
    %v283 = vld [vmem:[#allocation7 + $0x188] sm:$0xf]
    %v284 = vld [vmem:[#allocation7 + $0x18c] sm:$0xf]
    %v285 = vld [vmem:[#allocation7 + $0x190] sm:$0xf]
    %v286 = vld [vmem:[#allocation7 + $0x194] sm:$0xf]
    %v287 = vld [vmem:[#allocation7 + $0x198] sm:$0xf]
    %v288 = vld [vmem:[#allocation7 + $0x19c] sm:$0xf]
    %v289 = vld [vmem:[#allocation7 + $0x1a0] sm:$0xf]
    %v290 = vld [vmem:[#allocation7 + $0x1a4] sm:$0xf]
    %v291 = vld [vmem:[#allocation7 + $0x1a8] sm:$0xf]
    %v292 = vld [vmem:[#allocation7 + $0x1ac] sm:$0xf]
    %v293 = vld [vmem:[#allocation7 + $0x1b0] sm:$0xf]
    %v294 = vld [vmem:[#allocation7 + $0x1b4] sm:$0xf]
    %v295 = vld [vmem:[#allocation7 + $0x1b8] sm:$0xf]
    %v296 = vld [vmem:[#allocation7 + $0x1bc] sm:$0xf]
    %v297 = vld [vmem:[#allocation7 + $0x1c0] sm:$0xf]
    %v298 = vld [vmem:[#allocation7 + $0x1c4] sm:$0xf]
    %v299 = vld [vmem:[#allocation7 + $0x1c8] sm:$0xf]
    %v300 = vld [vmem:[#allocation7 + $0x1cc] sm:$0xf]
    %v301 = vld [vmem:[#allocation7 + $0x1d0] sm:$0xf]
    %v302 = vld [vmem:[#allocation7 + $0x1d4] sm:$0xf]
    %v303 = vld [vmem:[#allocation7 + $0x1d8] sm:$0xf]
    %v304 = vld [vmem:[#allocation7 + $0x1dc] sm:$0xf]
    %v305 = vld [vmem:[#allocation7 + $0x1e0] sm:$0xf]
    %v306 = vld [vmem:[#allocation7 + $0x1e4] sm:$0xf]
    %v307 = vld [vmem:[#allocation7 + $0x1e8] sm:$0xf]
    %v308 = vld [vmem:[#allocation7 + $0x1ec] sm:$0xf]
    %v309 = vld [vmem:[#allocation7 + $0x1f0] sm:$0xf]
    %v310 = vld [vmem:[#allocation7 + $0x1f4] sm:$0xf]
    %v311 = vld [vmem:[#allocation7 + $0x1f8] sm:$0xf]
    %v312 = vld [vmem:[#allocation7 + $0x1fc] sm:$0xf]
    %v313 = vld [vmem:[#allocation8] sm:$0x1]
    %v315 = vperm.slane %v313, 0
    %v445 = vunpack.c.l.b16 %v185
    %v446 = vunpack.c.l.b16 %v186
    %v447 = vunpack.c.l.b16 %v187
    %v448 = vunpack.c.l.b16 %v188
    %v449 = vunpack.c.l.b16 %v189
    %v450 = vunpack.c.l.b16 %v190
    %v451 = vunpack.c.l.b16 %v191
    %v452 = vunpack.c.l.b16 %v192
    %v453 = vunpack.c.l.b16 %v193
    %v454 = vunpack.c.l.b16 %v194
    %v455 = vunpack.c.l.b16 %v195
    %v456 = vunpack.c.l.b16 %v196
    %v457 = vunpack.c.l.b16 %v197
    %v458 = vunpack.c.l.b16 %v198
    %v459 = vunpack.c.l.b16 %v199
    %v460 = vunpack.c.l.b16 %v200
    %v461 = vunpack.c.l.b16 %v201
    %v462 = vunpack.c.l.b16 %v202
    %v463 = vunpack.c.l.b16 %v203
    %v464 = vunpack.c.l.b16 %v204
    %v465 = vunpack.c.l.b16 %v205
    %v466 = vunpack.c.l.b16 %v206
    %v467 = vunpack.c.l.b16 %v207
    %v468 = vunpack.c.l.b16 %v208
    %v469 = vunpack.c.l.b16 %v209
    %v470 = vunpack.c.l.b16 %v210
    %v471 = vunpack.c.l.b16 %v211
    %v472 = vunpack.c.l.b16 %v212
    %v473 = vunpack.c.l.b16 %v213
    %v474 = vunpack.c.l.b16 %v214
    %v475 = vunpack.c.l.b16 %v215
    %v476 = vunpack.c.l.b16 %v216
    %v477 = vunpack.c.l.b16 %v217
    %v478 = vunpack.c.l.b16 %v218
    %v479 = vunpack.c.l.b16 %v219
    %v480 = vunpack.c.l.b16 %v220
    %v481 = vunpack.c.l.b16 %v221
    %v482 = vunpack.c.l.b16 %v222
    %v483 = vunpack.c.l.b16 %v223
    %v484 = vunpack.c.l.b16 %v224
    %v485 = vunpack.c.l.b16 %v225
    %v486 = vunpack.c.l.b16 %v226
    %v487 = vunpack.c.l.b16 %v227
    %v488 = vunpack.c.l.b16 %v228
    %v489 = vunpack.c.l.b16 %v229
    %v490 = vunpack.c.l.b16 %v230
    %v491 = vunpack.c.l.b16 %v231
    %v492 = vunpack.c.l.b16 %v232
    %v493 = vunpack.c.l.b16 %v233
    %v494 = vunpack.c.l.b16 %v234
    %v495 = vunpack.c.l.b16 %v235
    %v496 = vunpack.c.l.b16 %v236
    %v497 = vunpack.c.l.b16 %v237
    %v498 = vunpack.c.l.b16 %v238
    %v499 = vunpack.c.l.b16 %v239
    %v500 = vunpack.c.l.b16 %v240
    %v501 = vunpack.c.l.b16 %v241
    %v502 = vunpack.c.l.b16 %v242
    %v503 = vunpack.c.l.b16 %v243
    %v504 = vunpack.c.l.b16 %v244
    %v505 = vunpack.c.l.b16 %v245
    %v506 = vunpack.c.l.b16 %v246
    %v507 = vunpack.c.l.b16 %v247
    %v508 = vunpack.c.l.b16 %v248
    %v509 = vunpack.c.l.b16 %v249
    %v510 = vunpack.c.l.b16 %v250
    %v511 = vunpack.c.l.b16 %v251
    %v512 = vunpack.c.l.b16 %v252
    %v513 = vunpack.c.l.b16 %v253
    %v514 = vunpack.c.l.b16 %v254
    %v515 = vunpack.c.l.b16 %v255
    %v516 = vunpack.c.l.b16 %v256
    %v517 = vunpack.c.l.b16 %v257
    %v518 = vunpack.c.l.b16 %v258
    %v519 = vunpack.c.l.b16 %v259
    %v520 = vunpack.c.l.b16 %v260
    %v521 = vunpack.c.l.b16 %v261
    %v522 = vunpack.c.l.b16 %v262
    %v523 = vunpack.c.l.b16 %v263
    %v524 = vunpack.c.l.b16 %v264
    %v525 = vunpack.c.l.b16 %v265
    %v526 = vunpack.c.l.b16 %v266
    %v527 = vunpack.c.l.b16 %v267
    %v528 = vunpack.c.l.b16 %v268
    %v529 = vunpack.c.l.b16 %v269
    %v530 = vunpack.c.l.b16 %v270
    %v531 = vunpack.c.l.b16 %v271
    %v532 = vunpack.c.l.b16 %v272
    %v533 = vunpack.c.l.b16 %v273
    %v534 = vunpack.c.l.b16 %v274
    %v535 = vunpack.c.l.b16 %v275
    %v536 = vunpack.c.l.b16 %v276
    %v537 = vunpack.c.l.b16 %v277
    %v538 = vunpack.c.l.b16 %v278
    %v539 = vunpack.c.l.b16 %v279
    %v540 = vunpack.c.l.b16 %v280
    %v541 = vunpack.c.l.b16 %v281
    %v542 = vunpack.c.l.b16 %v282
    %v543 = vunpack.c.l.b16 %v283
    %v544 = vunpack.c.l.b16 %v284
    %v545 = vunpack.c.l.b16 %v285
    %v546 = vunpack.c.l.b16 %v286
    %v547 = vunpack.c.l.b16 %v287
    %v548 = vunpack.c.l.b16 %v288
    %v549 = vunpack.c.l.b16 %v289
    %v550 = vunpack.c.l.b16 %v290
    %v551 = vunpack.c.l.b16 %v291
    %v552 = vunpack.c.l.b16 %v292
    %v553 = vunpack.c.l.b16 %v293
    %v554 = vunpack.c.l.b16 %v294
    %v555 = vunpack.c.l.b16 %v295
    %v556 = vunpack.c.l.b16 %v296
    %v557 = vunpack.c.l.b16 %v297
    %v558 = vunpack.c.l.b16 %v298
    %v559 = vunpack.c.l.b16 %v299
    %v560 = vunpack.c.l.b16 %v300
    %v561 = vunpack.c.l.b16 %v301
    %v562 = vunpack.c.l.b16 %v302
    %v563 = vunpack.c.l.b16 %v303
    %v564 = vunpack.c.l.b16 %v304
    %v565 = vunpack.c.l.b16 %v305
    %v566 = vunpack.c.l.b16 %v306
    %v567 = vunpack.c.l.b16 %v307
    %v568 = vunpack.c.l.b16 %v308
    %v569 = vunpack.c.l.b16 %v309
    %v570 = vunpack.c.l.b16 %v310
    %v571 = vunpack.c.l.b16 %v311
    %v572 = vunpack.c.l.b16 %v312
    %v573 = vpack.c.b16 %v446, %v445
    %v574 = vpack.c.b16 %v448, %v447
    %v575 = vpack.c.b16 %v450, %v449
    %v576 = vpack.c.b16 %v452, %v451
    %v577 = vpack.c.b16 %v454, %v453
    %v578 = vpack.c.b16 %v456, %v455
    %v579 = vpack.c.b16 %v458, %v457
    %v580 = vpack.c.b16 %v460, %v459
    %v581 = vpack.c.b16 %v462, %v461
    %v582 = vpack.c.b16 %v464, %v463
    %v583 = vpack.c.b16 %v466, %v465
    %v584 = vpack.c.b16 %v468, %v467
    %v585 = vpack.c.b16 %v470, %v469
    %v586 = vpack.c.b16 %v472, %v471
    %v587 = vpack.c.b16 %v474, %v473
    %v588 = vpack.c.b16 %v476, %v475
    %v589 = vpack.c.b16 %v478, %v477
    %v590 = vpack.c.b16 %v480, %v479
    %v591 = vpack.c.b16 %v482, %v481
    %v592 = vpack.c.b16 %v484, %v483
    %v593 = vpack.c.b16 %v486, %v485
    %v594 = vpack.c.b16 %v488, %v487
    %v595 = vpack.c.b16 %v490, %v489
    %v596 = vpack.c.b16 %v492, %v491
    %v597 = vpack.c.b16 %v494, %v493
    %v598 = vpack.c.b16 %v496, %v495
    %v599 = vpack.c.b16 %v498, %v497
    %v600 = vpack.c.b16 %v500, %v499
    %v601 = vpack.c.b16 %v502, %v501
    %v602 = vpack.c.b16 %v504, %v503
    %v603 = vpack.c.b16 %v506, %v505
    %v604 = vpack.c.b16 %v508, %v507
    %v605 = vpack.c.b16 %v510, %v509
    %v606 = vpack.c.b16 %v512, %v511
    %v607 = vpack.c.b16 %v514, %v513
    %v608 = vpack.c.b16 %v516, %v515
    %v609 = vpack.c.b16 %v518, %v517
    %v610 = vpack.c.b16 %v520, %v519
    %v611 = vpack.c.b16 %v522, %v521
    %v612 = vpack.c.b16 %v524, %v523
    %v613 = vpack.c.b16 %v526, %v525
    %v614 = vpack.c.b16 %v528, %v527
    %v615 = vpack.c.b16 %v530, %v529
    %v616 = vpack.c.b16 %v532, %v531
    %v617 = vpack.c.b16 %v534, %v533
    %v618 = vpack.c.b16 %v536, %v535
    %v619 = vpack.c.b16 %v538, %v537
    %v620 = vpack.c.b16 %v540, %v539
    %v621 = vpack.c.b16 %v542, %v541
    %v622 = vpack.c.b16 %v544, %v543
    %v623 = vpack.c.b16 %v546, %v545
    %v624 = vpack.c.b16 %v548, %v547
    %v625 = vpack.c.b16 %v550, %v549
    %v626 = vpack.c.b16 %v552, %v551
    %v627 = vpack.c.b16 %v554, %v553
    %v628 = vpack.c.b16 %v556, %v555
    %v629 = vpack.c.b16 %v558, %v557
    %v630 = vpack.c.b16 %v560, %v559
    %v631 = vpack.c.b16 %v562, %v561
    %v632 = vpack.c.b16 %v564, %v563
    %v633 = vpack.c.b16 %v566, %v565
    %v634 = vpack.c.b16 %v568, %v567
    %v635 = vpack.c.b16 %v570, %v569
    %v636 = vpack.c.b16 %v572, %v571
    %701 = vmatpush.bf16.msra.mxu0 %v580
    %702 = vmatpush.bf16.msra.mxu0 %v579
    %703 = vmatpush.bf16.msra.mxu0 %v578
    %704 = vmatpush.bf16.msra.mxu0 %v577
    %705 = vmatpush.bf16.msra.mxu0 %v576
    %706 = vmatpush.bf16.msra.mxu0 %v575
    %707 = vmatpush.bf16.msra.mxu0 %v574
    %708 = vmatpush.bf16.msra.mxu0 %v573
    %709 = vmatmul.bf16.gmra.mxu0 %v177
    %v710 = vpop.f32.mrf.mxu0
    %v711 = vadd.f32 %v315, %v710
    %v712 = vpop.f32.mrf.mxu0
    %713 = vdwg.mxu0
    %714 = vmatpush.bf16.msra.mxu0 %v588
    %715 = vmatpush.bf16.msra.mxu0 %v587
    %716 = vmatpush.bf16.msra.mxu0 %v586
    %717 = vmatpush.bf16.msra.mxu0 %v585
    %718 = vmatpush.bf16.msra.mxu0 %v584
    %719 = vmatpush.bf16.msra.mxu0 %v583
    %720 = vmatpush.bf16.msra.mxu0 %v582
    %721 = vmatpush.bf16.msra.mxu0 %v581
    %722 = vmatmul.bf16.gmra.mxu0 %v178
    %v723 = vpop.f32.mrf.mxu0
    %v724 = vadd.f32 %v711, %v723
    %v725 = vpop.f32.mrf.mxu0
    %726 = vdwg.mxu0
    %727 = vmatpush.bf16.msra.mxu0 %v596
    %728 = vmatpush.bf16.msra.mxu0 %v595
    %729 = vmatpush.bf16.msra.mxu0 %v594
    %730 = vmatpush.bf16.msra.mxu0 %v593
    %731 = vmatpush.bf16.msra.mxu0 %v592
    %732 = vmatpush.bf16.msra.mxu0 %v591
    %733 = vmatpush.bf16.msra.mxu0 %v590
    %734 = vmatpush.bf16.msra.mxu0 %v589
    %735 = vmatmul.bf16.gmra.mxu0 %v179
    %v736 = vpop.f32.mrf.mxu0
    %v737 = vadd.f32 %v724, %v736
    %v738 = vpop.f32.mrf.mxu0
    %739 = vdwg.mxu0
    %740 = vmatpush.bf16.msra.mxu0 %v604
    %741 = vmatpush.bf16.msra.mxu0 %v603
    %742 = vmatpush.bf16.msra.mxu0 %v602
    %743 = vmatpush.bf16.msra.mxu0 %v601
    %744 = vmatpush.bf16.msra.mxu0 %v600
    %745 = vmatpush.bf16.msra.mxu0 %v599
    %746 = vmatpush.bf16.msra.mxu0 %v598
    %747 = vmatpush.bf16.msra.mxu0 %v597
    %748 = vmatmul.bf16.gmra.mxu0 %v180
    %v749 = vpop.f32.mrf.mxu0
    %v750 = vadd.f32 %v737, %v749
    %v751 = vpop.f32.mrf.mxu0
    %752 = vdwg.mxu0
    %753 = vmatpush.bf16.msra.mxu0 %v612
    %754 = vmatpush.bf16.msra.mxu0 %v611
    %755 = vmatpush.bf16.msra.mxu0 %v610
    %756 = vmatpush.bf16.msra.mxu0 %v609
    %757 = vmatpush.bf16.msra.mxu0 %v608
    %758 = vmatpush.bf16.msra.mxu0 %v607
    %759 = vmatpush.bf16.msra.mxu0 %v606
    %760 = vmatpush.bf16.msra.mxu0 %v605
    %761 = vmatmul.bf16.gmra.mxu0 %v181
    %v762 = vpop.f32.mrf.mxu0
    %v763 = vadd.f32 %v750, %v762
    %v764 = vpop.f32.mrf.mxu0
    %765 = vdwg.mxu0
    %766 = vmatpush.bf16.msra.mxu0 %v620
    %767 = vmatpush.bf16.msra.mxu0 %v619
    %768 = vmatpush.bf16.msra.mxu0 %v618
    %769 = vmatpush.bf16.msra.mxu0 %v617
    %770 = vmatpush.bf16.msra.mxu0 %v616
    %771 = vmatpush.bf16.msra.mxu0 %v615
    %772 = vmatpush.bf16.msra.mxu0 %v614
    %773 = vmatpush.bf16.msra.mxu0 %v613
    %774 = vmatmul.bf16.gmra.mxu0 %v182
    %v775 = vpop.f32.mrf.mxu0
    %v776 = vadd.f32 %v763, %v775
    %v777 = vpop.f32.mrf.mxu0
    %778 = vdwg.mxu0
    %779 = vmatpush.bf16.msra.mxu0 %v628
    %780 = vmatpush.bf16.msra.mxu0 %v627
    %781 = vmatpush.bf16.msra.mxu0 %v626
    %782 = vmatpush.bf16.msra.mxu0 %v625
    %783 = vmatpush.bf16.msra.mxu0 %v624
    %784 = vmatpush.bf16.msra.mxu0 %v623
    %785 = vmatpush.bf16.msra.mxu0 %v622
    %786 = vmatpush.bf16.msra.mxu0 %v621
    %787 = vmatmul.bf16.gmra.mxu0 %v183
    %v788 = vpop.f32.mrf.mxu0
    %v789 = vadd.f32 %v776, %v788
    %v790 = vpop.f32.mrf.mxu0
    %791 = vdwg.mxu0
    %792 = vmatpush.bf16.msra.mxu0 %v636
    %793 = vmatpush.bf16.msra.mxu0 %v635
    %794 = vmatpush.bf16.msra.mxu0 %v634
    %795 = vmatpush.bf16.msra.mxu0 %v633
    %796 = vmatpush.bf16.msra.mxu0 %v632
    %797 = vmatpush.bf16.msra.mxu0 %v631
    %798 = vmatpush.bf16.msra.mxu0 %v630
    %799 = vmatpush.bf16.msra.mxu0 %v629
    %800 = vmatmul.bf16.gmra.mxu0 %v184
    %v801 = vpop.f32.mrf.mxu0
    %v802 = vadd.f32 %v789, %v801
    %v803 = vpop.f32.mrf.mxu0
    %804 = vdwg.mxu0
    %v805 = vmax.f32 %v802, 0.0
    %v806 = vpack.c.bf16 %v805, %v805
    %v807 = vld [vmem:[#allocation10] sm:$0xff]
    %v808 = vld [vmem:[#allocation10 + $0x8] sm:$0xff]
    %v809 = vld [vmem:[#allocation10 + $0x10] sm:$0xff]
    %v810 = vld [vmem:[#allocation10 + $0x18] sm:$0xff]
    %v811 = vld [vmem:[#allocation10 + $0x20] sm:$0xff]
    %v812 = vld [vmem:[#allocation10 + $0x28] sm:$0xff]
    %v813 = vld [vmem:[#allocation10 + $0x30] sm:$0xff]
    %v814 = vld [vmem:[#allocation10 + $0x38] sm:$0xff]
    %v815 = vld [vmem:[#allocation10 + $0x40] sm:$0xff]
    %v816 = vld [vmem:[#allocation10 + $0x48] sm:$0xff]
    %v817 = vld [vmem:[#allocation10 + $0x50] sm:$0xff]
    %v818 = vld [vmem:[#allocation10 + $0x58] sm:$0xff]
    %v819 = vld [vmem:[#allocation10 + $0x60] sm:$0xff]
    %v820 = vld [vmem:[#allocation10 + $0x68] sm:$0xff]
    %v821 = vld [vmem:[#allocation10 + $0x70] sm:$0xff]
    %v822 = vld [vmem:[#allocation10 + $0x78] sm:$0xff]
    %v823 = vld [vmem:[#allocation11] sm:$0x3]
    %v825 = vperm.slane %v823, 0
    %v826 = vperm.slane %v823, 1
    %v845 = vunpack.c.l.b16 %v807
    %v846 = vunpack.c.h.b16 %v807
    %v847 = vunpack.c.l.b16 %v808
    %v848 = vunpack.c.h.b16 %v808
    %v849 = vunpack.c.l.b16 %v809
    %v850 = vunpack.c.h.b16 %v809
    %v851 = vunpack.c.l.b16 %v810
    %v852 = vunpack.c.h.b16 %v810
    %v853 = vunpack.c.l.b16 %v811
    %v854 = vunpack.c.h.b16 %v811
    %v855 = vunpack.c.l.b16 %v812
    %v856 = vunpack.c.h.b16 %v812
    %v857 = vunpack.c.l.b16 %v813
    %v858 = vunpack.c.h.b16 %v813
    %v859 = vunpack.c.l.b16 %v814
    %v860 = vunpack.c.h.b16 %v814
    %v861 = vunpack.c.l.b16 %v815
    %v862 = vunpack.c.h.b16 %v815
    %v863 = vunpack.c.l.b16 %v816
    %v864 = vunpack.c.h.b16 %v816
    %v865 = vunpack.c.l.b16 %v817
    %v866 = vunpack.c.h.b16 %v817
    %v867 = vunpack.c.l.b16 %v818
    %v868 = vunpack.c.h.b16 %v818
    %v869 = vunpack.c.l.b16 %v819
    %v870 = vunpack.c.h.b16 %v819
    %v871 = vunpack.c.l.b16 %v820
    %v872 = vunpack.c.h.b16 %v820
    %v873 = vunpack.c.l.b16 %v821
    %v874 = vunpack.c.h.b16 %v821
    %v875 = vunpack.c.l.b16 %v822
    %v876 = vunpack.c.h.b16 %v822
    %v877 = vpack.c.b16 %v847, %v845
    %v878 = vpack.c.b16 %v848, %v846
    %v879 = vpack.c.b16 %v851, %v849
    %v880 = vpack.c.b16 %v852, %v850
    %v881 = vpack.c.b16 %v855, %v853
    %v882 = vpack.c.b16 %v856, %v854
    %v883 = vpack.c.b16 %v859, %v857
    %v884 = vpack.c.b16 %v860, %v858
    %v885 = vpack.c.b16 %v863, %v861
    %v886 = vpack.c.b16 %v864, %v862
    %v887 = vpack.c.b16 %v867, %v865
    %v888 = vpack.c.b16 %v868, %v866
    %v889 = vpack.c.b16 %v871, %v869
    %v890 = vpack.c.b16 %v872, %v870
    %v891 = vpack.c.b16 %v875, %v873
    %v892 = vpack.c.b16 %v876, %v874
    %909 = vmatpush.bf16.msra.mxu0 %v891
    %910 = vmatpush.bf16.msra.mxu0 %v889
    %911 = vmatpush.bf16.msra.mxu0 %v887
    %912 = vmatpush.bf16.msra.mxu0 %v885
    %913 = vmatpush.bf16.msra.mxu0 %v883
    %914 = vmatpush.bf16.msra.mxu0 %v881
    %915 = vmatpush.bf16.msra.mxu0 %v879
    %916 = vmatpush.bf16.msra.mxu0 %v877
    %917 = vmatmul.bf16.gmra.mxu0 %v806
    %v918 = vpop.f32.mrf.mxu0
    %v919 = vadd.f32 %v825, %v918
    %v920 = vpop.f32.mrf.mxu0
    %921 = vdwg.mxu0
    %922 = vmatpush.bf16.msra.mxu0 %v892
    %923 = vmatpush.bf16.msra.mxu0 %v890
    %924 = vmatpush.bf16.msra.mxu0 %v888
    %925 = vmatpush.bf16.msra.mxu0 %v886
    %926 = vmatpush.bf16.msra.mxu0 %v884
    %927 = vmatpush.bf16.msra.mxu0 %v882
    %928 = vmatpush.bf16.msra.mxu0 %v880
    %929 = vmatpush.bf16.msra.mxu0 %v878
    %930 = vmatmul.bf16.gmra.mxu0 %v806
    %v931 = vpop.f32.mrf.mxu0
    %v932 = vadd.f32 %v826, %v931
    %v933 = vpop.f32.mrf.mxu0
    %934 = vdwg.mxu0
    %v935 = vpack.c.bf16 %v932, %v919
    %936 = vst [vmem:[#allocation18] sm:$0xff] %v935
    %v937 = vld [vmem:[#allocation5] sm:$0xff]
    %v938 = vmul.f32 %v932, 1.442695
    %v939 = vpow.pop %v938
    %v940 = vmul.f32 %v937, %v939
    %v941 = vadd.f32 %v940, %v919
    %v942 = vpack.c.bf16 %v941, %v941
    %v943 = vld [vmem:[#allocation13] sm:$0xf]
    %v944 = vld [vmem:[#allocation13 + $0x4] sm:$0xf]
    %v945 = vld [vmem:[#allocation13 + $0x8] sm:$0xf]
    %v946 = vld [vmem:[#allocation13 + $0xc] sm:$0xf]
    %v947 = vld [vmem:[#allocation13 + $0x10] sm:$0xf]
    %v948 = vld [vmem:[#allocation13 + $0x14] sm:$0xf]
    %v949 = vld [vmem:[#allocation13 + $0x18] sm:$0xf]
    %v950 = vld [vmem:[#allocation13 + $0x1c] sm:$0xf]
    %v951 = vld [vmem:[#allocation13 + $0x20] sm:$0xf]
    %v952 = vld [vmem:[#allocation13 + $0x24] sm:$0xf]
    %v953 = vld [vmem:[#allocation13 + $0x28] sm:$0xf]
    %v954 = vld [vmem:[#allocation13 + $0x2c] sm:$0xf]
    %v955 = vld [vmem:[#allocation13 + $0x30] sm:$0xf]
    %v956 = vld [vmem:[#allocation13 + $0x34] sm:$0xf]
    %v957 = vld [vmem:[#allocation13 + $0x38] sm:$0xf]
    %v958 = vld [vmem:[#allocation13 + $0x3c] sm:$0xf]
    %v959 = vld [vmem:[#allocation14] sm:$0x1]
    %v961 = vperm.slane %v959, 0
    %v979 = vunpack.c.l.b16 %v943
    %v980 = vunpack.c.l.b16 %v944
    %v981 = vunpack.c.l.b16 %v945
    %v982 = vunpack.c.l.b16 %v946
    %v983 = vunpack.c.l.b16 %v947
    %v984 = vunpack.c.l.b16 %v948
    %v985 = vunpack.c.l.b16 %v949
    %v986 = vunpack.c.l.b16 %v950
    %v987 = vunpack.c.l.b16 %v951
    %v988 = vunpack.c.l.b16 %v952
    %v989 = vunpack.c.l.b16 %v953
    %v990 = vunpack.c.l.b16 %v954
    %v991 = vunpack.c.l.b16 %v955
    %v992 = vunpack.c.l.b16 %v956
    %v993 = vunpack.c.l.b16 %v957
    %v994 = vunpack.c.l.b16 %v958
    %v995 = vpack.c.b16 %v980, %v979
    %v996 = vpack.c.b16 %v982, %v981
    %v997 = vpack.c.b16 %v984, %v983
    %v998 = vpack.c.b16 %v986, %v985
    %v999 = vpack.c.b16 %v988, %v987
    %v1000 = vpack.c.b16 %v990, %v989
    %v1001 = vpack.c.b16 %v992, %v991
    %v1002 = vpack.c.b16 %v994, %v993
    %1011 = vmatpush.bf16.msra.mxu0 %v1002
    %1012 = vmatpush.bf16.msra.mxu0 %v1001
    %1013 = vmatpush.bf16.msra.mxu0 %v1000
    %1014 = vmatpush.bf16.msra.mxu0 %v999
    %1015 = vmatpush.bf16.msra.mxu0 %v998
    %1016 = vmatpush.bf16.msra.mxu0 %v997
    %1017 = vmatpush.bf16.msra.mxu0 %v996
    %1018 = vmatpush.bf16.msra.mxu0 %v995
    %1019 = vmatmul.bf16.gmra.mxu0 %v942
    %v1020 = vpop.f32.mrf.mxu0
    %v1021 = vadd.f32 %v961, %v1020
    %v1022 = vpop.f32.mrf.mxu0
    %1023 = vdwg.mxu0
    %v1024 = vmax.f32 %v1021, 0.0
    %v1025 = vpack.c.bf16 %v1024, %v1024
    %v1026 = vld [vmem:[#allocation16] sm:$0xff]
    %v1027 = vld [vmem:[#allocation16 + $0x8] sm:$0xff]
    %v1028 = vld [vmem:[#allocation16 + $0x10] sm:$0xff]
    %v1029 = vld [vmem:[#allocation16 + $0x18] sm:$0xff]
    %v1030 = vld [vmem:[#allocation16 + $0x20] sm:$0xff]
    %v1031 = vld [vmem:[#allocation16 + $0x28] sm:$0xff]
    %v1032 = vld [vmem:[#allocation16 + $0x30] sm:$0xff]
    %v1033 = vld [vmem:[#allocation16 + $0x38] sm:$0xff]
    %v1034 = vld [vmem:[#allocation16 + $0x40] sm:$0xff]
    %v1035 = vld [vmem:[#allocation16 + $0x48] sm:$0xff]
    %v1036 = vld [vmem:[#allocation16 + $0x50] sm:$0xff]
    %v1037 = vld [vmem:[#allocation16 + $0x58] sm:$0xff]
    %v1038 = vld [vmem:[#allocation16 + $0x60] sm:$0xff]
    %v1039 = vld [vmem:[#allocation16 + $0x68] sm:$0xff]
    %v1040 = vld [vmem:[#allocation16 + $0x70] sm:$0xff]
    %v1041 = vld [vmem:[#allocation16 + $0x78] sm:$0xff]
    %v1042 = vld [vmem:[#allocation16 + $0x80] sm:$0xff]
    %v1043 = vld [vmem:[#allocation16 + $0x88] sm:$0xff]
    %v1044 = vld [vmem:[#allocation16 + $0x90] sm:$0xff]
    %v1045 = vld [vmem:[#allocation16 + $0x98] sm:$0xff]
    %v1046 = vld [vmem:[#allocation16 + $0xa0] sm:$0xff]
    %v1047 = vld [vmem:[#allocation16 + $0xa8] sm:$0xff]
    %v1048 = vld [vmem:[#allocation16 + $0xb0] sm:$0xff]
    %v1049 = vld [vmem:[#allocation16 + $0xb8] sm:$0xff]
    %v1050 = vld [vmem:[#allocation16 + $0xc0] sm:$0xff]
    %v1051 = vld [vmem:[#allocation16 + $0xc8] sm:$0xff]
    %v1052 = vld [vmem:[#allocation16 + $0xd0] sm:$0xff]
    %v1053 = vld [vmem:[#allocation16 + $0xd8] sm:$0xff]
    %v1054 = vld [vmem:[#allocation16 + $0xe0] sm:$0xff]
    %v1055 = vld [vmem:[#allocation16 + $0xe8] sm:$0xff]
    %v1056 = vld [vmem:[#allocation16 + $0xf0] sm:$0xff]
    %v1057 = vld [vmem:[#allocation16 + $0xf8] sm:$0xff]
    %v1058 = vld [vmem:[#allocation16 + $0x100] sm:$0xff]
    %v1059 = vld [vmem:[#allocation16 + $0x108] sm:$0xff]
    %v1060 = vld [vmem:[#allocation16 + $0x110] sm:$0xff]
    %v1061 = vld [vmem:[#allocation16 + $0x118] sm:$0xff]
    %v1062 = vld [vmem:[#allocation16 + $0x120] sm:$0xff]
    %v1063 = vld [vmem:[#allocation16 + $0x128] sm:$0xff]
    %v1064 = vld [vmem:[#allocation16 + $0x130] sm:$0xff]
    %v1065 = vld [vmem:[#allocation16 + $0x138] sm:$0xff]
    %v1066 = vld [vmem:[#allocation16 + $0x140] sm:$0xff]
    %v1067 = vld [vmem:[#allocation16 + $0x148] sm:$0xff]
    %v1068 = vld [vmem:[#allocation16 + $0x150] sm:$0xff]
    %v1069 = vld [vmem:[#allocation16 + $0x158] sm:$0xff]
    %v1070 = vld [vmem:[#allocation16 + $0x160] sm:$0xff]
    %v1071 = vld [vmem:[#allocation16 + $0x168] sm:$0xff]
    %v1072 = vld [vmem:[#allocation16 + $0x170] sm:$0xff]
    %v1073 = vld [vmem:[#allocation16 + $0x178] sm:$0xff]
    %v1074 = vld [vmem:[#allocation16 + $0x180] sm:$0xff]
    %v1075 = vld [vmem:[#allocation16 + $0x188] sm:$0xff]
    %v1076 = vld [vmem:[#allocation16 + $0x190] sm:$0xff]
    %v1077 = vld [vmem:[#allocation16 + $0x198] sm:$0xff]
    %v1078 = vld [vmem:[#allocation16 + $0x1a0] sm:$0xff]
    %v1079 = vld [vmem:[#allocation16 + $0x1a8] sm:$0xff]
    %v1080 = vld [vmem:[#allocation16 + $0x1b0] sm:$0xff]
    %v1081 = vld [vmem:[#allocation16 + $0x1b8] sm:$0xff]
    %v1082 = vld [vmem:[#allocation16 + $0x1c0] sm:$0xff]
    %v1083 = vld [vmem:[#allocation16 + $0x1c8] sm:$0xff]
    %v1084 = vld [vmem:[#allocation16 + $0x1d0] sm:$0xff]
    %v1085 = vld [vmem:[#allocation16 + $0x1d8] sm:$0xff]
    %v1086 = vld [vmem:[#allocation16 + $0x1e0] sm:$0xff]
    %v1087 = vld [vmem:[#allocation16 + $0x1e8] sm:$0xff]
    %v1088 = vld [vmem:[#allocation16 + $0x1f0] sm:$0xff]
    %v1089 = vld [vmem:[#allocation16 + $0x1f8] sm:$0xff]
    %v1090 = vld [vmem:[%s9] sm:$0xff]
    %v1092 = vperm.slane %v1090, 0
    %v1093 = vperm.slane %v1090, 1
    %v1094 = vperm.slane %v1090, 2
    %v1095 = vperm.slane %v1090, 3
    %v1096 = vperm.slane %v1090, 4
    %v1097 = vperm.slane %v1090, 5
    %v1098 = vperm.slane %v1090, 6
    %v1099 = vperm.slane %v1090, 7
    %v1172 = vunpack.c.l.b16 %v1026
    %v1173 = vunpack.c.h.b16 %v1026
    %v1174 = vunpack.c.l.b16 %v1027
    %v1175 = vunpack.c.h.b16 %v1027
    %v1176 = vunpack.c.l.b16 %v1028
    %v1177 = vunpack.c.h.b16 %v1028
    %v1178 = vunpack.c.l.b16 %v1029
    %v1179 = vunpack.c.h.b16 %v1029
    %v1180 = vunpack.c.l.b16 %v1030
    %v1181 = vunpack.c.h.b16 %v1030
    %v1182 = vunpack.c.l.b16 %v1031
    %v1183 = vunpack.c.h.b16 %v1031
    %v1184 = vunpack.c.l.b16 %v1032
    %v1185 = vunpack.c.h.b16 %v1032
    %v1186 = vunpack.c.l.b16 %v1033
    %v1187 = vunpack.c.h.b16 %v1033
    %v1188 = vunpack.c.l.b16 %v1034
    %v1189 = vunpack.c.h.b16 %v1034
    %v1190 = vunpack.c.l.b16 %v1035
    %v1191 = vunpack.c.h.b16 %v1035
    %v1192 = vunpack.c.l.b16 %v1036
    %v1193 = vunpack.c.h.b16 %v1036
    %v1194 = vunpack.c.l.b16 %v1037
    %v1195 = vunpack.c.h.b16 %v1037
    %v1196 = vunpack.c.l.b16 %v1038
    %v1197 = vunpack.c.h.b16 %v1038
    %v1198 = vunpack.c.l.b16 %v1039
    %v1199 = vunpack.c.h.b16 %v1039
    %v1200 = vunpack.c.l.b16 %v1040
    %v1201 = vunpack.c.h.b16 %v1040
    %v1202 = vunpack.c.l.b16 %v1041
    %v1203 = vunpack.c.h.b16 %v1041
    %v1204 = vunpack.c.l.b16 %v1042
    %v1205 = vunpack.c.h.b16 %v1042
    %v1206 = vunpack.c.l.b16 %v1043
    %v1207 = vunpack.c.h.b16 %v1043
    %v1208 = vunpack.c.l.b16 %v1044
    %v1209 = vunpack.c.h.b16 %v1044
    %v1210 = vunpack.c.l.b16 %v1045
    %v1211 = vunpack.c.h.b16 %v1045
    %v1212 = vunpack.c.l.b16 %v1046
    %v1213 = vunpack.c.h.b16 %v1046
    %v1214 = vunpack.c.l.b16 %v1047
    %v1215 = vunpack.c.h.b16 %v1047
    %v1216 = vunpack.c.l.b16 %v1048
    %v1217 = vunpack.c.h.b16 %v1048
    %v1218 = vunpack.c.l.b16 %v1049
    %v1219 = vunpack.c.h.b16 %v1049
    %v1220 = vunpack.c.l.b16 %v1050
    %v1221 = vunpack.c.h.b16 %v1050
    %v1222 = vunpack.c.l.b16 %v1051
    %v1223 = vunpack.c.h.b16 %v1051
    %v1224 = vunpack.c.l.b16 %v1052
    %v1225 = vunpack.c.h.b16 %v1052
    %v1226 = vunpack.c.l.b16 %v1053
    %v1227 = vunpack.c.h.b16 %v1053
    %v1228 = vunpack.c.l.b16 %v1054
    %v1229 = vunpack.c.h.b16 %v1054
    %v1230 = vunpack.c.l.b16 %v1055
    %v1231 = vunpack.c.h.b16 %v1055
    %v1232 = vunpack.c.l.b16 %v1056
    %v1233 = vunpack.c.h.b16 %v1056
    %v1234 = vunpack.c.l.b16 %v1057
    %v1235 = vunpack.c.h.b16 %v1057
    %v1236 = vunpack.c.l.b16 %v1058
    %v1237 = vunpack.c.h.b16 %v1058
    %v1238 = vunpack.c.l.b16 %v1059
    %v1239 = vunpack.c.h.b16 %v1059
    %v1240 = vunpack.c.l.b16 %v1060
    %v1241 = vunpack.c.h.b16 %v1060
    %v1242 = vunpack.c.l.b16 %v1061
    %v1243 = vunpack.c.h.b16 %v1061
    %v1244 = vunpack.c.l.b16 %v1062
    %v1245 = vunpack.c.h.b16 %v1062
    %v1246 = vunpack.c.l.b16 %v1063
    %v1247 = vunpack.c.h.b16 %v1063
    %v1248 = vunpack.c.l.b16 %v1064
    %v1249 = vunpack.c.h.b16 %v1064
    %v1250 = vunpack.c.l.b16 %v1065
    %v1251 = vunpack.c.h.b16 %v1065
    %v1252 = vunpack.c.l.b16 %v1066
    %v1253 = vunpack.c.h.b16 %v1066
    %v1254 = vunpack.c.l.b16 %v1067
    %v1255 = vunpack.c.h.b16 %v1067
    %v1256 = vunpack.c.l.b16 %v1068
    %v1257 = vunpack.c.h.b16 %v1068
    %v1258 = vunpack.c.l.b16 %v1069
    %v1259 = vunpack.c.h.b16 %v1069
    %v1260 = vunpack.c.l.b16 %v1070
    %v1261 = vunpack.c.h.b16 %v1070
    %v1262 = vunpack.c.l.b16 %v1071
    %v1263 = vunpack.c.h.b16 %v1071
    %v1264 = vunpack.c.l.b16 %v1072
    %v1265 = vunpack.c.h.b16 %v1072
    %v1266 = vunpack.c.l.b16 %v1073
    %v1267 = vunpack.c.h.b16 %v1073
    %v1268 = vunpack.c.l.b16 %v1074
    %v1269 = vunpack.c.h.b16 %v1074
    %v1270 = vunpack.c.l.b16 %v1075
    %v1271 = vunpack.c.h.b16 %v1075
    %v1272 = vunpack.c.l.b16 %v1076
    %v1273 = vunpack.c.h.b16 %v1076
    %v1274 = vunpack.c.l.b16 %v1077
    %v1275 = vunpack.c.h.b16 %v1077
    %v1276 = vunpack.c.l.b16 %v1078
    %v1277 = vunpack.c.h.b16 %v1078
    %v1278 = vunpack.c.l.b16 %v1079
    %v1279 = vunpack.c.h.b16 %v1079
    %v1280 = vunpack.c.l.b16 %v1080
    %v1281 = vunpack.c.h.b16 %v1080
    %v1282 = vunpack.c.l.b16 %v1081
    %v1283 = vunpack.c.h.b16 %v1081
    %v1284 = vunpack.c.l.b16 %v1082
    %v1285 = vunpack.c.h.b16 %v1082
    %v1286 = vunpack.c.l.b16 %v1083
    %v1287 = vunpack.c.h.b16 %v1083
    %v1288 = vunpack.c.l.b16 %v1084
    %v1289 = vunpack.c.h.b16 %v1084
    %v1290 = vunpack.c.l.b16 %v1085
    %v1291 = vunpack.c.h.b16 %v1085
    %v1292 = vunpack.c.l.b16 %v1086
    %v1293 = vunpack.c.h.b16 %v1086
    %v1294 = vunpack.c.l.b16 %v1087
    %v1295 = vunpack.c.h.b16 %v1087
    %v1296 = vunpack.c.l.b16 %v1088
    %v1297 = vunpack.c.h.b16 %v1088
    %v1298 = vunpack.c.l.b16 %v1089
    %v1299 = vunpack.c.h.b16 %v1089
    %v1300 = vpack.c.b16 %v1180, %v1172
    %v1301 = vpack.c.b16 %v1181, %v1173
    %v1302 = vpack.c.b16 %v1182, %v1174
    %v1303 = vpack.c.b16 %v1183, %v1175
    %v1304 = vpack.c.b16 %v1184, %v1176
    %v1305 = vpack.c.b16 %v1185, %v1177
    %v1306 = vpack.c.b16 %v1186, %v1178
    %v1307 = vpack.c.b16 %v1187, %v1179
    %v1308 = vpack.c.b16 %v1196, %v1188
    %v1309 = vpack.c.b16 %v1197, %v1189
    %v1310 = vpack.c.b16 %v1198, %v1190
    %v1311 = vpack.c.b16 %v1199, %v1191
    %v1312 = vpack.c.b16 %v1200, %v1192
    %v1313 = vpack.c.b16 %v1201, %v1193
    %v1314 = vpack.c.b16 %v1202, %v1194
    %v1315 = vpack.c.b16 %v1203, %v1195
    %v1316 = vpack.c.b16 %v1212, %v1204
    %v1317 = vpack.c.b16 %v1213, %v1205
    %v1318 = vpack.c.b16 %v1214, %v1206
    %v1319 = vpack.c.b16 %v1215, %v1207
    %v1320 = vpack.c.b16 %v1216, %v1208
    %v1321 = vpack.c.b16 %v1217, %v1209
    %v1322 = vpack.c.b16 %v1218, %v1210
    %v1323 = vpack.c.b16 %v1219, %v1211
    %v1324 = vpack.c.b16 %v1228, %v1220
    %v1325 = vpack.c.b16 %v1229, %v1221
    %v1326 = vpack.c.b16 %v1230, %v1222
    %v1327 = vpack.c.b16 %v1231, %v1223
    %v1328 = vpack.c.b16 %v1232, %v1224
    %v1329 = vpack.c.b16 %v1233, %v1225
    %v1330 = vpack.c.b16 %v1234, %v1226
    %v1331 = vpack.c.b16 %v1235, %v1227
    %v1332 = vpack.c.b16 %v1244, %v1236
    %v1333 = vpack.c.b16 %v1245, %v1237
    %v1334 = vpack.c.b16 %v1246, %v1238
    %v1335 = vpack.c.b16 %v1247, %v1239
    %v1336 = vpack.c.b16 %v1248, %v1240
    %v1337 = vpack.c.b16 %v1249, %v1241
    %v1338 = vpack.c.b16 %v1250, %v1242
    %v1339 = vpack.c.b16 %v1251, %v1243
    %v1340 = vpack.c.b16 %v1260, %v1252
    %v1341 = vpack.c.b16 %v1261, %v1253
    %v1342 = vpack.c.b16 %v1262, %v1254
    %v1343 = vpack.c.b16 %v1263, %v1255
    %v1344 = vpack.c.b16 %v1264, %v1256
    %v1345 = vpack.c.b16 %v1265, %v1257
    %v1346 = vpack.c.b16 %v1266, %v1258
    %v1347 = vpack.c.b16 %v1267, %v1259
    %v1348 = vpack.c.b16 %v1276, %v1268
    %v1349 = vpack.c.b16 %v1277, %v1269
    %v1350 = vpack.c.b16 %v1278, %v1270
    %v1351 = vpack.c.b16 %v1279, %v1271
    %v1352 = vpack.c.b16 %v1280, %v1272
    %v1353 = vpack.c.b16 %v1281, %v1273
    %v1354 = vpack.c.b16 %v1282, %v1274
    %v1355 = vpack.c.b16 %v1283, %v1275
    %v1356 = vpack.c.b16 %v1292, %v1284
    %v1357 = vpack.c.b16 %v1293, %v1285
    %v1358 = vpack.c.b16 %v1294, %v1286
    %v1359 = vpack.c.b16 %v1295, %v1287
    %v1360 = vpack.c.b16 %v1296, %v1288
    %v1361 = vpack.c.b16 %v1297, %v1289
    %v1362 = vpack.c.b16 %v1298, %v1290
    %v1363 = vpack.c.b16 %v1299, %v1291
    %1428 = vmatpush.bf16.msra.mxu0 %v1356
    %1429 = vmatpush.bf16.msra.mxu0 %v1348
    %1430 = vmatpush.bf16.msra.mxu0 %v1340
    %1431 = vmatpush.bf16.msra.mxu0 %v1332
    %1432 = vmatpush.bf16.msra.mxu0 %v1324
    %1433 = vmatpush.bf16.msra.mxu0 %v1316
    %1434 = vmatpush.bf16.msra.mxu0 %v1308
    %1435 = vmatpush.bf16.msra.mxu0 %v1300
    %1436 = vmatmul.bf16.gmra.mxu0 %v1025
    %v1437 = vpop.f32.mrf.mxu0
    %v1438 = vadd.f32 %v1092, %v1437
    %v1439 = vpop.f32.mrf.mxu0
    %1440 = vdwg.mxu0
    %1441 = vmatpush.bf16.msra.mxu0 %v1357
    %1442 = vmatpush.bf16.msra.mxu0 %v1349
    %1443 = vmatpush.bf16.msra.mxu0 %v1341
    %1444 = vmatpush.bf16.msra.mxu0 %v1333
    %1445 = vmatpush.bf16.msra.mxu0 %v1325
    %1446 = vmatpush.bf16.msra.mxu0 %v1317
    %1447 = vmatpush.bf16.msra.mxu0 %v1309
    %1448 = vmatpush.bf16.msra.mxu0 %v1301
    %1449 = vmatmul.bf16.gmra.mxu0 %v1025
    %v1450 = vpop.f32.mrf.mxu0
    %v1451 = vadd.f32 %v1093, %v1450
    %v1452 = vpop.f32.mrf.mxu0
    %1453 = vdwg.mxu0
    %1454 = vmatpush.bf16.msra.mxu0 %v1358
    %1455 = vmatpush.bf16.msra.mxu0 %v1350
    %1456 = vmatpush.bf16.msra.mxu0 %v1342
    %1457 = vmatpush.bf16.msra.mxu0 %v1334
    %1458 = vmatpush.bf16.msra.mxu0 %v1326
    %1459 = vmatpush.bf16.msra.mxu0 %v1318
    %1460 = vmatpush.bf16.msra.mxu0 %v1310
    %1461 = vmatpush.bf16.msra.mxu0 %v1302
    %1462 = vmatmul.bf16.gmra.mxu0 %v1025
    %v1463 = vpop.f32.mrf.mxu0
    %v1464 = vadd.f32 %v1094, %v1463
    %v1465 = vpop.f32.mrf.mxu0
    %1466 = vdwg.mxu0
    %1467 = vmatpush.bf16.msra.mxu0 %v1359
    %1468 = vmatpush.bf16.msra.mxu0 %v1351
    %1469 = vmatpush.bf16.msra.mxu0 %v1343
    %1470 = vmatpush.bf16.msra.mxu0 %v1335
    %1471 = vmatpush.bf16.msra.mxu0 %v1327
    %1472 = vmatpush.bf16.msra.mxu0 %v1319
    %1473 = vmatpush.bf16.msra.mxu0 %v1311
    %1474 = vmatpush.bf16.msra.mxu0 %v1303
    %1475 = vmatmul.bf16.gmra.mxu0 %v1025
    %v1476 = vpop.f32.mrf.mxu0
    %v1477 = vadd.f32 %v1095, %v1476
    %v1478 = vpop.f32.mrf.mxu0
    %1479 = vdwg.mxu0
    %1480 = vmatpush.bf16.msra.mxu0 %v1360
    %1481 = vmatpush.bf16.msra.mxu0 %v1352
    %1482 = vmatpush.bf16.msra.mxu0 %v1344
    %1483 = vmatpush.bf16.msra.mxu0 %v1336
    %1484 = vmatpush.bf16.msra.mxu0 %v1328
    %1485 = vmatpush.bf16.msra.mxu0 %v1320
    %1486 = vmatpush.bf16.msra.mxu0 %v1312
    %1487 = vmatpush.bf16.msra.mxu0 %v1304
    %1488 = vmatmul.bf16.gmra.mxu0 %v1025
    %v1489 = vpop.f32.mrf.mxu0
    %v1490 = vadd.f32 %v1096, %v1489
    %v1491 = vpop.f32.mrf.mxu0
    %1492 = vdwg.mxu0
    %1493 = vmatpush.bf16.msra.mxu0 %v1361
    %1494 = vmatpush.bf16.msra.mxu0 %v1353
    %1495 = vmatpush.bf16.msra.mxu0 %v1345
    %1496 = vmatpush.bf16.msra.mxu0 %v1337
    %1497 = vmatpush.bf16.msra.mxu0 %v1329
    %1498 = vmatpush.bf16.msra.mxu0 %v1321
    %1499 = vmatpush.bf16.msra.mxu0 %v1313
    %1500 = vmatpush.bf16.msra.mxu0 %v1305
    %1501 = vmatmul.bf16.gmra.mxu0 %v1025
    %v1502 = vpop.f32.mrf.mxu0
    %v1503 = vadd.f32 %v1097, %v1502
    %v1504 = vpop.f32.mrf.mxu0
    %1505 = vdwg.mxu0
    %1506 = vmatpush.bf16.msra.mxu0 %v1362
    %1507 = vmatpush.bf16.msra.mxu0 %v1354
    %1508 = vmatpush.bf16.msra.mxu0 %v1346
    %1509 = vmatpush.bf16.msra.mxu0 %v1338
    %1510 = vmatpush.bf16.msra.mxu0 %v1330
    %1511 = vmatpush.bf16.msra.mxu0 %v1322
    %1512 = vmatpush.bf16.msra.mxu0 %v1314
    %1513 = vmatpush.bf16.msra.mxu0 %v1306
    %1514 = vmatmul.bf16.gmra.mxu0 %v1025
    %v1515 = vpop.f32.mrf.mxu0
    %v1516 = vadd.f32 %v1098, %v1515
    %v1517 = vpop.f32.mrf.mxu0
    %1518 = vdwg.mxu0
    %1519 = vmatpush.bf16.msra.mxu0 %v1363
    %1520 = vmatpush.bf16.msra.mxu0 %v1355
    %1521 = vmatpush.bf16.msra.mxu0 %v1347
    %1522 = vmatpush.bf16.msra.mxu0 %v1339
    %1523 = vmatpush.bf16.msra.mxu0 %v1331
    %1524 = vmatpush.bf16.msra.mxu0 %v1323
    %1525 = vmatpush.bf16.msra.mxu0 %v1315
    %1526 = vmatpush.bf16.msra.mxu0 %v1307
    %1527 = vmatmul.bf16.gmra.mxu0 %v1025
    %v1528 = vpop.f32.mrf.mxu0
    %v1529 = vadd.f32 %v1099, %v1528
    %v1530 = vpop.f32.mrf.mxu0
    %1531 = vdwg.mxu0
    %v1532 = vmul.f32 %v1438, 0.5
    %v1533 = vmul.f32 %v1451, 0.5
    %v1534 = vmul.f32 %v1464, 0.5
    %v1535 = vmul.f32 %v1477, 0.5
    %v1536 = vmul.f32 %v1490, 0.5
    %v1537 = vmul.f32 %v1503, 0.5
    %v1538 = vmul.f32 %v1516, 0.5
    %v1539 = vmul.f32 %v1529, 0.5
    %v1540 = vtanh.pop %v1532
    %v1541 = vtanh.pop %v1533
    %v1542 = vtanh.pop %v1534
    %v1543 = vtanh.pop %v1535
    %v1544 = vtanh.pop %v1536
    %v1545 = vtanh.pop %v1537
    %v1546 = vtanh.pop %v1538
    %v1547 = vtanh.pop %v1539
    %v1548 = vmul.f32 %v1540, 0.5
    %v1549 = vmul.f32 %v1541, 0.5
    %v1550 = vmul.f32 %v1542, 0.5
    %v1551 = vmul.f32 %v1543, 0.5
    %v1552 = vmul.f32 %v1544, 0.5
    %v1553 = vmul.f32 %v1545, 0.5
    %v1554 = vmul.f32 %v1546, 0.5
    %v1555 = vmul.f32 %v1547, 0.5
    %v1556 = vadd.f32 %v1548, 0.5
    %v1557 = vadd.f32 %v1549, 0.5
    %v1558 = vadd.f32 %v1550, 0.5
    %v1559 = vadd.f32 %v1551, 0.5
    %v1560 = vadd.f32 %v1552, 0.5
    %v1561 = vadd.f32 %v1553, 0.5
    %v1562 = vadd.f32 %v1554, 0.5
    %v1563 = vadd.f32 %v1555, 0.5
    %v1564 = vpack.c.bf16 %v1557, %v1556
    %v1565 = vpack.c.bf16 %v1559, %v1558
    %v1566 = vpack.c.bf16 %v1561, %v1560
    %v1567 = vpack.c.bf16 %v1563, %v1562
    %1568 = vst [vmem:[#allocation17] sm:$0xff] %v1564
    %1569 = vst [vmem:[#allocation17 + $0x8] sm:$0xff] %v1565
    %1570 = vst [vmem:[#allocation17 + $0x10] sm:$0xff] %v1566
    %1571 = vst [vmem:[#allocation17 + $0x18] sm:$0xff] %v1567
    // Predicated region
    $region78: #{tpu_custom_call.1} parent=1 // pred_check
      _
    $region79: #{tpu_custom_call.1} parent=1 // pred_check_branch
      %1573 = sbr.rel (0) target = $region81
    $region80: #{tpu_custom_call.1} parent=1 // pred_region
      %1575 = vsyncadd [#allocation4], 0
      %s1577 = sshll.u32 [#allocation17], 4
      %s1578 = int_to_ptr.vmem [resolvable:$true] %s1577
      %s1579 = sshll.u32 %s10, 4
      %s1580 = int_to_ptr.hbm [resolvable:$true] %s1579
      %1582 = dma.vmem_to_hbm [thread:$0]  %s1578, 512, %s1580, [#allocation4]
    $region81: #{tpu_custom_call.1} parent=1 // pred_fallthru
      _
    // Predicated region
    $region82: #{tpu_custom_call.1} parent=1 // pred_check
      _
    $region83: #{tpu_custom_call.1} parent=1 // pred_check_branch
      %1584 = sbr.rel (0) target = $region85
    $region84: #{tpu_custom_call.1} parent=1 // pred_region
      %1586 = vsyncadd [#allocation19], 0
      %s1588 = sshll.u32 [#allocation18], 4
      %s1589 = int_to_ptr.vmem [resolvable:$true] %s1588
      %s1590 = sshll.u32 %s11, 4
      %s1591 = int_to_ptr.hbm [resolvable:$true] %s1590
      %1593 = dma.vmem_to_hbm [thread:$0]  %s1589, 128, %s1591, [#allocation19]
    $region85: #{tpu_custom_call.1} parent=1 // pred_fallthru
      _
    // Predicated region
    $region86: #{tpu_custom_call.1} parent=1 // pred_check
      _
    $region87: #{tpu_custom_call.1} parent=1 // pred_check_branch
      %1595 = sbr.rel (0) target = $region89
    $region88: #{tpu_custom_call.1} parent=1 // pred_region
      %1597 = dma.done [#allocation4], 512
    $region89: #{tpu_custom_call.1} parent=1 // pred_fallthru
      _
    // Predicated region
    $region90: #{tpu_custom_call.1} parent=1 // pred_check
      _
    $region91: #{tpu_custom_call.1} parent=1 // pred_check_branch
      %1599 = sbr.rel (0) target = $region93
    $region92: #{tpu_custom_call.1} parent=1 // pred_region
      %1601 = dma.done [#allocation19], 128
    $region93: #{tpu_custom_call.1} parent=1 // pred_fallthru
      _
    %1602 = vsyncpa [#allocation3], 1
    %1603 = vsyncpa [#allocation6], 1
    %1604 = vsyncpa [#allocation9], 1
    %1605 = vsyncpa [#allocation12], 1
    %1606 = vsyncpa [#allocation15], 1
    %1607 = vsyncpa [#allocation4], 1
    %1608 = vsyncpa [#allocation19], 1

// kernel: tpu_custom_call.1
$region0: #{tpu_custom_call.1}
  #allocation0 [shape = 'u32[]', space=smem, size = 0x4, offset = 0x4, fixed_abs, tag = 'smem constant byte address 0x4 - core index']
  #allocation1 [shape = 'u32[72,128]{1,0:T(1,128)}', space=vmem, size = 0x9000, scoped, tag = 'internal scratch']
  %s0 = inlined_call_operand.hbm [shape: f32[8,1024], index: 0, kind: input, shape index: {}]
  %s1 = inlined_call_operand.hbm [shape: f32[8,128], index: 1, kind: input, shape index: {}]
  %s2 = inlined_call_operand.hbm [shape: bf16[1024,128], index: 2, kind: input, shape index: {}]
  %s3 = inlined_call_operand.hbm [shape: f32[1,128], index: 3, kind: input, shape index: {}]
  %s4 = inlined_call_operand.hbm [shape: bf16[128,256], index: 4, kind: input, shape index: {}]
  %s5 = inlined_call_operand.hbm [shape: f32[1,256], index: 5, kind: input, shape index: {}]
  %s6 = inlined_call_operand.hbm [shape: bf16[128,128], index: 6, kind: input, shape index: {}]
  %s7 = inlined_call_operand.hbm [shape: f32[1,128], index: 7, kind: input, shape index: {}]
  %s8 = inlined_call_operand.hbm [shape: bf16[128,1024], index: 8, kind: input, shape index: {}]
  %s9 = inlined_call_operand.vmem [shape: f32[1,1024], index: 9, kind: input, shape index: {}]
  %s10 = inlined_call_operand.hbm [shape: bf16[8,1024], index: 10, kind: output, shape index: {0}]
  %s11 = inlined_call_operand.hbm [shape: bf16[8,256], index: 11, kind: output, shape index: {1}]
  %12 = xla_tuple %s10, %s11
  %s13 = sld [smem:[#allocation0]]
  $region94: #{tpu_custom_call.1} parent=0
    _
  %s15 = ssub.s32 1, %s13
  %s16 = scalar_select 0, %s15, %s13
  $region1: #{tpu_custom_call.1} parent=0
    #allocation2 [shape = 'u8[32768]{0}', space=vmem, size = 0x8000, scoped, tag = 'input window, operand 0, single buffered']
    #allocation3 [shape = 's32[1]{0}', space=sflag, size = 0x4, scoped, tag = 'scoped memory for tpu_custom_call.1']
    #allocation4 [shape = 's32[1]{0}', space=sflag, size = 0x4, scoped, tag = 'scoped memory for tpu_custom_call.1']
    #allocation5 [shape = 'u8[4096]{0}', space=vmem, size = 0x1000, scoped, tag = 'input window, operand 1, single buffered']
    #allocation6 [shape = 's32[1]{0}', space=sflag, size = 0x4, scoped, tag = 'scoped memory for tpu_custom_call.1']
    #allocation7 [shape = 'u8[262144]{0}', space=vmem, size = 0x40000, scoped, tag = 'input window, operand 2, single buffered']
    #allocation8 [shape = 'u8[512]{0}', space=vmem, size = 0x400, scoped, tag = 'input window, operand 3, single buffered']
    #allocation9 [shape = 's32[1]{0}', space=sflag, size = 0x4, scoped, tag = 'scoped memory for tpu_custom_call.1']
    #allocation10 [shape = 'u8[65536]{0}', space=vmem, size = 0x10000, scoped, tag = 'input window, operand 4, single buffered']
    #allocation11 [shape = 'u8[1024]{0}', space=vmem, size = 0x400, scoped, tag = 'input window, operand 5, single buffered']
    #allocation12 [shape = 's32[1]{0}', space=sflag, size = 0x4, scoped, tag = 'scoped memory for tpu_custom_call.1']
    #allocation13 [shape = 'u8[32768]{0}', space=vmem, size = 0x8000, scoped, tag = 'input window, operand 6, single buffered']
    #allocation14 [shape = 'u8[512]{0}', space=vmem, size = 0x400, scoped, tag = 'input window, operand 7, single buffered']
    #allocation15 [shape = 's32[1]{0}', space=sflag, size = 0x4, scoped, tag = 'scoped memory for tpu_custom_call.1']
    #allocation16 [shape = 'u8[262144]{0}', space=vmem, size = 0x40000, scoped, tag = 'input window, operand 8, single buffered']
    #allocation17 [shape = 'u8[16384]{0}', space=vmem, size = 0x4000, scoped, tag = 'output window, operand 0, single buffered']
    #allocation18 [shape = 'u8[4096]{0}', space=vmem, size = 0x1000, scoped, tag = 'output window, operand 1, single buffered']
    #allocation19 [shape = 's32[1]{0}', space=sflag, size = 0x4, scoped, tag = 'scoped memory for tpu_custom_call.1']
    %17 = vsyncpa [#allocation3], 0
    %18 = vsyncpa [#allocation6], 0
    %19 = vsyncpa [#allocation9], 0
    %20 = vsyncpa [#allocation12], 0
    %21 = vsyncpa [#allocation15], 0
    %22 = vsyncpa [#allocation4], 0
    %23 = vsyncpa [#allocation19], 0
    // Predicated region
    $region2: #{tpu_custom_call.1} parent=1 // pred_check
      _
    $region3: #{tpu_custom_call.1} parent=1 // pred_check_branch
      %25 = sbr.rel (0) target = $region5
    $region4: #{tpu_custom_call.1} parent=1 // pred_region
      %27 = vsyncadd [#allocation3], 0
      %s29 = sshll.u32 %s0, 4
      %s30 = int_to_ptr.hbm [resolvable:$true] %s29
      %s31 = sshll.u32 [#allocation2], 4
      %s32 = int_to_ptr.vmem [resolvable:$true] %s31
      %34 = dma.hbm_to_vmem [thread:$0]  %s30, 1024, %s32, [#allocation3]
    $region5: #{tpu_custom_call.1} parent=1 // pred_fallthru
      _
    // Predicated region
    $region6: #{tpu_custom_call.1} parent=1 // pred_check
      _
    $region7: #{tpu_custom_call.1} parent=1 // pred_check_branch
      %36 = sbr.rel (0) target = $region9
    $region8: #{tpu_custom_call.1} parent=1 // pred_region
      %38 = vsyncadd [#allocation6], 0
      %s40 = sshll.u32 %s1, 4
      %s41 = int_to_ptr.hbm [resolvable:$true] %s40
      %s42 = sshll.u32 [#allocation5], 4
      %s43 = int_to_ptr.vmem [resolvable:$true] %s42
      %45 = dma.hbm_to_vmem [thread:$0]  %s41, 128, %s43, [#allocation6]
    $region9: #{tpu_custom_call.1} parent=1 // pred_fallthru
      _
    // Predicated region
    $region10: #{tpu_custom_call.1} parent=1 // pred_check
      _
    $region11: #{tpu_custom_call.1} parent=1 // pred_check_branch
      %47 = sbr.rel (0) target = $region13
    $region12: #{tpu_custom_call.1} parent=1 // pred_region
      %49 = vsyncadd [#allocation6], 0
      %s50 = sshll.u32 %s2, 4
      %s51 = int_to_ptr.hbm [resolvable:$true] %s50
      %s52 = sshll.u32 [#allocation7], 4
      %s53 = int_to_ptr.vmem [resolvable:$true] %s52
      %58 = dma.hbm_to_vmem [thread:$0]  %s51, 8192, %s53, [#allocation6], 64, 64, 4
    $region13: #{tpu_custom_call.1} parent=1 // pred_fallthru
      _
    // Predicated region
    $region14: #{tpu_custom_call.1} parent=1 // pred_check
      _
    $region15: #{tpu_custom_call.1} parent=1 // pred_check_branch
      %60 = sbr.rel (0) target = $region17
    $region16: #{tpu_custom_call.1} parent=1 // pred_region
      %62 = vsyncadd [#allocation9], 0
      %s64 = sshll.u32 %s3, 4
      %s65 = int_to_ptr.hbm [resolvable:$true] %s64
      %s66 = sshll.u32 [#allocation8], 4
      %s67 = int_to_ptr.vmem [resolvable:$true] %s66
      %69 = dma.hbm_to_vmem [thread:$0]  %s65, 16, %s67, [#allocation9]
    $region17: #{tpu_custom_call.1} parent=1 // pred_fallthru
      _
    // Predicated region
    $region18: #{tpu_custom_call.1} parent=1 // pred_check
      _
    $region19: #{tpu_custom_call.1} parent=1 // pred_check_branch
      %71 = sbr.rel (0) target = $region21
    $region20: #{tpu_custom_call.1} parent=1 // pred_region
      %73 = vsyncadd [#allocation9], 0
      %s74 = sshll.u32 %s4, 4
      %s75 = int_to_ptr.hbm [resolvable:$true] %s74
      %s76 = sshll.u32 [#allocation10], 4
      %s77 = int_to_ptr.vmem [resolvable:$true] %s76
      %82 = dma.hbm_to_vmem [thread:$0]  %s75, 2048, %s77, [#allocation9], 128, 128, 8
    $region21: #{tpu_custom_call.1} parent=1 // pred_fallthru
      _
    // Predicated region
    $region22: #{tpu_custom_call.1} parent=1 // pred_check
      _
    $region23: #{tpu_custom_call.1} parent=1 // pred_check_branch
      %84 = sbr.rel (0) target = $region25
    $region24: #{tpu_custom_call.1} parent=1 // pred_region
      %86 = vsyncadd [#allocation12], 0
      %s88 = sshll.u32 %s5, 4
      %s89 = int_to_ptr.hbm [resolvable:$true] %s88
      %s90 = sshll.u32 [#allocation11], 4
      %s91 = int_to_ptr.vmem [resolvable:$true] %s90
      %93 = dma.hbm_to_vmem [thread:$0]  %s89, 32, %s91, [#allocation12]
    $region25: #{tpu_custom_call.1} parent=1 // pred_fallthru
      _
    // Predicated region
    $region26: #{tpu_custom_call.1} parent=1 // pred_check
      _
    $region27: #{tpu_custom_call.1} parent=1 // pred_check_branch
      %95 = sbr.rel (0) target = $region29
    $region28: #{tpu_custom_call.1} parent=1 // pred_region
      %97 = vsyncadd [#allocation12], 0
      %s98 = sshll.u32 %s6, 4
      %s99 = int_to_ptr.hbm [resolvable:$true] %s98
      %s100 = sshll.u32 [#allocation13], 4
      %s101 = int_to_ptr.vmem [resolvable:$true] %s100
      %106 = dma.hbm_to_vmem [thread:$0]  %s99, 1024, %s101, [#allocation12], 64, 64, 4
    $region29: #{tpu_custom_call.1} parent=1 // pred_fallthru
      _
    // Predicated region
    $region30: #{tpu_custom_call.1} parent=1 // pred_check
      _
    $region31: #{tpu_custom_call.1} parent=1 // pred_check_branch
      %108 = sbr.rel (0) target = $region33
    $region32: #{tpu_custom_call.1} parent=1 // pred_region
      %110 = vsyncadd [#allocation15], 0
      %s112 = sshll.u32 %s7, 4
      %s113 = int_to_ptr.hbm [resolvable:$true] %s112
      %s114 = sshll.u32 [#allocation14], 4
      %s115 = int_to_ptr.vmem [resolvable:$true] %s114
      %117 = dma.hbm_to_vmem [thread:$0]  %s113, 16, %s115, [#allocation15]
    $region33: #{tpu_custom_call.1} parent=1 // pred_fallthru
      _
    // Predicated region
    $region34: #{tpu_custom_call.1} parent=1 // pred_check
      _
    $region35: #{tpu_custom_call.1} parent=1 // pred_check_branch
      %119 = sbr.rel (0) target = $region37
    $region36: #{tpu_custom_call.1} parent=1 // pred_region
      %121 = vsyncadd [#allocation15], 0
      %s122 = sshll.u32 %s8, 4
      %s123 = int_to_ptr.hbm [resolvable:$true] %s122
      %s124 = sshll.u32 [#allocation16], 4
      %s125 = int_to_ptr.vmem [resolvable:$true] %s124
      %130 = dma.hbm_to_vmem [thread:$0]  %s123, 8192, %s125, [#allocation15], 512, 512, 32
    $region37: #{tpu_custom_call.1} parent=1 // pred_fallthru
      _
    // Predicated region
    $region38: #{tpu_custom_call.1} parent=1 // pred_check
      _
    $region39: #{tpu_custom_call.1} parent=1 // pred_check_branch
      %132 = sbr.rel (0) target = $region41
    $region40: #{tpu_custom_call.1} parent=1 // pred_region
      _
    $region41: #{tpu_custom_call.1} parent=1 // pred_fallthru
      _
    // Predicated region
    $region42: #{tpu_custom_call.1} parent=1 // pred_check
      _
    $region43: #{tpu_custom_call.1} parent=1 // pred_check_branch
      %134 = sbr.rel (0) target = $region45
    $region44: #{tpu_custom_call.1} parent=1 // pred_region
      %136 = dma.done [#allocation3], 1024
    $region45: #{tpu_custom_call.1} parent=1 // pred_fallthru
      _
    // Predicated region
    $region46: #{tpu_custom_call.1} parent=1 // pred_check
      _
    $region47: #{tpu_custom_call.1} parent=1 // pred_check_branch
      %138 = sbr.rel (0) target = $region49
    $region48: #{tpu_custom_call.1} parent=1 // pred_region
      %140 = dma.done [#allocation6], 128
    $region49: #{tpu_custom_call.1} parent=1 // pred_fallthru
      _
    // Predicated region
    $region50: #{tpu_custom_call.1} parent=1 // pred_check
      _
    $region51: #{tpu_custom_call.1} parent=1 // pred_check_branch
      %142 = sbr.rel (0) target = $region53
    $region52: #{tpu_custom_call.1} parent=1 // pred_region
      %144 = dma.done [#allocation6], 8192
    $region53: #{tpu_custom_call.1} parent=1 // pred_fallthru
      _
    // Predicated region
    $region54: #{tpu_custom_call.1} parent=1 // pred_check
      _
    $region55: #{tpu_custom_call.1} parent=1 // pred_check_branch
      %146 = sbr.rel (0) target = $region57
    $region56: #{tpu_custom_call.1} parent=1 // pred_region
      %148 = dma.done [#allocation9], 16
    $region57: #{tpu_custom_call.1} parent=1 // pred_fallthru
      _
    // Predicated region
    $region58: #{tpu_custom_call.1} parent=1 // pred_check
      _
    $region59: #{tpu_custom_call.1} parent=1 // pred_check_branch
      %150 = sbr.rel (0) target = $region61
    $region60: #{tpu_custom_call.1} parent=1 // pred_region
      %152 = dma.done [#allocation9], 2048
    $region61: #{tpu_custom_call.1} parent=1 // pred_fallthru
      _
    // Predicated region
    $region62: #{tpu_custom_call.1} parent=1 // pred_check
      _
    $region63: #{tpu_custom_call.1} parent=1 // pred_check_branch
      %154 = sbr.rel (0) target = $region65
    $region64: #{tpu_custom_call.1} parent=1 // pred_region
      %156 = dma.done [#allocation12], 32
    $region65: #{tpu_custom_call.1} parent=1 // pred_fallthru
      _
    // Predicated region
    $region66: #{tpu_custom_call.1} parent=1 // pred_check
      _
    $region67: #{tpu_custom_call.1} parent=1 // pred_check_branch
      %158 = sbr.rel (0) target = $region69
    $region68: #{tpu_custom_call.1} parent=1 // pred_region
      %160 = dma.done [#allocation12], 1024
    $region69: #{tpu_custom_call.1} parent=1 // pred_fallthru
      _
    // Predicated region
    $region70: #{tpu_custom_call.1} parent=1 // pred_check
      _
    $region71: #{tpu_custom_call.1} parent=1 // pred_check_branch
      %162 = sbr.rel (0) target = $region73
    $region72: #{tpu_custom_call.1} parent=1 // pred_region
      %164 = dma.done [#allocation15], 16
    $region73: #{tpu_custom_call.1} parent=1 // pred_fallthru
      _
    // Predicated region
    $region74: #{tpu_custom_call.1} parent=1 // pred_check
      _
    $region75: #{tpu_custom_call.1} parent=1 // pred_check_branch
      %166 = sbr.rel (0) target = $region77
    $region76: #{tpu_custom_call.1} parent=1 // pred_region
      %168 = dma.done [#allocation15], 8192
    $region77: #{tpu_custom_call.1} parent=1 // pred_fallthru
      _
    %v169 = vld [vmem:[#allocation2] sm:$0xff]
    %v170 = vld [vmem:[#allocation2 + $0x8] sm:$0xff]
    %v171 = vld [vmem:[#allocation2 + $0x10] sm:$0xff]
    %v172 = vld [vmem:[#allocation2 + $0x18] sm:$0xff]
    %v173 = vld [vmem:[#allocation2 + $0x20] sm:$0xff]
    %v174 = vld [vmem:[#allocation2 + $0x28] sm:$0xff]
    %v175 = vld [vmem:[#allocation2 + $0x30] sm:$0xff]
    %v176 = vld [vmem:[#allocation2 + $0x38] sm:$0xff]
    %v177 = vpack.c.bf16 %v169, %v169
    %v178 = vpack.c.bf16 %v170, %v170
    %v179 = vpack.c.bf16 %v171, %v171
    %v180 = vpack.c.bf16 %v172, %v172
    %v181 = vpack.c.bf16 %v173, %v173
    %v182 = vpack.c.bf16 %v174, %v174
    %v183 = vpack.c.bf16 %v175, %v175
    %v184 = vpack.c.bf16 %v176, %v176
    %v185 = vld [vmem:[#allocation7] sm:$0xf]
    %v186 = vld [vmem:[#allocation7 + $0x4] sm:$0xf]
    %v187 = vld [vmem:[#allocation7 + $0x8] sm:$0xf]
    %v188 = vld [vmem:[#allocation7 + $0xc] sm:$0xf]
    %v189 = vld [vmem:[#allocation7 + $0x10] sm:$0xf]
    %v190 = vld [vmem:[#allocation7 + $0x14] sm:$0xf]
    %v191 = vld [vmem:[#allocation7 + $0x18] sm:$0xf]
    %v192 = vld [vmem:[#allocation7 + $0x1c] sm:$0xf]
    %v193 = vld [vmem:[#allocation7 + $0x20] sm:$0xf]
    %v194 = vld [vmem:[#allocation7 + $0x24] sm:$0xf]
    %v195 = vld [vmem:[#allocation7 + $0x28] sm:$0xf]
    %v196 = vld [vmem:[#allocation7 + $0x2c] sm:$0xf]
    %v197 = vld [vmem:[#allocation7 + $0x30] sm:$0xf]
    %v198 = vld [vmem:[#allocation7 + $0x34] sm:$0xf]
    %v199 = vld [vmem:[#allocation7 + $0x38] sm:$0xf]
    %v200 = vld [vmem:[#allocation7 + $0x3c] sm:$0xf]
    %v201 = vld [vmem:[#allocation7 + $0x40] sm:$0xf]
    %v202 = vld [vmem:[#allocation7 + $0x44] sm:$0xf]
    %v203 = vld [vmem:[#allocation7 + $0x48] sm:$0xf]
    %v204 = vld [vmem:[#allocation7 + $0x4c] sm:$0xf]
    %v205 = vld [vmem:[#allocation7 + $0x50] sm:$0xf]
    %v206 = vld [vmem:[#allocation7 + $0x54] sm:$0xf]
    %v207 = vld [vmem:[#allocation7 + $0x58] sm:$0xf]
    %v208 = vld [vmem:[#allocation7 + $0x5c] sm:$0xf]
    %v209 = vld [vmem:[#allocation7 + $0x60] sm:$0xf]
    %v210 = vld [vmem:[#allocation7 + $0x64] sm:$0xf]
    %v211 = vld [vmem:[#allocation7 + $0x68] sm:$0xf]
    %v212 = vld [vmem:[#allocation7 + $0x6c] sm:$0xf]
    %v213 = vld [vmem:[#allocation7 + $0x70] sm:$0xf]
    %v214 = vld [vmem:[#allocation7 + $0x74] sm:$0xf]
    %v215 = vld [vmem:[#allocation7 + $0x78] sm:$0xf]
    %v216 = vld [vmem:[#allocation7 + $0x7c] sm:$0xf]
    %v217 = vld [vmem:[#allocation7 + $0x80] sm:$0xf]
    %v218 = vld [vmem:[#allocation7 + $0x84] sm:$0xf]
    %v219 = vld [vmem:[#allocation7 + $0x88] sm:$0xf]
    %v220 = vld [vmem:[#allocation7 + $0x8c] sm:$0xf]
    %v221 = vld [vmem:[#allocation7 + $0x90] sm:$0xf]
    %v222 = vld [vmem:[#allocation7 + $0x94] sm:$0xf]
    %v223 = vld [vmem:[#allocation7 + $0x98] sm:$0xf]
    %v224 = vld [vmem:[#allocation7 + $0x9c] sm:$0xf]
    %v225 = vld [vmem:[#allocation7 + $0xa0] sm:$0xf]
    %v226 = vld [vmem:[#allocation7 + $0xa4] sm:$0xf]
    %v227 = vld [vmem:[#allocation7 + $0xa8] sm:$0xf]
    %v228 = vld [vmem:[#allocation7 + $0xac] sm:$0xf]
    %v229 = vld [vmem:[#allocation7 + $0xb0] sm:$0xf]
    %v230 = vld [vmem:[#allocation7 + $0xb4] sm:$0xf]
    %v231 = vld [vmem:[#allocation7 + $0xb8] sm:$0xf]
    %v232 = vld [vmem:[#allocation7 + $0xbc] sm:$0xf]
    %v233 = vld [vmem:[#allocation7 + $0xc0] sm:$0xf]
    %v234 = vld [vmem:[#allocation7 + $0xc4] sm:$0xf]
    %v235 = vld [vmem:[#allocation7 + $0xc8] sm:$0xf]
    %v236 = vld [vmem:[#allocation7 + $0xcc] sm:$0xf]
    %v237 = vld [vmem:[#allocation7 + $0xd0] sm:$0xf]
    %v238 = vld [vmem:[#allocation7 + $0xd4] sm:$0xf]
    %v239 = vld [vmem:[#allocation7 + $0xd8] sm:$0xf]
    %v240 = vld [vmem:[#allocation7 + $0xdc] sm:$0xf]
    %v241 = vld [vmem:[#allocation7 + $0xe0] sm:$0xf]
    %v242 = vld [vmem:[#allocation7 + $0xe4] sm:$0xf]
    %v243 = vld [vmem:[#allocation7 + $0xe8] sm:$0xf]
    %v244 = vld [vmem:[#allocation7 + $0xec] sm:$0xf]
    %v245 = vld [vmem:[#allocation7 + $0xf0] sm:$0xf]
    %v246 = vld [vmem:[#allocation7 + $0xf4] sm:$0xf]
    %v247 = vld [vmem:[#allocation7 + $0xf8] sm:$0xf]
    %v248 = vld [vmem:[#allocation7 + $0xfc] sm:$0xf]
    %v249 = vld [vmem:[#allocation7 + $0x100] sm:$0xf]
    %v250 = vld [vmem:[#allocation7 + $0x104] sm:$0xf]
    %v251 = vld [vmem:[#allocation7 + $0x108] sm:$0xf]
    %v252 = vld [vmem:[#allocation7 + $0x10c] sm:$0xf]
    %v253 = vld [vmem:[#allocation7 + $0x110] sm:$0xf]
    %v254 = vld [vmem:[#allocation7 + $0x114] sm:$0xf]
    %v255 = vld [vmem:[#allocation7 + $0x118] sm:$0xf]
    %v256 = vld [vmem:[#allocation7 + $0x11c] sm:$0xf]
    %v257 = vld [vmem:[#allocation7 + $0x120] sm:$0xf]
    %v258 = vld [vmem:[#allocation7 + $0x124] sm:$0xf]
    %v259 = vld [vmem:[#allocation7 + $0x128] sm:$0xf]
    %v260 = vld [vmem:[#allocation7 + $0x12c] sm:$0xf]
    %v261 = vld [vmem:[#allocation7 + $0x130] sm:$0xf]
    %v262 = vld [vmem:[#allocation7 + $0x134] sm:$0xf]
    %v263 = vld [vmem:[#allocation7 + $0x138] sm:$0xf]
    %v264 = vld [vmem:[#allocation7 + $0x13c] sm:$0xf]
    %v265 = vld [vmem:[#allocation7 + $0x140] sm:$0xf]
    %v266 = vld [vmem:[#allocation7 + $0x144] sm:$0xf]
    %v267 = vld [vmem:[#allocation7 + $0x148] sm:$0xf]
    %v268 = vld [vmem:[#allocation7 + $0x14c] sm:$0xf]
    %v269 = vld [vmem:[#allocation7 + $0x150] sm:$0xf]
    %v270 = vld [vmem:[#allocation7 + $0x154] sm:$0xf]
    %v271 = vld [vmem:[#allocation7 + $0x158] sm:$0xf]
    %v272 = vld [vmem:[#allocation7 + $0x15c] sm:$0xf]
    %v273 = vld [vmem:[#allocation7 + $0x160] sm:$0xf]
    %v274 = vld [vmem:[#allocation7 + $0x164] sm:$0xf]
    %v275 = vld [vmem:[#allocation7 + $0x168] sm:$0xf]
    %v276 = vld [vmem:[#allocation7 + $0x16c] sm:$0xf]
    %v277 = vld [vmem:[#allocation7 + $0x170] sm:$0xf]
    %v278 = vld [vmem:[#allocation7 + $0x174] sm:$0xf]
    %v279 = vld [vmem:[#allocation7 + $0x178] sm:$0xf]
    %v280 = vld [vmem:[#allocation7 + $0x17c] sm:$0xf]
    %v281 = vld [vmem:[#allocation7 + $0x180] sm:$0xf]
    %v282 = vld [vmem:[#allocation7 + $0x184] sm:$0xf]
    %v283 = vld [vmem:[#allocation7 + $0x188] sm:$0xf]
    %v284 = vld [vmem:[#allocation7 + $0x18c] sm:$0xf]
    %v285 = vld [vmem:[#allocation7 + $0x190] sm:$0xf]
    %v286 = vld [vmem:[#allocation7 + $0x194] sm:$0xf]
    %v287 = vld [vmem:[#allocation7 + $0x198] sm:$0xf]
    %v288 = vld [vmem:[#allocation7 + $0x19c] sm:$0xf]
    %v289 = vld [vmem:[#allocation7 + $0x1a0] sm:$0xf]
    %v290 = vld [vmem:[#allocation7 + $0x1a4] sm:$0xf]
    %v291 = vld [vmem:[#allocation7 + $0x1a8] sm:$0xf]
    %v292 = vld [vmem:[#allocation7 + $0x1ac] sm:$0xf]
    %v293 = vld [vmem:[#allocation7 + $0x1b0] sm:$0xf]
    %v294 = vld [vmem:[#allocation7 + $0x1b4] sm:$0xf]
    %v295 = vld [vmem:[#allocation7 + $0x1b8] sm:$0xf]
    %v296 = vld [vmem:[#allocation7 + $0x1bc] sm:$0xf]
    %v297 = vld [vmem:[#allocation7 + $0x1c0] sm:$0xf]
    %v298 = vld [vmem:[#allocation7 + $0x1c4] sm:$0xf]
    %v299 = vld [vmem:[#allocation7 + $0x1c8] sm:$0xf]
    %v300 = vld [vmem:[#allocation7 + $0x1cc] sm:$0xf]
    %v301 = vld [vmem:[#allocation7 + $0x1d0] sm:$0xf]
    %v302 = vld [vmem:[#allocation7 + $0x1d4] sm:$0xf]
    %v303 = vld [vmem:[#allocation7 + $0x1d8] sm:$0xf]
    %v304 = vld [vmem:[#allocation7 + $0x1dc] sm:$0xf]
    %v305 = vld [vmem:[#allocation7 + $0x1e0] sm:$0xf]
    %v306 = vld [vmem:[#allocation7 + $0x1e4] sm:$0xf]
    %v307 = vld [vmem:[#allocation7 + $0x1e8] sm:$0xf]
    %v308 = vld [vmem:[#allocation7 + $0x1ec] sm:$0xf]
    %v309 = vld [vmem:[#allocation7 + $0x1f0] sm:$0xf]
    %v310 = vld [vmem:[#allocation7 + $0x1f4] sm:$0xf]
    %v311 = vld [vmem:[#allocation7 + $0x1f8] sm:$0xf]
    %v312 = vld [vmem:[#allocation7 + $0x1fc] sm:$0xf]
    %v313 = vld [vmem:[#allocation8] sm:$0x1]
    %v315 = vperm.slane %v313, 0
    %v445 = vunpack.c.l.b16 %v185
    %v446 = vunpack.c.l.b16 %v186
    %v447 = vunpack.c.l.b16 %v187
    %v448 = vunpack.c.l.b16 %v188
    %v449 = vunpack.c.l.b16 %v189
    %v450 = vunpack.c.l.b16 %v190
    %v451 = vunpack.c.l.b16 %v191
    %v452 = vunpack.c.l.b16 %v192
    %v453 = vunpack.c.l.b16 %v193
    %v454 = vunpack.c.l.b16 %v194
    %v455 = vunpack.c.l.b16 %v195
    %v456 = vunpack.c.l.b16 %v196
    %v457 = vunpack.c.l.b16 %v197
    %v458 = vunpack.c.l.b16 %v198
    %v459 = vunpack.c.l.b16 %v199
    %v460 = vunpack.c.l.b16 %v200
    %v461 = vunpack.c.l.b16 %v201
    %v462 = vunpack.c.l.b16 %v202
    %v463 = vunpack.c.l.b16 %v203
    %v464 = vunpack.c.l.b16 %v204
    %v465 = vunpack.c.l.b16 %v205
    %v466 = vunpack.c.l.b16 %v206
    %v467 = vunpack.c.l.b16 %v207
    %v468 = vunpack.c.l.b16 %v208
    %v469 = vunpack.c.l.b16 %v209
    %v470 = vunpack.c.l.b16 %v210
    %v471 = vunpack.c.l.b16 %v211
    %v472 = vunpack.c.l.b16 %v212
    %v473 = vunpack.c.l.b16 %v213
    %v474 = vunpack.c.l.b16 %v214
    %v475 = vunpack.c.l.b16 %v215
    %v476 = vunpack.c.l.b16 %v216
    %v477 = vunpack.c.l.b16 %v217
    %v478 = vunpack.c.l.b16 %v218
    %v479 = vunpack.c.l.b16 %v219
    %v480 = vunpack.c.l.b16 %v220
    %v481 = vunpack.c.l.b16 %v221
    %v482 = vunpack.c.l.b16 %v222
    %v483 = vunpack.c.l.b16 %v223
    %v484 = vunpack.c.l.b16 %v224
    %v485 = vunpack.c.l.b16 %v225
    %v486 = vunpack.c.l.b16 %v226
    %v487 = vunpack.c.l.b16 %v227
    %v488 = vunpack.c.l.b16 %v228
    %v489 = vunpack.c.l.b16 %v229
    %v490 = vunpack.c.l.b16 %v230
    %v491 = vunpack.c.l.b16 %v231
    %v492 = vunpack.c.l.b16 %v232
    %v493 = vunpack.c.l.b16 %v233
    %v494 = vunpack.c.l.b16 %v234
    %v495 = vunpack.c.l.b16 %v235
    %v496 = vunpack.c.l.b16 %v236
    %v497 = vunpack.c.l.b16 %v237
    %v498 = vunpack.c.l.b16 %v238
    %v499 = vunpack.c.l.b16 %v239
    %v500 = vunpack.c.l.b16 %v240
    %v501 = vunpack.c.l.b16 %v241
    %v502 = vunpack.c.l.b16 %v242
    %v503 = vunpack.c.l.b16 %v243
    %v504 = vunpack.c.l.b16 %v244
    %v505 = vunpack.c.l.b16 %v245
    %v506 = vunpack.c.l.b16 %v246
    %v507 = vunpack.c.l.b16 %v247
    %v508 = vunpack.c.l.b16 %v248
    %v509 = vunpack.c.l.b16 %v249
    %v510 = vunpack.c.l.b16 %v250
    %v511 = vunpack.c.l.b16 %v251
    %v512 = vunpack.c.l.b16 %v252
    %v513 = vunpack.c.l.b16 %v253
    %v514 = vunpack.c.l.b16 %v254
    %v515 = vunpack.c.l.b16 %v255
    %v516 = vunpack.c.l.b16 %v256
    %v517 = vunpack.c.l.b16 %v257
    %v518 = vunpack.c.l.b16 %v258
    %v519 = vunpack.c.l.b16 %v259
    %v520 = vunpack.c.l.b16 %v260
    %v521 = vunpack.c.l.b16 %v261
    %v522 = vunpack.c.l.b16 %v262
    %v523 = vunpack.c.l.b16 %v263
    %v524 = vunpack.c.l.b16 %v264
    %v525 = vunpack.c.l.b16 %v265
    %v526 = vunpack.c.l.b16 %v266
    %v527 = vunpack.c.l.b16 %v267
    %v528 = vunpack.c.l.b16 %v268
    %v529 = vunpack.c.l.b16 %v269
    %v530 = vunpack.c.l.b16 %v270
    %v531 = vunpack.c.l.b16 %v271
    %v532 = vunpack.c.l.b16 %v272
    %v533 = vunpack.c.l.b16 %v273
    %v534 = vunpack.c.l.b16 %v274
    %v535 = vunpack.c.l.b16 %v275
    %v536 = vunpack.c.l.b16 %v276
    %v537 = vunpack.c.l.b16 %v277
    %v538 = vunpack.c.l.b16 %v278
    %v539 = vunpack.c.l.b16 %v279
    %v540 = vunpack.c.l.b16 %v280
    %v541 = vunpack.c.l.b16 %v281
    %v542 = vunpack.c.l.b16 %v282
    %v543 = vunpack.c.l.b16 %v283
    %v544 = vunpack.c.l.b16 %v284
    %v545 = vunpack.c.l.b16 %v285
    %v546 = vunpack.c.l.b16 %v286
    %v547 = vunpack.c.l.b16 %v287
    %v548 = vunpack.c.l.b16 %v288
    %v549 = vunpack.c.l.b16 %v289
    %v550 = vunpack.c.l.b16 %v290
    %v551 = vunpack.c.l.b16 %v291
    %v552 = vunpack.c.l.b16 %v292
    %v553 = vunpack.c.l.b16 %v293
    %v554 = vunpack.c.l.b16 %v294
    %v555 = vunpack.c.l.b16 %v295
    %v556 = vunpack.c.l.b16 %v296
    %v557 = vunpack.c.l.b16 %v297
    %v558 = vunpack.c.l.b16 %v298
    %v559 = vunpack.c.l.b16 %v299
    %v560 = vunpack.c.l.b16 %v300
    %v561 = vunpack.c.l.b16 %v301
    %v562 = vunpack.c.l.b16 %v302
    %v563 = vunpack.c.l.b16 %v303
    %v564 = vunpack.c.l.b16 %v304
    %v565 = vunpack.c.l.b16 %v305
    %v566 = vunpack.c.l.b16 %v306
    %v567 = vunpack.c.l.b16 %v307
    %v568 = vunpack.c.l.b16 %v308
    %v569 = vunpack.c.l.b16 %v309
    %v570 = vunpack.c.l.b16 %v310
    %v571 = vunpack.c.l.b16 %v311
    %v572 = vunpack.c.l.b16 %v312
    %v573 = vpack.c.b16 %v446, %v445
    %v574 = vpack.c.b16 %v448, %v447
    %v575 = vpack.c.b16 %v450, %v449
    %v576 = vpack.c.b16 %v452, %v451
    %v577 = vpack.c.b16 %v454, %v453
    %v578 = vpack.c.b16 %v456, %v455
    %v579 = vpack.c.b16 %v458, %v457
    %v580 = vpack.c.b16 %v460, %v459
    %v581 = vpack.c.b16 %v462, %v461
    %v582 = vpack.c.b16 %v464, %v463
    %v583 = vpack.c.b16 %v466, %v465
    %v584 = vpack.c.b16 %v468, %v467
    %v585 = vpack.c.b16 %v470, %v469
    %v586 = vpack.c.b16 %v472, %v471
    %v587 = vpack.c.b16 %v474, %v473
    %v588 = vpack.c.b16 %v476, %v475
    %v589 = vpack.c.b16 %v478, %v477
    %v590 = vpack.c.b16 %v480, %v479
    %v591 = vpack.c.b16 %v482, %v481
    %v592 = vpack.c.b16 %v484, %v483
    %v593 = vpack.c.b16 %v486, %v485
    %v594 = vpack.c.b16 %v488, %v487
    %v595 = vpack.c.b16 %v490, %v489
    %v596 = vpack.c.b16 %v492, %v491
    %v597 = vpack.c.b16 %v494, %v493
    %v598 = vpack.c.b16 %v496, %v495
    %v599 = vpack.c.b16 %v498, %v497
    %v600 = vpack.c.b16 %v500, %v499
    %v601 = vpack.c.b16 %v502, %v501
    %v602 = vpack.c.b16 %v504, %v503
    %v603 = vpack.c.b16 %v506, %v505
    %v604 = vpack.c.b16 %v508, %v507
    %v605 = vpack.c.b16 %v510, %v509
    %v606 = vpack.c.b16 %v512, %v511
    %v607 = vpack.c.b16 %v514, %v513
    %v608 = vpack.c.b16 %v516, %v515
    %v609 = vpack.c.b16 %v518, %v517
    %v610 = vpack.c.b16 %v520, %v519
    %v611 = vpack.c.b16 %v522, %v521
    %v612 = vpack.c.b16 %v524, %v523
    %v613 = vpack.c.b16 %v526, %v525
    %v614 = vpack.c.b16 %v528, %v527
    %v615 = vpack.c.b16 %v530, %v529
    %v616 = vpack.c.b16 %v532, %v531
    %v617 = vpack.c.b16 %v534, %v533
    %v618 = vpack.c.b16 %v536, %v535
    %v619 = vpack.c.b16 %v538, %v537
    %v620 = vpack.c.b16 %v540, %v539
    %v621 = vpack.c.b16 %v542, %v541
    %v622 = vpack.c.b16 %v544, %v543
    %v623 = vpack.c.b16 %v546, %v545
    %v624 = vpack.c.b16 %v548, %v547
    %v625 = vpack.c.b16 %v550, %v549
    %v626 = vpack.c.b16 %v552, %v551
    %v627 = vpack.c.b16 %v554, %v553
    %v628 = vpack.c.b16 %v556, %v555
    %v629 = vpack.c.b16 %v558, %v557
    %v630 = vpack.c.b16 %v560, %v559
    %v631 = vpack.c.b16 %v562, %v561
    %v632 = vpack.c.b16 %v564, %v563
    %v633 = vpack.c.b16 %v566, %v565
    %v634 = vpack.c.b16 %v568, %v567
    %v635 = vpack.c.b16 %v570, %v569
    %v636 = vpack.c.b16 %v572, %v571
    %701 = vmatpush.bf16.msra.mxu0 %v580
    %702 = vmatpush.bf16.msra.mxu0 %v579
    %703 = vmatpush.bf16.msra.mxu0 %v578
    %704 = vmatpush.bf16.msra.mxu0 %v577
    %705 = vmatpush.bf16.msra.mxu0 %v576
    %706 = vmatpush.bf16.msra.mxu0 %v575
    %707 = vmatpush.bf16.msra.mxu0 %v574
    %708 = vmatpush.bf16.msra.mxu0 %v573
    %709 = vmatmul.bf16.gmra.mxu0 %v177
    %v710 = vpop.f32.mrf.mxu0
    %v711 = vadd.f32 %v315, %v710
    %v712 = vpop.f32.mrf.mxu0
    %713 = vdwg.mxu0
    %714 = vmatpush.bf16.msra.mxu0 %v588
    %715 = vmatpush.bf16.msra.mxu0 %v587
    %716 = vmatpush.bf16.msra.mxu0 %v586
    %717 = vmatpush.bf16.msra.mxu0 %v585
    %718 = vmatpush.bf16.msra.mxu0 %v584
    %719 = vmatpush.bf16.msra.mxu0 %v583
    %720 = vmatpush.bf16.msra.mxu0 %v582
    %721 = vmatpush.bf16.msra.mxu0 %v581
    %722 = vmatmul.bf16.gmra.mxu0 %v178
    %v723 = vpop.f32.mrf.mxu0
    %v724 = vadd.f32 %v711, %v723
    %v725 = vpop.f32.mrf.mxu0
    %726 = vdwg.mxu0
    %727 = vmatpush.bf16.msra.mxu0 %v596
    %728 = vmatpush.bf16.msra.mxu0 %v595
    %729 = vmatpush.bf16.msra.mxu0 %v594
    %730 = vmatpush.bf16.msra.mxu0 %v593
    %731 = vmatpush.bf16.msra.mxu0 %v592
    %732 = vmatpush.bf16.msra.mxu0 %v591
    %733 = vmatpush.bf16.msra.mxu0 %v590
    %734 = vmatpush.bf16.msra.mxu0 %v589
    %735 = vmatmul.bf16.gmra.mxu0 %v179
    %v736 = vpop.f32.mrf.mxu0
    %v737 = vadd.f32 %v724, %v736
    %v738 = vpop.f32.mrf.mxu0
    %739 = vdwg.mxu0
    %740 = vmatpush.bf16.msra.mxu0 %v604
    %741 = vmatpush.bf16.msra.mxu0 %v603
    %742 = vmatpush.bf16.msra.mxu0 %v602
    %743 = vmatpush.bf16.msra.mxu0 %v601
    %744 = vmatpush.bf16.msra.mxu0 %v600
    %745 = vmatpush.bf16.msra.mxu0 %v599
    %746 = vmatpush.bf16.msra.mxu0 %v598
    %747 = vmatpush.bf16.msra.mxu0 %v597
    %748 = vmatmul.bf16.gmra.mxu0 %v180
    %v749 = vpop.f32.mrf.mxu0
    %v750 = vadd.f32 %v737, %v749
    %v751 = vpop.f32.mrf.mxu0
    %752 = vdwg.mxu0
    %753 = vmatpush.bf16.msra.mxu0 %v612
    %754 = vmatpush.bf16.msra.mxu0 %v611
    %755 = vmatpush.bf16.msra.mxu0 %v610
    %756 = vmatpush.bf16.msra.mxu0 %v609
    %757 = vmatpush.bf16.msra.mxu0 %v608
    %758 = vmatpush.bf16.msra.mxu0 %v607
    %759 = vmatpush.bf16.msra.mxu0 %v606
    %760 = vmatpush.bf16.msra.mxu0 %v605
    %761 = vmatmul.bf16.gmra.mxu0 %v181
    %v762 = vpop.f32.mrf.mxu0
    %v763 = vadd.f32 %v750, %v762
    %v764 = vpop.f32.mrf.mxu0
    %765 = vdwg.mxu0
    %766 = vmatpush.bf16.msra.mxu0 %v620
    %767 = vmatpush.bf16.msra.mxu0 %v619
    %768 = vmatpush.bf16.msra.mxu0 %v618
    %769 = vmatpush.bf16.msra.mxu0 %v617
    %770 = vmatpush.bf16.msra.mxu0 %v616
    %771 = vmatpush.bf16.msra.mxu0 %v615
    %772 = vmatpush.bf16.msra.mxu0 %v614
    %773 = vmatpush.bf16.msra.mxu0 %v613
    %774 = vmatmul.bf16.gmra.mxu0 %v182
    %v775 = vpop.f32.mrf.mxu0
    %v776 = vadd.f32 %v763, %v775
    %v777 = vpop.f32.mrf.mxu0
    %778 = vdwg.mxu0
    %779 = vmatpush.bf16.msra.mxu0 %v628
    %780 = vmatpush.bf16.msra.mxu0 %v627
    %781 = vmatpush.bf16.msra.mxu0 %v626
    %782 = vmatpush.bf16.msra.mxu0 %v625
    %783 = vmatpush.bf16.msra.mxu0 %v624
    %784 = vmatpush.bf16.msra.mxu0 %v623
    %785 = vmatpush.bf16.msra.mxu0 %v622
    %786 = vmatpush.bf16.msra.mxu0 %v621
    %787 = vmatmul.bf16.gmra.mxu0 %v183
    %v788 = vpop.f32.mrf.mxu0
    %v789 = vadd.f32 %v776, %v788
    %v790 = vpop.f32.mrf.mxu0
    %791 = vdwg.mxu0
    %792 = vmatpush.bf16.msra.mxu0 %v636
    %793 = vmatpush.bf16.msra.mxu0 %v635
    %794 = vmatpush.bf16.msra.mxu0 %v634
    %795 = vmatpush.bf16.msra.mxu0 %v633
    %796 = vmatpush.bf16.msra.mxu0 %v632
    %797 = vmatpush.bf16.msra.mxu0 %v631
    %798 = vmatpush.bf16.msra.mxu0 %v630
    %799 = vmatpush.bf16.msra.mxu0 %v629
    %800 = vmatmul.bf16.gmra.mxu0 %v184
    %v801 = vpop.f32.mrf.mxu0
    %v802 = vadd.f32 %v789, %v801
    %v803 = vpop.f32.mrf.mxu0
    %804 = vdwg.mxu0
    %v805 = vmax.f32 %v802, 0.0
    %v806 = vpack.c.bf16 %v805, %v805
    %v807 = vld [vmem:[#allocation10] sm:$0xff]
    %v808 = vld [vmem:[#allocation10 + $0x8] sm:$0xff]
    %v809 = vld [vmem:[#allocation10 + $0x10] sm:$0xff]
    %v810 = vld [vmem:[#allocation10 + $0x18] sm:$0xff]
    %v811 = vld [vmem:[#allocation10 + $0x20] sm:$0xff]
    %v812 = vld [vmem:[#allocation10 + $0x28] sm:$0xff]
    %v813 = vld [vmem:[#allocation10 + $0x30] sm:$0xff]
    %v814 = vld [vmem:[#allocation10 + $0x38] sm:$0xff]
    %v815 = vld [vmem:[#allocation10 + $0x40] sm:$0xff]
    %v816 = vld [vmem:[#allocation10 + $0x48] sm:$0xff]
    %v817 = vld [vmem:[#allocation10 + $0x50] sm:$0xff]
    %v818 = vld [vmem:[#allocation10 + $0x58] sm:$0xff]
    %v819 = vld [vmem:[#allocation10 + $0x60] sm:$0xff]
    %v820 = vld [vmem:[#allocation10 + $0x68] sm:$0xff]
    %v821 = vld [vmem:[#allocation10 + $0x70] sm:$0xff]
    %v822 = vld [vmem:[#allocation10 + $0x78] sm:$0xff]
    %v823 = vld [vmem:[#allocation11] sm:$0x3]
    %v825 = vperm.slane %v823, 0
    %v826 = vperm.slane %v823, 1
    %v845 = vunpack.c.l.b16 %v807
    %v846 = vunpack.c.h.b16 %v807
    %v847 = vunpack.c.l.b16 %v808
    %v848 = vunpack.c.h.b16 %v808
    %v849 = vunpack.c.l.b16 %v809
    %v850 = vunpack.c.h.b16 %v809
    %v851 = vunpack.c.l.b16 %v810
    %v852 = vunpack.c.h.b16 %v810
    %v853 = vunpack.c.l.b16 %v811
    %v854 = vunpack.c.h.b16 %v811
    %v855 = vunpack.c.l.b16 %v812
    %v856 = vunpack.c.h.b16 %v812
    %v857 = vunpack.c.l.b16 %v813
    %v858 = vunpack.c.h.b16 %v813
    %v859 = vunpack.c.l.b16 %v814
    %v860 = vunpack.c.h.b16 %v814
    %v861 = vunpack.c.l.b16 %v815
    %v862 = vunpack.c.h.b16 %v815
    %v863 = vunpack.c.l.b16 %v816
    %v864 = vunpack.c.h.b16 %v816
    %v865 = vunpack.c.l.b16 %v817
    %v866 = vunpack.c.h.b16 %v817
    %v867 = vunpack.c.l.b16 %v818
    %v868 = vunpack.c.h.b16 %v818
    %v869 = vunpack.c.l.b16 %v819
    %v870 = vunpack.c.h.b16 %v819
    %v871 = vunpack.c.l.b16 %v820
    %v872 = vunpack.c.h.b16 %v820
    %v873 = vunpack.c.l.b16 %v821
    %v874 = vunpack.c.h.b16 %v821
    %v875 = vunpack.c.l.b16 %v822
    %v876 = vunpack.c.h.b16 %v822
    %v877 = vpack.c.b16 %v847, %v845
    %v878 = vpack.c.b16 %v848, %v846
    %v879 = vpack.c.b16 %v851, %v849
    %v880 = vpack.c.b16 %v852, %v850
    %v881 = vpack.c.b16 %v855, %v853
    %v882 = vpack.c.b16 %v856, %v854
    %v883 = vpack.c.b16 %v859, %v857
    %v884 = vpack.c.b16 %v860, %v858
    %v885 = vpack.c.b16 %v863, %v861
    %v886 = vpack.c.b16 %v864, %v862
    %v887 = vpack.c.b16 %v867, %v865
    %v888 = vpack.c.b16 %v868, %v866
    %v889 = vpack.c.b16 %v871, %v869
    %v890 = vpack.c.b16 %v872, %v870
    %v891 = vpack.c.b16 %v875, %v873
    %v892 = vpack.c.b16 %v876, %v874
    %909 = vmatpush.bf16.msra.mxu0 %v891
    %910 = vmatpush.bf16.msra.mxu0 %v889
    %911 = vmatpush.bf16.msra.mxu0 %v887
    %912 = vmatpush.bf16.msra.mxu0 %v885
    %913 = vmatpush.bf16.msra.mxu0 %v883
    %914 = vmatpush.bf16.msra.mxu0 %v881
    %915 = vmatpush.bf16.msra.mxu0 %v879
    %916 = vmatpush.bf16.msra.mxu0 %v877
    %917 = vmatmul.bf16.gmra.mxu0 %v806
    %v918 = vpop.f32.mrf.mxu0
    %v919 = vadd.f32 %v825, %v918
    %v920 = vpop.f32.mrf.mxu0
    %921 = vdwg.mxu0
    %922 = vmatpush.bf16.msra.mxu0 %v892
    %923 = vmatpush.bf16.msra.mxu0 %v890
    %924 = vmatpush.bf16.msra.mxu0 %v888
    %925 = vmatpush.bf16.msra.mxu0 %v886
    %926 = vmatpush.bf16.msra.mxu0 %v884
    %927 = vmatpush.bf16.msra.mxu0 %v882
    %928 = vmatpush.bf16.msra.mxu0 %v880
    %929 = vmatpush.bf16.msra.mxu0 %v878
    %930 = vmatmul.bf16.gmra.mxu0 %v806
    %v931 = vpop.f32.mrf.mxu0
    %v932 = vadd.f32 %v826, %v931
    %v933 = vpop.f32.mrf.mxu0
    %934 = vdwg.mxu0
    %v935 = vpack.c.bf16 %v932, %v919
    %936 = vst [vmem:[#allocation18] sm:$0xff] %v935
    %v937 = vld [vmem:[#allocation5] sm:$0xff]
    %v938 = vmul.f32 %v932, 1.442695
    %v939 = vpow.pop %v938
    %v940 = vmul.f32 %v937, %v939
    %v941 = vadd.f32 %v940, %v919
    %v942 = vpack.c.bf16 %v941, %v941
    %v943 = vld [vmem:[#allocation13] sm:$0xf]
    %v944 = vld [vmem:[#allocation13 + $0x4] sm:$0xf]
    %v945 = vld [vmem:[#allocation13 + $0x8] sm:$0xf]
    %v946 = vld [vmem:[#allocation13 + $0xc] sm:$0xf]
    %v947 = vld [vmem:[#allocation13 + $0x10] sm:$0xf]
    %v948 = vld [vmem:[#allocation13 + $0x14] sm:$0xf]
    %v949 = vld [vmem:[#allocation13 + $0x18] sm:$0xf]
    %v950 = vld [vmem:[#allocation13 + $0x1c] sm:$0xf]
    %v951 = vld [vmem:[#allocation13 + $0x20] sm:$0xf]
    %v952 = vld [vmem:[#allocation13 + $0x24] sm:$0xf]
    %v953 = vld [vmem:[#allocation13 + $0x28] sm:$0xf]
    %v954 = vld [vmem:[#allocation13 + $0x2c] sm:$0xf]
    %v955 = vld [vmem:[#allocation13 + $0x30] sm:$0xf]
    %v956 = vld [vmem:[#allocation13 + $0x34] sm:$0xf]
    %v957 = vld [vmem:[#allocation13 + $0x38] sm:$0xf]
    %v958 = vld [vmem:[#allocation13 + $0x3c] sm:$0xf]
    %v959 = vld [vmem:[#allocation14] sm:$0x1]
    %v961 = vperm.slane %v959, 0
    %v979 = vunpack.c.l.b16 %v943
    %v980 = vunpack.c.l.b16 %v944
    %v981 = vunpack.c.l.b16 %v945
    %v982 = vunpack.c.l.b16 %v946
    %v983 = vunpack.c.l.b16 %v947
    %v984 = vunpack.c.l.b16 %v948
    %v985 = vunpack.c.l.b16 %v949
    %v986 = vunpack.c.l.b16 %v950
    %v987 = vunpack.c.l.b16 %v951
    %v988 = vunpack.c.l.b16 %v952
    %v989 = vunpack.c.l.b16 %v953
    %v990 = vunpack.c.l.b16 %v954
    %v991 = vunpack.c.l.b16 %v955
    %v992 = vunpack.c.l.b16 %v956
    %v993 = vunpack.c.l.b16 %v957
    %v994 = vunpack.c.l.b16 %v958
    %v995 = vpack.c.b16 %v980, %v979
    %v996 = vpack.c.b16 %v982, %v981
    %v997 = vpack.c.b16 %v984, %v983
    %v998 = vpack.c.b16 %v986, %v985
    %v999 = vpack.c.b16 %v988, %v987
    %v1000 = vpack.c.b16 %v990, %v989
    %v1001 = vpack.c.b16 %v992, %v991
    %v1002 = vpack.c.b16 %v994, %v993
    %1011 = vmatpush.bf16.msra.mxu0 %v1002
    %1012 = vmatpush.bf16.msra.mxu0 %v1001
    %1013 = vmatpush.bf16.msra.mxu0 %v1000
    %1014 = vmatpush.bf16.msra.mxu0 %v999
    %1015 = vmatpush.bf16.msra.mxu0 %v998
    %1016 = vmatpush.bf16.msra.mxu0 %v997
    %1017 = vmatpush.bf16.msra.mxu0 %v996
    %1018 = vmatpush.bf16.msra.mxu0 %v995
    %1019 = vmatmul.bf16.gmra.mxu0 %v942
    %v1020 = vpop.f32.mrf.mxu0
    %v1021 = vadd.f32 %v961, %v1020
    %v1022 = vpop.f32.mrf.mxu0
    %1023 = vdwg.mxu0
    %v1024 = vmax.f32 %v1021, 0.0
    %v1025 = vpack.c.bf16 %v1024, %v1024
    %v1026 = vld [vmem:[#allocation16] sm:$0xff]
    %v1027 = vld [vmem:[#allocation16 + $0x8] sm:$0xff]
    %v1028 = vld [vmem:[#allocation16 + $0x10] sm:$0xff]
    %v1029 = vld [vmem:[#allocation16 + $0x18] sm:$0xff]
    %v1030 = vld [vmem:[#allocation16 + $0x20] sm:$0xff]
    %v1031 = vld [vmem:[#allocation16 + $0x28] sm:$0xff]
    %v1032 = vld [vmem:[#allocation16 + $0x30] sm:$0xff]
    %v1033 = vld [vmem:[#allocation16 + $0x38] sm:$0xff]
    %v1034 = vld [vmem:[#allocation16 + $0x40] sm:$0xff]
    %v1035 = vld [vmem:[#allocation16 + $0x48] sm:$0xff]
    %v1036 = vld [vmem:[#allocation16 + $0x50] sm:$0xff]
    %v1037 = vld [vmem:[#allocation16 + $0x58] sm:$0xff]
    %v1038 = vld [vmem:[#allocation16 + $0x60] sm:$0xff]
    %v1039 = vld [vmem:[#allocation16 + $0x68] sm:$0xff]
    %v1040 = vld [vmem:[#allocation16 + $0x70] sm:$0xff]
    %v1041 = vld [vmem:[#allocation16 + $0x78] sm:$0xff]
    %v1042 = vld [vmem:[#allocation16 + $0x80] sm:$0xff]
    %v1043 = vld [vmem:[#allocation16 + $0x88] sm:$0xff]
    %v1044 = vld [vmem:[#allocation16 + $0x90] sm:$0xff]
    %v1045 = vld [vmem:[#allocation16 + $0x98] sm:$0xff]
    %v1046 = vld [vmem:[#allocation16 + $0xa0] sm:$0xff]
    %v1047 = vld [vmem:[#allocation16 + $0xa8] sm:$0xff]
    %v1048 = vld [vmem:[#allocation16 + $0xb0] sm:$0xff]
    %v1049 = vld [vmem:[#allocation16 + $0xb8] sm:$0xff]
    %v1050 = vld [vmem:[#allocation16 + $0xc0] sm:$0xff]
    %v1051 = vld [vmem:[#allocation16 + $0xc8] sm:$0xff]
    %v1052 = vld [vmem:[#allocation16 + $0xd0] sm:$0xff]
    %v1053 = vld [vmem:[#allocation16 + $0xd8] sm:$0xff]
    %v1054 = vld [vmem:[#allocation16 + $0xe0] sm:$0xff]
    %v1055 = vld [vmem:[#allocation16 + $0xe8] sm:$0xff]
    %v1056 = vld [vmem:[#allocation16 + $0xf0] sm:$0xff]
    %v1057 = vld [vmem:[#allocation16 + $0xf8] sm:$0xff]
    %v1058 = vld [vmem:[#allocation16 + $0x100] sm:$0xff]
    %v1059 = vld [vmem:[#allocation16 + $0x108] sm:$0xff]
    %v1060 = vld [vmem:[#allocation16 + $0x110] sm:$0xff]
    %v1061 = vld [vmem:[#allocation16 + $0x118] sm:$0xff]
    %v1062 = vld [vmem:[#allocation16 + $0x120] sm:$0xff]
    %v1063 = vld [vmem:[#allocation16 + $0x128] sm:$0xff]
    %v1064 = vld [vmem:[#allocation16 + $0x130] sm:$0xff]
    %v1065 = vld [vmem:[#allocation16 + $0x138] sm:$0xff]
    %v1066 = vld [vmem:[#allocation16 + $0x140] sm:$0xff]
    %v1067 = vld [vmem:[#allocation16 + $0x148] sm:$0xff]
    %v1068 = vld [vmem:[#allocation16 + $0x150] sm:$0xff]
    %v1069 = vld [vmem:[#allocation16 + $0x158] sm:$0xff]
    %v1070 = vld [vmem:[#allocation16 + $0x160] sm:$0xff]
    %v1071 = vld [vmem:[#allocation16 + $0x168] sm:$0xff]
    %v1072 = vld [vmem:[#allocation16 + $0x170] sm:$0xff]
    %v1073 = vld [vmem:[#allocation16 + $0x178] sm:$0xff]
    %v1074 = vld [vmem:[#allocation16 + $0x180] sm:$0xff]
    %v1075 = vld [vmem:[#allocation16 + $0x188] sm:$0xff]
    %v1076 = vld [vmem:[#allocation16 + $0x190] sm:$0xff]
    %v1077 = vld [vmem:[#allocation16 + $0x198] sm:$0xff]
    %v1078 = vld [vmem:[#allocation16 + $0x1a0] sm:$0xff]
    %v1079 = vld [vmem:[#allocation16 + $0x1a8] sm:$0xff]
    %v1080 = vld [vmem:[#allocation16 + $0x1b0] sm:$0xff]
    %v1081 = vld [vmem:[#allocation16 + $0x1b8] sm:$0xff]
    %v1082 = vld [vmem:[#allocation16 + $0x1c0] sm:$0xff]
    %v1083 = vld [vmem:[#allocation16 + $0x1c8] sm:$0xff]
    %v1084 = vld [vmem:[#allocation16 + $0x1d0] sm:$0xff]
    %v1085 = vld [vmem:[#allocation16 + $0x1d8] sm:$0xff]
    %v1086 = vld [vmem:[#allocation16 + $0x1e0] sm:$0xff]
    %v1087 = vld [vmem:[#allocation16 + $0x1e8] sm:$0xff]
    %v1088 = vld [vmem:[#allocation16 + $0x1f0] sm:$0xff]
    %v1089 = vld [vmem:[#allocation16 + $0x1f8] sm:$0xff]
    %v1090 = vld [vmem:[%s9] sm:$0xff]
    %v1092 = vperm.slane %v1090, 0
    %v1093 = vperm.slane %v1090, 1
    %v1094 = vperm.slane %v1090, 2
    %v1095 = vperm.slane %v1090, 3
    %v1096 = vperm.slane %v1090, 4
    %v1097 = vperm.slane %v1090, 5
    %v1098 = vperm.slane %v1090, 6
    %v1099 = vperm.slane %v1090, 7
    %v1172 = vunpack.c.l.b16 %v1026
    %v1173 = vunpack.c.h.b16 %v1026
    %v1174 = vunpack.c.l.b16 %v1027
    %v1175 = vunpack.c.h.b16 %v1027
    %v1176 = vunpack.c.l.b16 %v1028
    %v1177 = vunpack.c.h.b16 %v1028
    %v1178 = vunpack.c.l.b16 %v1029
    %v1179 = vunpack.c.h.b16 %v1029
    %v1180 = vunpack.c.l.b16 %v1030
    %v1181 = vunpack.c.h.b16 %v1030
    %v1182 = vunpack.c.l.b16 %v1031
    %v1183 = vunpack.c.h.b16 %v1031
    %v1184 = vunpack.c.l.b16 %v1032
    %v1185 = vunpack.c.h.b16 %v1032
    %v1186 = vunpack.c.l.b16 %v1033
    %v1187 = vunpack.c.h.b16 %v1033
    %v1188 = vunpack.c.l.b16 %v1034
    %v1189 = vunpack.c.h.b16 %v1034
    %v1190 = vunpack.c.l.b16 %v1035
    %v1191 = vunpack.c.h.b16 %v1035
    %v1192 = vunpack.c.l.b16 %v1036
    %v1193 = vunpack.c.h.b16 %v1036
    %v1194 = vunpack.c.l.b16 %v1037
    %v1195 = vunpack.c.h.b16 %v1037
    %v1196 = vunpack.c.l.b16 %v1038
    %v1197 = vunpack.c.h.b16 %v1038
    %v1198 = vunpack.c.l.b16 %v1039
    %v1199 = vunpack.c.h.b16 %v1039
    %v1200 = vunpack.c.l.b16 %v1040
    %v1201 = vunpack.c.h.b16 %v1040
    %v1202 = vunpack.c.l.b16 %v1041
    %v1203 = vunpack.c.h.b16 %v1041
    %v1204 = vunpack.c.l.b16 %v1042
    %v1205 = vunpack.c.h.b16 %v1042
    %v1206 = vunpack.c.l.b16 %v1043
    %v1207 = vunpack.c.h.b16 %v1043
    %v1208 = vunpack.c.l.b16 %v1044
    %v1209 = vunpack.c.h.b16 %v1044
    %v1210 = vunpack.c.l.b16 %v1045
    %v1211 = vunpack.c.h.b16 %v1045
    %v1212 = vunpack.c.l.b16 %v1046
    %v1213 = vunpack.c.h.b16 %v1046
    %v1214 = vunpack.c.l.b16 %v1047
    %v1215 = vunpack.c.h.b16 %v1047
    %v1216 = vunpack.c.l.b16 %v1048
    %v1217 = vunpack.c.h.b16 %v1048
    %v1218 = vunpack.c.l.b16 %v1049
    %v1219 = vunpack.c.h.b16 %v1049
    %v1220 = vunpack.c.l.b16 %v1050
    %v1221 = vunpack.c.h.b16 %v1050
    %v1222 = vunpack.c.l.b16 %v1051
    %v1223 = vunpack.c.h.b16 %v1051
    %v1224 = vunpack.c.l.b16 %v1052
    %v1225 = vunpack.c.h.b16 %v1052
    %v1226 = vunpack.c.l.b16 %v1053
    %v1227 = vunpack.c.h.b16 %v1053
    %v1228 = vunpack.c.l.b16 %v1054
    %v1229 = vunpack.c.h.b16 %v1054
    %v1230 = vunpack.c.l.b16 %v1055
    %v1231 = vunpack.c.h.b16 %v1055
    %v1232 = vunpack.c.l.b16 %v1056
    %v1233 = vunpack.c.h.b16 %v1056
    %v1234 = vunpack.c.l.b16 %v1057
    %v1235 = vunpack.c.h.b16 %v1057
    %v1236 = vunpack.c.l.b16 %v1058
    %v1237 = vunpack.c.h.b16 %v1058
    %v1238 = vunpack.c.l.b16 %v1059
    %v1239 = vunpack.c.h.b16 %v1059
    %v1240 = vunpack.c.l.b16 %v1060
    %v1241 = vunpack.c.h.b16 %v1060
    %v1242 = vunpack.c.l.b16 %v1061
    %v1243 = vunpack.c.h.b16 %v1061
    %v1244 = vunpack.c.l.b16 %v1062
    %v1245 = vunpack.c.h.b16 %v1062
    %v1246 = vunpack.c.l.b16 %v1063
    %v1247 = vunpack.c.h.b16 %v1063
    %v1248 = vunpack.c.l.b16 %v1064
    %v1249 = vunpack.c.h.b16 %v1064
    %v1250 = vunpack.c.l.b16 %v1065
    %v1251 = vunpack.c.h.b16 %v1065
    %v1252 = vunpack.c.l.b16 %v1066
    %v1253 = vunpack.c.h.b16 %v1066
    %v1254 = vunpack.c.l.b16 %v1067
    %v1255 = vunpack.c.h.b16 %v1067
    %v1256 = vunpack.c.l.b16 %v1068
    %v1257 = vunpack.c.h.b16 %v1068
    %v1258 = vunpack.c.l.b16 %v1069
    %v1259 = vunpack.c.h.b16 %v1069
    %v1260 = vunpack.c.l.b16 %v1070
    %v1261 = vunpack.c.h.b16 %v1070
    %v1262 = vunpack.c.l.b16 %v1071
    %v1263 = vunpack.c.h.b16 %v1071
    %v1264 = vunpack.c.l.b16 %v1072
    %v1265 = vunpack.c.h.b16 %v1072
    %v1266 = vunpack.c.l.b16 %v1073
    %v1267 = vunpack.c.h.b16 %v1073
    %v1268 = vunpack.c.l.b16 %v1074
    %v1269 = vunpack.c.h.b16 %v1074
    %v1270 = vunpack.c.l.b16 %v1075
    %v1271 = vunpack.c.h.b16 %v1075
    %v1272 = vunpack.c.l.b16 %v1076
    %v1273 = vunpack.c.h.b16 %v1076
    %v1274 = vunpack.c.l.b16 %v1077
    %v1275 = vunpack.c.h.b16 %v1077
    %v1276 = vunpack.c.l.b16 %v1078
    %v1277 = vunpack.c.h.b16 %v1078
    %v1278 = vunpack.c.l.b16 %v1079
    %v1279 = vunpack.c.h.b16 %v1079
    %v1280 = vunpack.c.l.b16 %v1080
    %v1281 = vunpack.c.h.b16 %v1080
    %v1282 = vunpack.c.l.b16 %v1081
    %v1283 = vunpack.c.h.b16 %v1081
    %v1284 = vunpack.c.l.b16 %v1082
    %v1285 = vunpack.c.h.b16 %v1082
    %v1286 = vunpack.c.l.b16 %v1083
    %v1287 = vunpack.c.h.b16 %v1083
    %v1288 = vunpack.c.l.b16 %v1084
    %v1289 = vunpack.c.h.b16 %v1084
    %v1290 = vunpack.c.l.b16 %v1085
    %v1291 = vunpack.c.h.b16 %v1085
    %v1292 = vunpack.c.l.b16 %v1086
    %v1293 = vunpack.c.h.b16 %v1086
    %v1294 = vunpack.c.l.b16 %v1087
    %v1295 = vunpack.c.h.b16 %v1087
    %v1296 = vunpack.c.l.b16 %v1088
    %v1297 = vunpack.c.h.b16 %v1088
    %v1298 = vunpack.c.l.b16 %v1089
    %v1299 = vunpack.c.h.b16 %v1089
    %v1300 = vpack.c.b16 %v1180, %v1172
    %v1301 = vpack.c.b16 %v1181, %v1173
    %v1302 = vpack.c.b16 %v1182, %v1174
    %v1303 = vpack.c.b16 %v1183, %v1175
    %v1304 = vpack.c.b16 %v1184, %v1176
    %v1305 = vpack.c.b16 %v1185, %v1177
    %v1306 = vpack.c.b16 %v1186, %v1178
    %v1307 = vpack.c.b16 %v1187, %v1179
    %v1308 = vpack.c.b16 %v1196, %v1188
    %v1309 = vpack.c.b16 %v1197, %v1189
    %v1310 = vpack.c.b16 %v1198, %v1190
    %v1311 = vpack.c.b16 %v1199, %v1191
    %v1312 = vpack.c.b16 %v1200, %v1192
    %v1313 = vpack.c.b16 %v1201, %v1193
    %v1314 = vpack.c.b16 %v1202, %v1194
    %v1315 = vpack.c.b16 %v1203, %v1195
    %v1316 = vpack.c.b16 %v1212, %v1204
    %v1317 = vpack.c.b16 %v1213, %v1205
    %v1318 = vpack.c.b16 %v1214, %v1206
    %v1319 = vpack.c.b16 %v1215, %v1207
    %v1320 = vpack.c.b16 %v1216, %v1208
    %v1321 = vpack.c.b16 %v1217, %v1209
    %v1322 = vpack.c.b16 %v1218, %v1210
    %v1323 = vpack.c.b16 %v1219, %v1211
    %v1324 = vpack.c.b16 %v1228, %v1220
    %v1325 = vpack.c.b16 %v1229, %v1221
    %v1326 = vpack.c.b16 %v1230, %v1222
    %v1327 = vpack.c.b16 %v1231, %v1223
    %v1328 = vpack.c.b16 %v1232, %v1224
    %v1329 = vpack.c.b16 %v1233, %v1225
    %v1330 = vpack.c.b16 %v1234, %v1226
    %v1331 = vpack.c.b16 %v1235, %v1227
    %v1332 = vpack.c.b16 %v1244, %v1236
    %v1333 = vpack.c.b16 %v1245, %v1237
    %v1334 = vpack.c.b16 %v1246, %v1238
    %v1335 = vpack.c.b16 %v1247, %v1239
    %v1336 = vpack.c.b16 %v1248, %v1240
    %v1337 = vpack.c.b16 %v1249, %v1241
    %v1338 = vpack.c.b16 %v1250, %v1242
    %v1339 = vpack.c.b16 %v1251, %v1243
    %v1340 = vpack.c.b16 %v1260, %v1252
    %v1341 = vpack.c.b16 %v1261, %v1253
    %v1342 = vpack.c.b16 %v1262, %v1254
    %v1343 = vpack.c.b16 %v1263, %v1255
    %v1344 = vpack.c.b16 %v1264, %v1256
    %v1345 = vpack.c.b16 %v1265, %v1257
    %v1346 = vpack.c.b16 %v1266, %v1258
    %v1347 = vpack.c.b16 %v1267, %v1259
    %v1348 = vpack.c.b16 %v1276, %v1268
    %v1349 = vpack.c.b16 %v1277, %v1269
    %v1350 = vpack.c.b16 %v1278, %v1270
    %v1351 = vpack.c.b16 %v1279, %v1271
    %v1352 = vpack.c.b16 %v1280, %v1272
    %v1353 = vpack.c.b16 %v1281, %v1273
    %v1354 = vpack.c.b16 %v1282, %v1274
    %v1355 = vpack.c.b16 %v1283, %v1275
    %v1356 = vpack.c.b16 %v1292, %v1284
    %v1357 = vpack.c.b16 %v1293, %v1285
    %v1358 = vpack.c.b16 %v1294, %v1286
    %v1359 = vpack.c.b16 %v1295, %v1287
    %v1360 = vpack.c.b16 %v1296, %v1288
    %v1361 = vpack.c.b16 %v1297, %v1289
    %v1362 = vpack.c.b16 %v1298, %v1290
    %v1363 = vpack.c.b16 %v1299, %v1291
    %1428 = vmatpush.bf16.msra.mxu0 %v1356
    %1429 = vmatpush.bf16.msra.mxu0 %v1348
    %1430 = vmatpush.bf16.msra.mxu0 %v1340
    %1431 = vmatpush.bf16.msra.mxu0 %v1332
    %1432 = vmatpush.bf16.msra.mxu0 %v1324
    %1433 = vmatpush.bf16.msra.mxu0 %v1316
    %1434 = vmatpush.bf16.msra.mxu0 %v1308
    %1435 = vmatpush.bf16.msra.mxu0 %v1300
    %1436 = vmatmul.bf16.gmra.mxu0 %v1025
    %v1437 = vpop.f32.mrf.mxu0
    %v1438 = vadd.f32 %v1092, %v1437
    %v1439 = vpop.f32.mrf.mxu0
    %1440 = vdwg.mxu0
    %1441 = vmatpush.bf16.msra.mxu0 %v1357
    %1442 = vmatpush.bf16.msra.mxu0 %v1349
    %1443 = vmatpush.bf16.msra.mxu0 %v1341
    %1444 = vmatpush.bf16.msra.mxu0 %v1333
    %1445 = vmatpush.bf16.msra.mxu0 %v1325
    %1446 = vmatpush.bf16.msra.mxu0 %v1317
    %1447 = vmatpush.bf16.msra.mxu0 %v1309
    %1448 = vmatpush.bf16.msra.mxu0 %v1301
    %1449 = vmatmul.bf16.gmra.mxu0 %v1025
    %v1450 = vpop.f32.mrf.mxu0
    %v1451 = vadd.f32 %v1093, %v1450
    %v1452 = vpop.f32.mrf.mxu0
    %1453 = vdwg.mxu0
    %1454 = vmatpush.bf16.msra.mxu0 %v1358
    %1455 = vmatpush.bf16.msra.mxu0 %v1350
    %1456 = vmatpush.bf16.msra.mxu0 %v1342
    %1457 = vmatpush.bf16.msra.mxu0 %v1334
    %1458 = vmatpush.bf16.msra.mxu0 %v1326
    %1459 = vmatpush.bf16.msra.mxu0 %v1318
    %1460 = vmatpush.bf16.msra.mxu0 %v1310
    %1461 = vmatpush.bf16.msra.mxu0 %v1302
    %1462 = vmatmul.bf16.gmra.mxu0 %v1025
    %v1463 = vpop.f32.mrf.mxu0
    %v1464 = vadd.f32 %v1094, %v1463
    %v1465 = vpop.f32.mrf.mxu0
    %1466 = vdwg.mxu0
    %1467 = vmatpush.bf16.msra.mxu0 %v1359
    %1468 = vmatpush.bf16.msra.mxu0 %v1351
    %1469 = vmatpush.bf16.msra.mxu0 %v1343
    %1470 = vmatpush.bf16.msra.mxu0 %v1335
    %1471 = vmatpush.bf16.msra.mxu0 %v1327
    %1472 = vmatpush.bf16.msra.mxu0 %v1319
    %1473 = vmatpush.bf16.msra.mxu0 %v1311
    %1474 = vmatpush.bf16.msra.mxu0 %v1303
    %1475 = vmatmul.bf16.gmra.mxu0 %v1025
    %v1476 = vpop.f32.mrf.mxu0
    %v1477 = vadd.f32 %v1095, %v1476
    %v1478 = vpop.f32.mrf.mxu0
    %1479 = vdwg.mxu0
    %1480 = vmatpush.bf16.msra.mxu0 %v1360
    %1481 = vmatpush.bf16.msra.mxu0 %v1352
    %1482 = vmatpush.bf16.msra.mxu0 %v1344
    %1483 = vmatpush.bf16.msra.mxu0 %v1336
    %1484 = vmatpush.bf16.msra.mxu0 %v1328
    %1485 = vmatpush.bf16.msra.mxu0 %v1320
    %1486 = vmatpush.bf16.msra.mxu0 %v1312
    %1487 = vmatpush.bf16.msra.mxu0 %v1304
    %1488 = vmatmul.bf16.gmra.mxu0 %v1025
    %v1489 = vpop.f32.mrf.mxu0
    %v1490 = vadd.f32 %v1096, %v1489
    %v1491 = vpop.f32.mrf.mxu0
    %1492 = vdwg.mxu0
    %1493 = vmatpush.bf16.msra.mxu0 %v1361
    %1494 = vmatpush.bf16.msra.mxu0 %v1353
    %1495 = vmatpush.bf16.msra.mxu0 %v1345
    %1496 = vmatpush.bf16.msra.mxu0 %v1337
    %1497 = vmatpush.bf16.msra.mxu0 %v1329
    %1498 = vmatpush.bf16.msra.mxu0 %v1321
    %1499 = vmatpush.bf16.msra.mxu0 %v1313
    %1500 = vmatpush.bf16.msra.mxu0 %v1305
    %1501 = vmatmul.bf16.gmra.mxu0 %v1025
    %v1502 = vpop.f32.mrf.mxu0
    %v1503 = vadd.f32 %v1097, %v1502
    %v1504 = vpop.f32.mrf.mxu0
    %1505 = vdwg.mxu0
    %1506 = vmatpush.bf16.msra.mxu0 %v1362
    %1507 = vmatpush.bf16.msra.mxu0 %v1354
    %1508 = vmatpush.bf16.msra.mxu0 %v1346
    %1509 = vmatpush.bf16.msra.mxu0 %v1338
    %1510 = vmatpush.bf16.msra.mxu0 %v1330
    %1511 = vmatpush.bf16.msra.mxu0 %v1322
    %1512 = vmatpush.bf16.msra.mxu0 %v1314
    %1513 = vmatpush.bf16.msra.mxu0 %v1306
    %1514 = vmatmul.bf16.gmra.mxu0 %v1025
    %v1515 = vpop.f32.mrf.mxu0
    %v1516 = vadd.f32 %v1098, %v1515
    %v1517 = vpop.f32.mrf.mxu0
    %1518 = vdwg.mxu0
    %1519 = vmatpush.bf16.msra.mxu0 %v1363
    %1520 = vmatpush.bf16.msra.mxu0 %v1355
    %1521 = vmatpush.bf16.msra.mxu0 %v1347
    %1522 = vmatpush.bf16.msra.mxu0 %v1339
    %1523 = vmatpush.bf16.msra.mxu0 %v1331
    %1524 = vmatpush.bf16.msra.mxu0 %v1323
    %1525 = vmatpush.bf16.msra.mxu0 %v1315
    %1526 = vmatpush.bf16.msra.mxu0 %v1307
    %1527 = vmatmul.bf16.gmra.mxu0 %v1025
    %v1528 = vpop.f32.mrf.mxu0
    %v1529 = vadd.f32 %v1099, %v1528
    %v1530 = vpop.f32.mrf.mxu0
    %1531 = vdwg.mxu0
    %v1532 = vmul.f32 %v1438, 0.5
    %v1533 = vmul.f32 %v1451, 0.5
    %v1534 = vmul.f32 %v1464, 0.5
    %v1535 = vmul.f32 %v1477, 0.5
    %v1536 = vmul.f32 %v1490, 0.5
    %v1537 = vmul.f32 %v1503, 0.5
    %v1538 = vmul.f32 %v1516, 0.5
    %v1539 = vmul.f32 %v1529, 0.5
    %v1540 = vtanh.pop %v1532
    %v1541 = vtanh.pop %v1533
    %v1542 = vtanh.pop %v1534
    %v1543 = vtanh.pop %v1535
    %v1544 = vtanh.pop %v1536
    %v1545 = vtanh.pop %v1537
    %v1546 = vtanh.pop %v1538
    %v1547 = vtanh.pop %v1539
    %v1548 = vmul.f32 %v1540, 0.5
    %v1549 = vmul.f32 %v1541, 0.5
    %v1550 = vmul.f32 %v1542, 0.5
    %v1551 = vmul.f32 %v1543, 0.5
    %v1552 = vmul.f32 %v1544, 0.5
    %v1553 = vmul.f32 %v1545, 0.5
    %v1554 = vmul.f32 %v1546, 0.5
    %v1555 = vmul.f32 %v1547, 0.5
    %v1556 = vadd.f32 %v1548, 0.5
    %v1557 = vadd.f32 %v1549, 0.5
    %v1558 = vadd.f32 %v1550, 0.5
    %v1559 = vadd.f32 %v1551, 0.5
    %v1560 = vadd.f32 %v1552, 0.5
    %v1561 = vadd.f32 %v1553, 0.5
    %v1562 = vadd.f32 %v1554, 0.5
    %v1563 = vadd.f32 %v1555, 0.5
    %v1564 = vpack.c.bf16 %v1557, %v1556
    %v1565 = vpack.c.bf16 %v1559, %v1558
    %v1566 = vpack.c.bf16 %v1561, %v1560
    %v1567 = vpack.c.bf16 %v1563, %v1562
    %1568 = vst [vmem:[#allocation17] sm:$0xff] %v1564
    %1569 = vst [vmem:[#allocation17 + $0x8] sm:$0xff] %v1565
    %1570 = vst [vmem:[#allocation17 + $0x10] sm:$0xff] %v1566
    %1571 = vst [vmem:[#allocation17 + $0x18] sm:$0xff] %v1567
    // Predicated region
    $region78: #{tpu_custom_call.1} parent=1 // pred_check
      _
    $region79: #{tpu_custom_call.1} parent=1 // pred_check_branch
      %1573 = sbr.rel (0) target = $region81
    $region80: #{tpu_custom_call.1} parent=1 // pred_region
      %1575 = vsyncadd [#allocation4], 0
      %s1577 = sshll.u32 [#allocation17], 4
      %s1578 = int_to_ptr.vmem [resolvable:$true] %s1577
      %s1579 = sshll.u32 %s10, 4
      %s1580 = int_to_ptr.hbm [resolvable:$true] %s1579
      %1582 = dma.vmem_to_hbm [thread:$0]  %s1578, 512, %s1580, [#allocation4]
    $region81: #{tpu_custom_call.1} parent=1 // pred_fallthru
      _
    // Predicated region
    $region82: #{tpu_custom_call.1} parent=1 // pred_check
      _
    $region83: #{tpu_custom_call.1} parent=1 // pred_check_branch
      %1584 = sbr.rel (0) target = $region85
    $region84: #{tpu_custom_call.1} parent=1 // pred_region
      %1586 = vsyncadd [#allocation19], 0
      %s1588 = sshll.u32 [#allocation18], 4
      %s1589 = int_to_ptr.vmem [resolvable:$true] %s1588
      %s1590 = sshll.u32 %s11, 4
      %s1591 = int_to_ptr.hbm [resolvable:$true] %s1590
      %1593 = dma.vmem_to_hbm [thread:$0]  %s1589, 128, %s1591, [#allocation19]
    $region85: #{tpu_custom_call.1} parent=1 // pred_fallthru
      _
    // Predicated region
    $region86: #{tpu_custom_call.1} parent=1 // pred_check
      _
    $region87: #{tpu_custom_call.1} parent=1 // pred_check_branch
      %1595 = sbr.rel (0) target = $region89
    $region88: #{tpu_custom_call.1} parent=1 // pred_region
      %1597 = dma.done [#allocation4], 512
    $region89: #{tpu_custom_call.1} parent=1 // pred_fallthru
      _
    // Predicated region
    $region90: #{tpu_custom_call.1} parent=1 // pred_check
      _
    $region91: #{tpu_custom_call.1} parent=1 // pred_check_branch
      %1599 = sbr.rel (0) target = $region93
    $region92: #{tpu_custom_call.1} parent=1 // pred_region
      %1601 = dma.done [#allocation19], 128
    $region93: #{tpu_custom_call.1} parent=1 // pred_fallthru
      _
    %1602 = vsyncpa [#allocation3], 1
    %1603 = vsyncpa [#allocation6], 1
    %1604 = vsyncpa [#allocation9], 1
    %1605 = vsyncpa [#allocation12], 1
    %1606 = vsyncpa [#allocation15], 1
    %1607 = vsyncpa [#allocation4], 1
    %1608 = vsyncpa [#allocation19], 1

</llo_original>
